<compile_context>
chip_gen: v7x
topology: tpu7x:2x2x1
jax: 0.10.0
libtpu: 0.0.40
codegen_flags: <defaults>
</compile_context>

<pallas_src>
import functools

import jax
import jax.numpy as jnp
from jax.experimental import pallas as pl
from jax.experimental.pallas import tpu as pltpu

EPS = 1e-5
LANE = 128


def _round_up(x, m):
    return (x + m - 1) // m * m


def _img_spec(hw, c):
    return pl.BlockSpec((1, hw, c), lambda n: (n, 0, 0))


def _stat_spec(c):
    return pl.BlockSpec((1, 2, c), lambda n: (n, 0, 0))


def _full_spec(shape):
    return pl.BlockSpec(shape, lambda n: (0,) * len(shape))


def _channel_stats(y):
    # per-image channel [sum; sum-of-squares]; reduced across images in wrapper
    return jnp.concatenate(
        [jnp.sum(y, axis=0, keepdims=True),
         jnp.sum(y * y, axis=0, keepdims=True)], axis=0)


# ---- stage A: conv1 (1x1) ----------------------------------------------------
def _conv1x1_kernel(x_ref, w_ref, y_ref, st_ref):
    y = jnp.dot(x_ref[0], w_ref[...], preferred_element_type=jnp.float32)
    y_ref[0] = y
    st_ref[0] = _channel_stats(y)


# ---- stage B: bn1+relu + conv2 (3x3) as one fused 9-tap matmul ---------------
def _conv3x3_kernel(W, hw, padr, y_ref, sc_ref, sh_ref, ml_ref, mr_ref,
                    w2_ref, o_ref, st_ref, pad_ref):
    P = y_ref.shape[-1]
    # folded BN (scale/shift precomputed in the wrapper) + relu
    a = jnp.maximum(y_ref[0] * sc_ref[...] + sh_ref[...], 0.0)          # [HW, P]

    # zero halo rows, place activation in the padded scratch: every 3x3 tap is
    # then a static slice (no rolls, no in-kernel iota/div/mod masking)
    zeros = jnp.zeros((padr, P), jnp.float32)
    pad_ref[0:padr, :] = zeros
    pad_ref[padr + hw:padr + hw + padr, :] = zeros
    pad_ref[padr:padr + hw, :] = a

    ml = ml_ref[...]     # left-column validity  (dx = -1), lane-dense
    mr = mr_ref[...]     # right-column validity (dx = +1), lane-dense

    taps = []
    for ky in range(3):
        for kx in range(3):
            start = padr + (ky - 1) * W + (kx - 1)
            t = pad_ref[start:start + hw, :]
            if kx == 0:
                t = t * ml
            elif kx == 2:
                t = t * mr
            taps.append(t)
    cat = jnp.concatenate(taps, axis=1)                                  # [HW, 9P]
    y = jnp.dot(cat, w2_ref[...], preferred_element_type=jnp.float32)    # one wide matmul
    o_ref[0] = y
    st_ref[0] = _channel_stats(y)


# ---- stage C: bn2+relu + conv3 (1x1) -----------------------------------------
def _bn_conv1x1_kernel(y_ref, sc_ref, sh_ref, w_ref, o_ref, st_ref):
    a = jnp.maximum(y_ref[0] * sc_ref[...] + sh_ref[...], 0.0)
    y = jnp.dot(a, w_ref[...], preferred_element_type=jnp.float32)
    o_ref[0] = y
    st_ref[0] = _channel_stats(y)


# ---- stage D: bn3 + residual add + relu --------------------------------------
def _bn_residual_kernel(y_ref, x_ref, sc_ref, sh_ref, o_ref):
    o_ref[0] = jnp.maximum(y_ref[0] * sc_ref[...] + sh_ref[...] + x_ref[0], 0.0)


def bottleneck_forward(x_nchw, params):
    """x_nchw: [N, Cin, H, W]; params in PyTorch layouts."""
    w1, w2, w3, g1, b1, g2, b2, g3, b3 = params
    N, Cin, H, W = x_nchw.shape
    P = w1.shape[0]
    Cout = w3.shape[0]
    assert Cout == Cin, "downsample=None requires inplanes == planes*4"
    HW = H * W
    Cin_p = _round_up(Cin, LANE)
    P_p = _round_up(P, LANE)
    Cout_p = _round_up(Cout, LANE)
    padr = _round_up(W + 1, 8)          # zero halo rows above/below each image
    count = N * HW
    f32 = jnp.float32

    # NCHW -> [N, H*W, C], channels zero-padded to a multiple of 128 lanes
    x3d = jnp.transpose(x_nchw, (0, 2, 3, 1)).reshape(N, HW, Cin).astype(f32)
    x3d = jnp.pad(x3d, ((0, 0), (0, 0), (0, Cin_p - Cin)))

    # conv weights -> lane-padded matmul layouts
    w1m = jnp.pad(w1[:, :, 0, 0].T.astype(f32),
                  ((0, Cin_p - Cin), (0, P_p - P)))                      # [Cin_p, P_p]
    w2t = jnp.transpose(w2.astype(f32), (2, 3, 1, 0))                    # [3,3,Pin,Pout]
    w2t = jnp.pad(w2t, ((0, 0), (0, 0), (0, P_p - P), (0, P_p - P)))
    w2m = w2t.reshape(9 * P_p, P_p)                                      # [9*P_p, P_p]
    w3m = jnp.pad(w3[:, :, 0, 0].T.astype(f32),
                  ((0, P_p - P), (0, Cout_p - Cout)))                    # [P_p, Cout_p]

    # precomputed left/right edge validity (dx = -1 / +1 taps), lane-dense
    col = jnp.arange(HW, dtype=jnp.int32) % W
    mask_l = jnp.broadcast_to((col > 0).astype(f32)[:, None], (HW, P_p))
    mask_r = jnp.broadcast_to((col < W - 1).astype(f32)[:, None], (HW, P_p))

    def bn_affine(stats, gamma, beta, cpad):
        # fold BN into y*scale + shift (training-mode batch stats over N,H,W)
        s = jnp.sum(stats, axis=0)                                       # [2, cpad]
        mean = s[0] / count
        var = jnp.maximum(s[1] / count - mean * mean, 0.0)               # clamp >= 0
        g = jnp.pad(gamma.astype(f32), (0, cpad - gamma.shape[0]))
        b = jnp.pad(beta.astype(f32), (0, cpad - beta.shape[0]))
        scale = g * jax.lax.rsqrt(var + EPS)
        shift = b - mean * scale
        return scale.reshape(1, cpad), shift.reshape(1, cpad)

    cp = pltpu.CompilerParams(dimension_semantics=("parallel",),
                              vmem_limit_bytes=64 * 1024 * 1024)

    # ---- stage A: conv1 ------------------------------------------------------
    y1, st1 = pl.pallas_call(
        _conv1x1_kernel,
        grid=(N,),
        in_specs=[_img_spec(HW, Cin_p), _full_spec((Cin_p, P_p))],
        out_specs=(_img_spec(HW, P_p), _stat_spec(P_p)),
        out_shape=(jax.ShapeDtypeStruct((N, HW, P_p), f32),
                   jax.ShapeDtypeStruct((N, 2, P_p), f32)),
        compiler_params=cp,
    )(x3d, w1m)

    # ---- stage B: bn1 + relu + conv2 -----------------------------------------
    sc1, sh1 = bn_affine(st1, g1, b1, P_p)
    y2, st2 = pl.pallas_call(
        functools.partial(_conv3x3_kernel, W, HW, padr),
        grid=(N,),
        in_specs=[_img_spec(HW, P_p), _full_spec((1, P_p)), _full_spec((1, P_p)),
                  _full_spec((HW, P_p)), _full_spec((HW, P_p)),
                  _full_spec((9 * P_p, P_p))],
        out_specs=(_img_spec(HW, P_p), _stat_spec(P_p)),
        out_shape=(jax.ShapeDtypeStruct((N, HW, P_p), f32),
                   jax.ShapeDtypeStruct((N, 2, P_p), f32)),
        scratch_shapes=[pltpu.VMEM((HW + 2 * padr, P_p), f32)],
        compiler_params=cp,
    )(y1, sc1, sh1, mask_l, mask_r, w2m)

    # ---- stage C: bn2 + relu + conv3 -----------------------------------------
    sc2, sh2 = bn_affine(st2, g2, b2, P_p)
    y3, st3 = pl.pallas_call(
        _bn_conv1x1_kernel,
        grid=(N,),
        in_specs=[_img_spec(HW, P_p), _full_spec((1, P_p)), _full_spec((1, P_p)),
                  _full_spec((P_p, Cout_p))],
        out_specs=(_img_spec(HW, Cout_p), _stat_spec(Cout_p)),
        out_shape=(jax.ShapeDtypeStruct((N, HW, Cout_p), f32),
                   jax.ShapeDtypeStruct((N, 2, Cout_p), f32)),
        compiler_params=cp,
    )(y2, sc2, sh2, w3m)

    # ---- stage D: bn3 + residual + relu --------------------------------------
    sc3, sh3 = bn_affine(st3, g3, b3, Cout_p)
    out3d = pl.pallas_call(
        _bn_residual_kernel,
        grid=(N,),
        in_specs=[_img_spec(HW, Cout_p), _img_spec(HW, Cin_p),
                  _full_spec((1, Cout_p)), _full_spec((1, Cout_p))],
        out_specs=_img_spec(HW, Cout_p),
        out_shape=jax.ShapeDtypeStruct((N, HW, Cout_p), f32),
        compiler_params=cp,
    )(y3, x3d, sc3, sh3)

    out = out3d[:, :, :Cout].reshape(N, H, W, Cout)
    return jnp.transpose(out, (0, 3, 1, 2))


def bottleneck_reference(x, params):
    """Pure-JAX NCHW reference mirroring the PyTorch module."""
    w1, w2, w3, g1, b1, g2, b2, g3, b3 = params

    def conv(x, w, pad):
        return jax.lax.conv_general_dilated(
            x, w, window_strides=(1, 1), padding=pad,
            dimension_numbers=('NCHW', 'OIHW', 'NCHW'))

    def bn(y, g, b):
        mu = jnp.mean(y, axis=(0, 2, 3), keepdims=True)
        var = jnp.mean(jnp.square(y - mu), axis=(0, 2, 3), keepdims=True)
        return (y - mu) / jnp.sqrt(var + EPS) * g.reshape(1, -1, 1, 1) \
            + b.reshape(1, -1, 1, 1)

    out = jax.nn.relu(bn(conv(x, w1, 'VALID'), g1, b1))
    out = jax.nn.relu(bn(conv(out, w2, ((1, 1), (1, 1))), g2, b2))
    out = bn(conv(out, w3, 'VALID'), g3, b3) + x
    return jax.nn.relu(out)


if __name__ == "__main__":
    N, planes, H, W = 2, 4, 16, 16
    inplanes = planes * 4          # downsample=None requires inplanes == 4*planes
    key = jax.random.PRNGKey(0)
    k_w1, k_w2, k_w3, k_x = jax.random.split(key, 4)

    # Deterministic synthetic parameters (shapes from Bottleneck.__init__)
    w1 = jax.random.normal(k_w1, (planes, inplanes, 1, 1), jnp.float32) * 0.2
    w2 = jax.random.normal(k_w2, (planes, planes, 3, 3), jnp.float32) * 0.2
    w3 = jax.random.normal(k_w3, (planes * 4, planes, 1, 1), jnp.float32) * 0.2
    g1, b1 = jnp.ones((planes,), jnp.float32), jnp.zeros((planes,), jnp.float32)
    g2, b2 = jnp.ones((planes,), jnp.float32), jnp.zeros((planes,), jnp.float32)
    g3, b3 = jnp.ones((planes * 4,), jnp.float32), jnp.zeros((planes * 4,), jnp.float32)
    params = (w1, w2, w3, g1, b1, g2, b2, g3, b3)

    x = jax.random.normal(k_x, (N, inplanes, H, W), jnp.float32)

    out = jax.block_until_ready(jax.jit(bottleneck_forward)(x, params))
    ref = jax.block_until_ready(bottleneck_reference(x, params))

    err = float(jnp.max(jnp.abs(out - ref)))
    assert out.shape == (N, inplanes, H, W)
    assert err < 5e-2, f"mismatch vs reference, max abs err = {err}"

    print("KERNEL_OK")
</pallas_src>

<mosaic_0001>
module attributes {stable_mosaic.version = 11 : i64} {
  func.func @_conv1x1_kernel(%arg0: i32, %arg1: memref<1x256x128xf32, #tpu.memory_space<vmem>>, %arg2: memref<128x128xf32, #tpu.memory_space<vmem>>, %arg3: memref<1x256x128xf32, #tpu.memory_space<vmem>>, %arg4: memref<1x2x128xf32, #tpu.memory_space<vmem>>) attributes {dimension_semantics = [#tpu.dimension_semantics<parallel>], iteration_bounds = array<i64: 2>, scalar_prefetch = 0 : i64, scratch_operands = 0 : i64, tpu.core_type = #tpu.core_type<tc>, window_params = [{transform_indices = @transform_0, window_bounds = array<i64: 1, 256, 128>}, {pipeline_mode = #tpu.pipeline_mode<synchronous>, transform_indices = @transform_1, window_bounds = array<i64: 128, 128>}, {transform_indices = @transform_2, window_bounds = array<i64: 1, 256, 128>}, {transform_indices = @transform_3, window_bounds = array<i64: 1, 2, 128>}]} {
    %c0 = arith.constant 0 : index
    %c0_0 = arith.constant 0 : index
    %c0_1 = arith.constant 0 : index
    %0 = vector.load %arg1[%c0, %c0_0, %c0_1] : memref<1x256x128xf32, #tpu.memory_space<vmem>>, vector<1x256x128xf32>
    %1 = vector.shape_cast %0 : vector<1x256x128xf32> to vector<256x128xf32>
    %c0_2 = arith.constant 0 : index
    %c0_3 = arith.constant 0 : index
    %2 = vector.load %arg2[%c0_2, %c0_3] : memref<128x128xf32, #tpu.memory_space<vmem>>, vector<128x128xf32>
    %cst = arith.constant dense<0.000000e+00> : vector<256x128xf32>
    %3 = tpu.matmul %1, %2, %cst {dimension_numbers = #tpu.dot_dimension_numbers<[1], [0], [0], [1], [0, 0, 1, 1], [], []>} : vector<256x128xf32>, vector<128x128xf32>, vector<256x128xf32> -> vector<256x128xf32>
    %c0_4 = arith.constant 0 : index
    %c0_5 = arith.constant 0 : index
    %c0_6 = arith.constant 0 : index
    %4 = vector.load %arg3[%c0_4, %c0_5, %c0_6] : memref<1x256x128xf32, #tpu.memory_space<vmem>>, vector<1x256x128xf32>
    %5 = vector.shape_cast %4 : vector<1x256x128xf32> to vector<256x128xf32>
    %6 = vector.shape_cast %3 : vector<256x128xf32> to vector<1x256x128xf32>
    tpu.vector_store %arg3[%c0_4, %c0_5, %c0_6], %6 {strides = array<i32>} : memref<1x256x128xf32, #tpu.memory_space<vmem>>, vector<1x256x128xf32>,
    %cst_7 = arith.constant dense<0.000000e+00> : vector<128xf32>
    %7 = vector.multi_reduction <add>, %3, %cst_7 [0] : vector<256x128xf32> to vector<128xf32>
    %8 = vector.shape_cast %7 : vector<128xf32> to vector<1x128xf32>
    %9 = arith.mulf %3, %3 : vector<256x128xf32>
    %cst_8 = arith.constant dense<0.000000e+00> : vector<128xf32>
    %10 = vector.multi_reduction <add>, %9, %cst_8 [0] : vector<256x128xf32> to vector<128xf32>
    %11 = vector.shape_cast %10 : vector<128xf32> to vector<1x128xf32>
    %12 = tpu.concatenate %8, %11 in 0 : vector<1x128xf32>, vector<1x128xf32> -> vector<2x128xf32>
    %c0_9 = arith.constant 0 : index
    %c0_10 = arith.constant 0 : index
    %c0_11 = arith.constant 0 : index
    %13 = vector.load %arg4[%c0_9, %c0_10, %c0_11] : memref<1x2x128xf32, #tpu.memory_space<vmem>>, vector<1x2x128xf32>
    %14 = vector.shape_cast %13 : vector<1x2x128xf32> to vector<2x128xf32>
    %15 = vector.shape_cast %12 : vector<2x128xf32> to vector<1x2x128xf32>
    tpu.vector_store %arg4[%c0_9, %c0_10, %c0_11], %15 {strides = array<i32>} : memref<1x2x128xf32, #tpu.memory_space<vmem>>, vector<1x2x128xf32>,
    return
  }
  func.func @transform_0(%arg0: i32) -> (i32, i32, i32) {
    %c0_i32 = arith.constant 0 : i32
    %c0_i32_0 = arith.constant 0 : i32
    %c0_i32_1 = arith.constant 0 : i32
    return %arg0, %c0_i32, %c0_i32_0 : i32, i32, i32
  }
  func.func @transform_1(%arg0: i32) -> (i32, i32) {
    %c0_i32 = arith.constant 0 : i32
    %c0_i32_0 = arith.constant 0 : i32
    %c0_i32_1 = arith.constant 0 : i32
    return %c0_i32, %c0_i32_0 : i32, i32
  }
  func.func @transform_2(%arg0: i32) -> (i32, i32, i32) {
    %c0_i32 = arith.constant 0 : i32
    %c0_i32_0 = arith.constant 0 : i32
    %c0_i32_1 = arith.constant 0 : i32
    return %arg0, %c0_i32, %c0_i32_0 : i32, i32, i32
  }
  func.func @transform_3(%arg0: i32) -> (i32, i32, i32) {
    %c0_i32 = arith.constant 0 : i32
    %c0_i32_0 = arith.constant 0 : i32
    %c0_i32_1 = arith.constant 0 : i32
    return %arg0, %c0_i32, %c0_i32_0 : i32, i32, i32
  }
}

module attributes {stable_mosaic.version = 11 : i64} {
  func.func @_conv3x3_kernel(%arg0: i32, %arg1: memref<1x256x128xf32, #tpu.memory_space<vmem>>, %arg2: memref<1x128xf32, #tpu.memory_space<vmem>>, %arg3: memref<1x128xf32, #tpu.memory_space<vmem>>, %arg4: memref<256x128xf32, #tpu.memory_space<vmem>>, %arg5: memref<256x128xf32, #tpu.memory_space<vmem>>, %arg6: memref<1152x128xf32, #tpu.memory_space<vmem>>, %arg7: memref<1x256x128xf32, #tpu.memory_space<vmem>>, %arg8: memref<1x2x128xf32, #tpu.memory_space<vmem>>, %arg9: memref<304x128xf32, #tpu.memory_space<vmem>>) attributes {dimension_semantics = [#tpu.dimension_semantics<parallel>], iteration_bounds = array<i64: 2>, scalar_prefetch = 0 : i64, scratch_operands = 1 : i64, tpu.core_type = #tpu.core_type<tc>, window_params = [{transform_indices = @transform_0, window_bounds = array<i64: 1, 256, 128>}, {pipeline_mode = #tpu.pipeline_mode<synchronous>, transform_indices = @transform_1, window_bounds = array<i64: 1, 128>}, {pipeline_mode = #tpu.pipeline_mode<synchronous>, transform_indices = @transform_2, window_bounds = array<i64: 1, 128>}, {pipeline_mode = #tpu.pipeline_mode<synchronous>, transform_indices = @transform_3, window_bounds = array<i64: 256, 128>}, {pipeline_mode = #tpu.pipeline_mode<synchronous>, transform_indices = @transform_4, window_bounds = array<i64: 256, 128>}, {pipeline_mode = #tpu.pipeline_mode<synchronous>, transform_indices = @transform_5, window_bounds = array<i64: 1152, 128>}, {transform_indices = @transform_6, window_bounds = array<i64: 1, 256, 128>}, {transform_indices = @transform_7, window_bounds = array<i64: 1, 2, 128>}]} {
    %c0 = arith.constant 0 : index
    %c0_0 = arith.constant 0 : index
    %c0_1 = arith.constant 0 : index
    %0 = vector.load %arg1[%c0, %c0_0, %c0_1] : memref<1x256x128xf32, #tpu.memory_space<vmem>>, vector<1x256x128xf32>
    %1 = vector.shape_cast %0 : vector<1x256x128xf32> to vector<256x128xf32>
    %c0_2 = arith.constant 0 : index
    %c0_3 = arith.constant 0 : index
    %2 = vector.load %arg2[%c0_2, %c0_3] : memref<1x128xf32, #tpu.memory_space<vmem>>, vector<1x128xf32>
    %3 = vector.broadcast %2 : vector<1x128xf32> to vector<256x128xf32>
    %4 = arith.mulf %1, %3 : vector<256x128xf32>
    %c0_4 = arith.constant 0 : index
    %c0_5 = arith.constant 0 : index
    %5 = vector.load %arg3[%c0_4, %c0_5] : memref<1x128xf32, #tpu.memory_space<vmem>>, vector<1x128xf32>
    %6 = vector.broadcast %5 : vector<1x128xf32> to vector<256x128xf32>
    %7 = arith.addf %4, %6 : vector<256x128xf32>
    %cst = arith.constant 0.000000e+00 : f32
    %8 = vector.broadcast %cst : f32 to vector<256x128xf32>
    %9 = arith.maximumf %7, %8 : vector<256x128xf32>
    %cst_6 = arith.constant 0.000000e+00 : f32
    %10 = vector.broadcast %cst_6 : f32 to vector<24x128xf32>
    %c0_7 = arith.constant 0 : index
    %c0_8 = arith.constant 0 : index
    %11 = vector.load %arg9[%c0_7, %c0_8] : memref<304x128xf32, #tpu.memory_space<vmem>>, vector<24x128xf32>
    tpu.vector_store %arg9[%c0_7, %c0_8], %10 {strides = array<i32>} : memref<304x128xf32, #tpu.memory_space<vmem>>, vector<24x128xf32>,
    %c280 = arith.constant 280 : index
    %c0_9 = arith.constant 0 : index
    %12 = vector.load %arg9[%c280, %c0_9] : memref<304x128xf32, #tpu.memory_space<vmem>>, vector<24x128xf32>
    tpu.vector_store %arg9[%c280, %c0_9], %10 {strides = array<i32>} : memref<304x128xf32, #tpu.memory_space<vmem>>, vector<24x128xf32>,
    %c24 = arith.constant 24 : index
    %c0_10 = arith.constant 0 : index
    %13 = vector.load %arg9[%c24, %c0_10] : memref<304x128xf32, #tpu.memory_space<vmem>>, vector<256x128xf32>
    tpu.vector_store %arg9[%c24, %c0_10], %9 {strides = array<i32>} : memref<304x128xf32, #tpu.memory_space<vmem>>, vector<256x128xf32>,
    %c0_11 = arith.constant 0 : index
    %c0_12 = arith.constant 0 : index
    %14 = vector.load %arg4[%c0_11, %c0_12] : memref<256x128xf32, #tpu.memory_space<vmem>>, vector<256x128xf32>
    %c0_13 = arith.constant 0 : index
    %c0_14 = arith.constant 0 : index
    %15 = vector.load %arg5[%c0_13, %c0_14] : memref<256x128xf32, #tpu.memory_space<vmem>>, vector<256x128xf32>
    %c7 = arith.constant 7 : index
    %c0_15 = arith.constant 0 : index
    %16 = vector.load %arg9[%c7, %c0_15] : memref<304x128xf32, #tpu.memory_space<vmem>>, vector<256x128xf32>
    %17 = arith.mulf %16, %14 : vector<256x128xf32>
    %c8 = arith.constant 8 : index
    %c0_16 = arith.constant 0 : index
    %18 = vector.load %arg9[%c8, %c0_16] : memref<304x128xf32, #tpu.memory_space<vmem>>, vector<256x128xf32>
    %c9 = arith.constant 9 : index
    %c0_17 = arith.constant 0 : index
    %19 = vector.load %arg9[%c9, %c0_17] : memref<304x128xf32, #tpu.memory_space<vmem>>, vector<256x128xf32>
    %20 = arith.mulf %19, %15 : vector<256x128xf32>
    %c23 = arith.constant 23 : index
    %c0_18 = arith.constant 0 : index
    %21 = vector.load %arg9[%c23, %c0_18] : memref<304x128xf32, #tpu.memory_space<vmem>>, vector<256x128xf32>
    %22 = arith.mulf %21, %14 : vector<256x128xf32>
    %c24_19 = arith.constant 24 : index
    %c0_20 = arith.constant 0 : index
    %23 = vector.load %arg9[%c24_19, %c0_20] : memref<304x128xf32, #tpu.memory_space<vmem>>, vector<256x128xf32>
    %c25 = arith.constant 25 : index
    %c0_21 = arith.constant 0 : index
    %24 = vector.load %arg9[%c25, %c0_21] : memref<304x128xf32, #tpu.memory_space<vmem>>, vector<256x128xf32>
    %25 = arith.mulf %24, %15 : vector<256x128xf32>
    %c39 = arith.constant 39 : index
    %c0_22 = arith.constant 0 : index
    %26 = vector.load %arg9[%c39, %c0_22] : memref<304x128xf32, #tpu.memory_space<vmem>>, vector<256x128xf32>
    %27 = arith.mulf %26, %14 : vector<256x128xf32>
    %c40 = arith.constant 40 : index
    %c0_23 = arith.constant 0 : index
    %28 = vector.load %arg9[%c40, %c0_23] : memref<304x128xf32, #tpu.memory_space<vmem>>, vector<256x128xf32>
    %c41 = arith.constant 41 : index
    %c0_24 = arith.constant 0 : index
    %29 = vector.load %arg9[%c41, %c0_24] : memref<304x128xf32, #tpu.memory_space<vmem>>, vector<256x128xf32>
    %30 = arith.mulf %29, %15 : vector<256x128xf32>
    %31 = tpu.concatenate %17, %18, %20, %22, %23, %25, %27, %28, %30 in 1 : vector<256x128xf32>, vector<256x128xf32>, vector<256x128xf32>, vector<256x128xf32>, vector<256x128xf32>, vector<256x128xf32>, vector<256x128xf32>, vector<256x128xf32>, vector<256x128xf32> -> vector<256x1152xf32>
    %c0_25 = arith.constant 0 : index
    %c0_26 = arith.constant 0 : index
    %32 = vector.load %arg6[%c0_25, %c0_26] : memref<1152x128xf32, #tpu.memory_space<vmem>>, vector<1152x128xf32>
    %cst_27 = arith.constant dense<0.000000e+00> : vector<256x128xf32>
    %33 = tpu.matmul %31, %32, %cst_27 {dimension_numbers = #tpu.dot_dimension_numbers<[1], [0], [0], [1], [0, 0, 1, 1], [], []>} : vector<256x1152xf32>, vector<1152x128xf32>, vector<256x128xf32> -> vector<256x128xf32>
    %c0_28 = arith.constant 0 : index
    %c0_29 = arith.constant 0 : index
    %c0_30 = arith.constant 0 : index
    %34 = vector.load %arg7[%c0_28, %c0_29, %c0_30] : memref<1x256x128xf32, #tpu.memory_space<vmem>>, vector<1x256x128xf32>
    %35 = vector.shape_cast %34 : vector<1x256x128xf32> to vector<256x128xf32>
    %36 = vector.shape_cast %33 : vector<256x128xf32> to vector<1x256x128xf32>
    tpu.vector_store %arg7[%c0_28, %c0_29, %c0_30], %36 {strides = array<i32>} : memref<1x256x128xf32, #tpu.memory_space<vmem>>, vector<1x256x128xf32>,
    %cst_31 = arith.constant dense<0.000000e+00> : vector<128xf32>
    %37 = vector.multi_reduction <add>, %33, %cst_31 [0] : vector<256x128xf32> to vector<128xf32>
    %38 = vector.shape_cast %37 : vector<128xf32> to vector<1x128xf32>
    %39 = arith.mulf %33, %33 : vector<256x128xf32>
    %cst_32 = arith.constant dense<0.000000e+00> : vector<128xf32>
    %40 = vector.multi_reduction <add>, %39, %cst_32 [0] : vector<256x128xf32> to vector<128xf32>
    %41 = vector.shape_cast %40 : vector<128xf32> to vector<1x128xf32>
    %42 = tpu.concatenate %38, %41 in 0 : vector<1x128xf32>, vector<1x128xf32> -> vector<2x128xf32>
    %c0_33 = arith.constant 0 : index
    %c0_34 = arith.constant 0 : index
    %c0_35 = arith.constant 0 : index
    %43 = vector.load %arg8[%c0_33, %c0_34, %c0_35] : memref<1x2x128xf32, #tpu.memory_space<vmem>>, vector<1x2x128xf32>
    %44 = vector.shape_cast %43 : vector<1x2x128xf32> to vector<2x128xf32>
    %45 = vector.shape_cast %42 : vector<2x128xf32> to vector<1x2x128xf32>
    tpu.vector_store %arg8[%c0_33, %c0_34, %c0_35], %45 {strides = array<i32>} : memref<1x2x128xf32, #tpu.memory_space<vmem>>, vector<1x2x128xf32>,
    return
  }
  func.func @transform_0(%arg0: i32) -> (i32, i32, i32) {
    %c0_i32 = arith.constant 0 : i32
    %c0_i32_0 = arith.constant 0 : i32
    %c0_i32_1 = arith.constant 0 : i32
    return %arg0, %c0_i32, %c0_i32_0 : i32, i32, i32
  }
  func.func @transform_1(%arg0: i32) -> (i32, i32) {
    %c0_i32 = arith.constant 0 : i32
    %c0_i32_0 = arith.constant 0 : i32
    %c0_i32_1 = arith.constant 0 : i32
    return %c0_i32, %c0_i32_0 : i32, i32
  }
  func.func @transform_2(%arg0: i32) -> (i32, i32) {
    %c0_i32 = arith.constant 0 : i32
    %c0_i32_0 = arith.constant 0 : i32
    %c0_i32_1 = arith.constant 0 : i32
    return %c0_i32, %c0_i32_0 : i32, i32
  }
  func.func @transform_3(%arg0: i32) -> (i32, i32) {
    %c0_i32 = arith.constant 0 : i32
    %c0_i32_0 = arith.constant 0 : i32
    %c0_i32_1 = arith.constant 0 : i32
    return %c0_i32, %c0_i32_0 : i32, i32
  }
  func.func @transform_4(%arg0: i32) -> (i32, i32) {
    %c0_i32 = arith.constant 0 : i32
    %c0_i32_0 = arith.constant 0 : i32
    %c0_i32_1 = arith.constant 0 : i32
    return %c0_i32, %c0_i32_0 : i32, i32
  }
  func.func @transform_5(%arg0: i32) -> (i32, i32) {
    %c0_i32 = arith.constant 0 : i32
    %c0_i32_0 = arith.constant 0 : i32
    %c0_i32_1 = arith.constant 0 : i32
    return %c0_i32, %c0_i32_0 : i32, i32
  }
  func.func @transform_6(%arg0: i32) -> (i32, i32, i32) {
    %c0_i32 = arith.constant 0 : i32
    %c0_i32_0 = arith.constant 0 : i32
    %c0_i32_1 = arith.constant 0 : i32
    return %arg0, %c0_i32, %c0_i32_0 : i32, i32, i32
  }
  func.func @transform_7(%arg0: i32) -> (i32, i32, i32) {
    %c0_i32 = arith.constant 0 : i32
    %c0_i32_0 = arith.constant 0 : i32
    %c0_i32_1 = arith.constant 0 : i32
    return %arg0, %c0_i32, %c0_i32_0 : i32, i32, i32
  }
}

module attributes {stable_mosaic.version = 11 : i64} {
  func.func @_bn_conv1x1_kernel(%arg0: i32, %arg1: memref<1x256x128xf32, #tpu.memory_space<vmem>>, %arg2: memref<1x128xf32, #tpu.memory_space<vmem>>, %arg3: memref<1x128xf32, #tpu.memory_space<vmem>>, %arg4: memref<128x128xf32, #tpu.memory_space<vmem>>, %arg5: memref<1x256x128xf32, #tpu.memory_space<vmem>>, %arg6: memref<1x2x128xf32, #tpu.memory_space<vmem>>) attributes {dimension_semantics = [#tpu.dimension_semantics<parallel>], iteration_bounds = array<i64: 2>, scalar_prefetch = 0 : i64, scratch_operands = 0 : i64, tpu.core_type = #tpu.core_type<tc>, window_params = [{transform_indices = @transform_0, window_bounds = array<i64: 1, 256, 128>}, {pipeline_mode = #tpu.pipeline_mode<synchronous>, transform_indices = @transform_1, window_bounds = array<i64: 1, 128>}, {pipeline_mode = #tpu.pipeline_mode<synchronous>, transform_indices = @transform_2, window_bounds = array<i64: 1, 128>}, {pipeline_mode = #tpu.pipeline_mode<synchronous>, transform_indices = @transform_3, window_bounds = array<i64: 128, 128>}, {transform_indices = @transform_4, window_bounds = array<i64: 1, 256, 128>}, {transform_indices = @transform_5, window_bounds = array<i64: 1, 2, 128>}]} {
    %c0 = arith.constant 0 : index
    %c0_0 = arith.constant 0 : index
    %c0_1 = arith.constant 0 : index
    %0 = vector.load %arg1[%c0, %c0_0, %c0_1] : memref<1x256x128xf32, #tpu.memory_space<vmem>>, vector<1x256x128xf32>
    %1 = vector.shape_cast %0 : vector<1x256x128xf32> to vector<256x128xf32>
    %c0_2 = arith.constant 0 : index
    %c0_3 = arith.constant 0 : index
    %2 = vector.load %arg2[%c0_2, %c0_3] : memref<1x128xf32, #tpu.memory_space<vmem>>, vector<1x128xf32>
    %3 = vector.broadcast %2 : vector<1x128xf32> to vector<256x128xf32>
    %4 = arith.mulf %1, %3 : vector<256x128xf32>
    %c0_4 = arith.constant 0 : index
    %c0_5 = arith.constant 0 : index
    %5 = vector.load %arg3[%c0_4, %c0_5] : memref<1x128xf32, #tpu.memory_space<vmem>>, vector<1x128xf32>
    %6 = vector.broadcast %5 : vector<1x128xf32> to vector<256x128xf32>
    %7 = arith.addf %4, %6 : vector<256x128xf32>
    %cst = arith.constant 0.000000e+00 : f32
    %8 = vector.broadcast %cst : f32 to vector<256x128xf32>
    %9 = arith.maximumf %7, %8 : vector<256x128xf32>
    %c0_6 = arith.constant 0 : index
    %c0_7 = arith.constant 0 : index
    %10 = vector.load %arg4[%c0_6, %c0_7] : memref<128x128xf32, #tpu.memory_space<vmem>>, vector<128x128xf32>
    %cst_8 = arith.constant dense<0.000000e+00> : vector<256x128xf32>
    %11 = tpu.matmul %9, %10, %cst_8 {dimension_numbers = #tpu.dot_dimension_numbers<[1], [0], [0], [1], [0, 0, 1, 1], [], []>} : vector<256x128xf32>, vector<128x128xf32>, vector<256x128xf32> -> vector<256x128xf32>
    %c0_9 = arith.constant 0 : index
    %c0_10 = arith.constant 0 : index
    %c0_11 = arith.constant 0 : index
    %12 = vector.load %arg5[%c0_9, %c0_10, %c0_11] : memref<1x256x128xf32, #tpu.memory_space<vmem>>, vector<1x256x128xf32>
    %13 = vector.shape_cast %12 : vector<1x256x128xf32> to vector<256x128xf32>
    %14 = vector.shape_cast %11 : vector<256x128xf32> to vector<1x256x128xf32>
    tpu.vector_store %arg5[%c0_9, %c0_10, %c0_11], %14 {strides = array<i32>} : memref<1x256x128xf32, #tpu.memory_space<vmem>>, vector<1x256x128xf32>,
    %cst_12 = arith.constant dense<0.000000e+00> : vector<128xf32>
    %15 = vector.multi_reduction <add>, %11, %cst_12 [0] : vector<256x128xf32> to vector<128xf32>
    %16 = vector.shape_cast %15 : vector<128xf32> to vector<1x128xf32>
    %17 = arith.mulf %11, %11 : vector<256x128xf32>
    %cst_13 = arith.constant dense<0.000000e+00> : vector<128xf32>
    %18 = vector.multi_reduction <add>, %17, %cst_13 [0] : vector<256x128xf32> to vector<128xf32>
    %19 = vector.shape_cast %18 : vector<128xf32> to vector<1x128xf32>
    %20 = tpu.concatenate %16, %19 in 0 : vector<1x128xf32>, vector<1x128xf32> -> vector<2x128xf32>
    %c0_14 = arith.constant 0 : index
    %c0_15 = arith.constant 0 : index
    %c0_16 = arith.constant 0 : index
    %21 = vector.load %arg6[%c0_14, %c0_15, %c0_16] : memref<1x2x128xf32, #tpu.memory_space<vmem>>, vector<1x2x128xf32>
    %22 = vector.shape_cast %21 : vector<1x2x128xf32> to vector<2x128xf32>
    %23 = vector.shape_cast %20 : vector<2x128xf32> to vector<1x2x128xf32>
    tpu.vector_store %arg6[%c0_14, %c0_15, %c0_16], %23 {strides = array<i32>} : memref<1x2x128xf32, #tpu.memory_space<vmem>>, vector<1x2x128xf32>,
    return
  }
  func.func @transform_0(%arg0: i32) -> (i32, i32, i32) {
    %c0_i32 = arith.constant 0 : i32
    %c0_i32_0 = arith.constant 0 : i32
    %c0_i32_1 = arith.constant 0 : i32
    return %arg0, %c0_i32, %c0_i32_0 : i32, i32, i32
  }
  func.func @transform_1(%arg0: i32) -> (i32, i32) {
    %c0_i32 = arith.constant 0 : i32
    %c0_i32_0 = arith.constant 0 : i32
    %c0_i32_1 = arith.constant 0 : i32
    return %c0_i32, %c0_i32_0 : i32, i32
  }
  func.func @transform_2(%arg0: i32) -> (i32, i32) {
    %c0_i32 = arith.constant 0 : i32
    %c0_i32_0 = arith.constant 0 : i32
    %c0_i32_1 = arith.constant 0 : i32
    return %c0_i32, %c0_i32_0 : i32, i32
  }
  func.func @transform_3(%arg0: i32) -> (i32, i32) {
    %c0_i32 = arith.constant 0 : i32
    %c0_i32_0 = arith.constant 0 : i32
    %c0_i32_1 = arith.constant 0 : i32
    return %c0_i32, %c0_i32_0 : i32, i32
  }
  func.func @transform_4(%arg0: i32) -> (i32, i32, i32) {
    %c0_i32 = arith.constant 0 : i32
    %c0_i32_0 = arith.constant 0 : i32
    %c0_i32_1 = arith.constant 0 : i32
    return %arg0, %c0_i32, %c0_i32_0 : i32, i32, i32
  }
  func.func @transform_5(%arg0: i32) -> (i32, i32, i32) {
    %c0_i32 = arith.constant 0 : i32
    %c0_i32_0 = arith.constant 0 : i32
    %c0_i32_1 = arith.constant 0 : i32
    return %arg0, %c0_i32, %c0_i32_0 : i32, i32, i32
  }
}

module attributes {stable_mosaic.version = 11 : i64} {
  func.func @_bn_residual_kernel(%arg0: i32, %arg1: memref<1x256x128xf32, #tpu.memory_space<vmem>>, %arg2: memref<1x256x128xf32, #tpu.memory_space<vmem>>, %arg3: memref<1x128xf32, #tpu.memory_space<vmem>>, %arg4: memref<1x128xf32, #tpu.memory_space<vmem>>, %arg5: memref<1x256x128xf32, #tpu.memory_space<vmem>>) attributes {dimension_semantics = [#tpu.dimension_semantics<parallel>], iteration_bounds = array<i64: 2>, scalar_prefetch = 0 : i64, scratch_operands = 0 : i64, tpu.core_type = #tpu.core_type<tc>, window_params = [{transform_indices = @transform_0, window_bounds = array<i64: 1, 256, 128>}, {transform_indices = @transform_1, window_bounds = array<i64: 1, 256, 128>}, {pipeline_mode = #tpu.pipeline_mode<synchronous>, transform_indices = @transform_2, window_bounds = array<i64: 1, 128>}, {pipeline_mode = #tpu.pipeline_mode<synchronous>, transform_indices = @transform_3, window_bounds = array<i64: 1, 128>}, {transform_indices = @transform_4, window_bounds = array<i64: 1, 256, 128>}]} {
    %c0 = arith.constant 0 : index
    %c0_0 = arith.constant 0 : index
    %c0_1 = arith.constant 0 : index
    %0 = vector.load %arg1[%c0, %c0_0, %c0_1] : memref<1x256x128xf32, #tpu.memory_space<vmem>>, vector<1x256x128xf32>
    %1 = vector.shape_cast %0 : vector<1x256x128xf32> to vector<256x128xf32>
    %c0_2 = arith.constant 0 : index
    %c0_3 = arith.constant 0 : index
    %2 = vector.load %arg3[%c0_2, %c0_3] : memref<1x128xf32, #tpu.memory_space<vmem>>, vector<1x128xf32>
    %3 = vector.broadcast %2 : vector<1x128xf32> to vector<256x128xf32>
    %4 = arith.mulf %1, %3 : vector<256x128xf32>
    %c0_4 = arith.constant 0 : index
    %c0_5 = arith.constant 0 : index
    %5 = vector.load %arg4[%c0_4, %c0_5] : memref<1x128xf32, #tpu.memory_space<vmem>>, vector<1x128xf32>
    %6 = vector.broadcast %5 : vector<1x128xf32> to vector<256x128xf32>
    %7 = arith.addf %4, %6 : vector<256x128xf32>
    %c0_6 = arith.constant 0 : index
    %c0_7 = arith.constant 0 : index
    %c0_8 = arith.constant 0 : index
    %8 = vector.load %arg2[%c0_6, %c0_7, %c0_8] : memref<1x256x128xf32, #tpu.memory_space<vmem>>, vector<1x256x128xf32>
    %9 = vector.shape_cast %8 : vector<1x256x128xf32> to vector<256x128xf32>
    %10 = arith.addf %7, %9 : vector<256x128xf32>
    %cst = arith.constant 0.000000e+00 : f32
    %11 = vector.broadcast %cst : f32 to vector<256x128xf32>
    %12 = arith.maximumf %10, %11 : vector<256x128xf32>
    %c0_9 = arith.constant 0 : index
    %c0_10 = arith.constant 0 : index
    %c0_11 = arith.constant 0 : index
    %13 = vector.load %arg5[%c0_9, %c0_10, %c0_11] : memref<1x256x128xf32, #tpu.memory_space<vmem>>, vector<1x256x128xf32>
    %14 = vector.shape_cast %13 : vector<1x256x128xf32> to vector<256x128xf32>
    %15 = vector.shape_cast %12 : vector<256x128xf32> to vector<1x256x128xf32>
    tpu.vector_store %arg5[%c0_9, %c0_10, %c0_11], %15 {strides = array<i32>} : memref<1x256x128xf32, #tpu.memory_space<vmem>>, vector<1x256x128xf32>,
    return
  }
  func.func @transform_0(%arg0: i32) -> (i32, i32, i32) {
    %c0_i32 = arith.constant 0 : i32
    %c0_i32_0 = arith.constant 0 : i32
    %c0_i32_1 = arith.constant 0 : i32
    return %arg0, %c0_i32, %c0_i32_0 : i32, i32, i32
  }
  func.func @transform_1(%arg0: i32) -> (i32, i32, i32) {
    %c0_i32 = arith.constant 0 : i32
    %c0_i32_0 = arith.constant 0 : i32
    %c0_i32_1 = arith.constant 0 : i32
    return %arg0, %c0_i32, %c0_i32_0 : i32, i32, i32
  }
  func.func @transform_2(%arg0: i32) -> (i32, i32) {
    %c0_i32 = arith.constant 0 : i32
    %c0_i32_0 = arith.constant 0 : i32
    %c0_i32_1 = arith.constant 0 : i32
    return %c0_i32, %c0_i32_0 : i32, i32
  }
  func.func @transform_3(%arg0: i32) -> (i32, i32) {
    %c0_i32 = arith.constant 0 : i32
    %c0_i32_0 = arith.constant 0 : i32
    %c0_i32_1 = arith.constant 0 : i32
    return %c0_i32, %c0_i32_0 : i32, i32
  }
  func.func @transform_4(%arg0: i32) -> (i32, i32, i32) {
    %c0_i32 = arith.constant 0 : i32
    %c0_i32_0 = arith.constant 0 : i32
    %c0_i32_1 = arith.constant 0 : i32
    return %arg0, %c0_i32, %c0_i32_0 : i32, i32, i32
  }
}

</mosaic_0001>

<llo_original>
// kernel: bottleneck_forward.4
$region0: #{bottleneck_forward.4}
  #allocation0 [shape = 'u32[]', space=smem, size = 0x4, offset = 0x4, fixed_abs, tag = 'smem constant byte address 0x4 - core index']
  #allocation1 [shape = 'u32[144,128]{1,0:T(1,128)}', space=vmem, size = 0x12000, scoped, tag = 'internal scratch']
  %s0 = inlined_call_operand.hbm [shape: f32[2,256,128], index: 0, kind: input, shape index: {}]
  %s1 = inlined_call_operand.hbm [shape: f32[128,128], index: 1, kind: input, shape index: {}]
  %s2 = inlined_call_operand.hbm [shape: f32[2,256,128], index: 2, kind: output, shape index: {0}]
  %s3 = inlined_call_operand.hbm [shape: f32[2,2,128], index: 3, kind: output, shape index: {1}]
  %4 = xla_tuple %s2, %s3
  %s5 = sld [smem:[#allocation0]]
  $region57: #{bottleneck_forward.4} parent=0
    _
  %s7 = ssub.s32 1, %s5
  %s8 = scalar_select 0, %s7, %s5
  $region1: #{bottleneck_forward.4} parent=0
    #allocation2 [shape = 'u8[262144]{0}', space=vmem, size = 0x40000, scoped, tag = 'input window, operand 0']
    #allocation3 [shape = 's32[2]{0}', space=sflag, size = 0x8, scoped, tag = 'scoped memory for bottleneck_forward.4']
    #allocation4 [shape = 's32[2]{0}', space=sflag, size = 0x8, scoped, tag = 'scoped memory for bottleneck_forward.4']
    #allocation5 [shape = 'u8[65536]{0}', space=vmem, size = 0x10000, scoped, tag = 'input window, operand 1, single buffered']
    #allocation6 [shape = 's32[1]{0}', space=sflag, size = 0x4, scoped, tag = 'scoped memory for bottleneck_forward.4']
    #allocation7 [shape = 'u8[262144]{0}', space=vmem, size = 0x40000, scoped, tag = 'output window, operand 0']
    #allocation8 [shape = 'u8[2048]{0}', space=vmem, size = 0x800, scoped, tag = 'output window, operand 1']
    #allocation9 [shape = 's32[2]{0}', space=sflag, size = 0x8, scoped, tag = 'scoped memory for bottleneck_forward.4']
    %9 = vsyncpa [#allocation3], 0
    %s10 = scalar_lea.sflag [#allocation3], 1
    %11 = vsyncpa %s10, 0
    %12 = vsyncpa [#allocation6], 0
    %13 = vsyncpa [#allocation4], 0
    %s14 = scalar_lea.sflag [#allocation4], 1
    %15 = vsyncpa %s14, 0
    %16 = vsyncpa [#allocation9], 0
    %s17 = scalar_lea.sflag [#allocation9], 1
    %18 = vsyncpa %s17, 0
    loop: start=0, step=1, limit=4
    $region2: #{bottleneck_forward.4} parent=1 // loop_pre_header
      _
    $region3: #{bottleneck_forward.4} parent=1 // loop_header
      %s20 = sphi 0, %s24
      %p21 = scmp.ge.s32.totalorder %s20, 4
      %s30 = sphi 0, %s32
      %s33 = sphi 0, %s30
      %s34 = sphi 0, %s33
      %s50 = sphi 0, %s34
      %s54 = sphi 0, %s54
      %s56 = sphi 0, %s54
      %s57 = sphi 0, %s56
      %s71 = sphi 0, %s57
      %s77 = sphi 0, %s79
      %s80 = sphi 0, %s77
      %s81 = sphi 0, %s80
      %s97 = sphi 0, %s81
      %s103 = sphi 0, %s105
      %s106 = sphi 0, %s103
      %s107 = sphi 0, %s106
      %s123 = sphi 0, %s107
    $region4: #{bottleneck_forward.4} parent=1 // loop_header_branch
      %23 = sbr.rel (%p21) target = $region8
    $region5: #{bottleneck_forward.4} parent=1 // loop_body
      %s25 = ssub.s32 %s20, 1
      %s26 = ssub.s32 %s20, 2
      %s27 = sadd.s32 %s20, 1
      %s28 = ssub.s32 %s20, %s27
      %p29 = scmp.eq.s32.totalorder %s28, 0
      %s31 = sadd.s32 %s30, 1
      %s32 = scalar_select %p29, %s30, %s31
      %p35 = pneg %p29
      %p36 = scmp.eq.s32.totalorder %s20, 1
      %p37 = por %p35, %p36
      %p38 = scmp.ne.s32.totalorder %s30, %s33
      %p39 = scmp.eq.s32.totalorder %s20, 0
      %p40 = por %p38, %p39
      %p41 = scmp.ne.s32.totalorder %s30, %s33
      %p42 = scmp.eq.s32.totalorder %s25, 1
      %p43 = por %p41, %p42
      %p44 = scmp.ne.s32.totalorder %s33, %s34
      %p45 = scmp.eq.s32.totalorder %s25, 0
      %p46 = por %p44, %p45
      %p47 = scmp.ne.s32.totalorder %s33, %s34
      %p48 = scmp.eq.s32.totalorder %s26, 1
      %p49 = por %p47, %p48
      %p51 = scmp.ne.s32.totalorder %s34, %s50
      %p52 = scmp.eq.s32.totalorder %s26, 0
      %p53 = por %p51, %p52
      %s55 = sadd.s32 %s54, 1
      %p58 = scmp.eq.s32.totalorder %s20, 1
      %p59 = scmp.ne.s32.totalorder %s54, %s56
      %p60 = scmp.eq.s32.totalorder %s20, 0
      %p61 = por %p59, %p60
      %p62 = scmp.ne.s32.totalorder %s54, %s56
      %p63 = scmp.eq.s32.totalorder %s25, 1
      %p64 = por %p62, %p63
      %p65 = scmp.ne.s32.totalorder %s56, %s57
      %p66 = scmp.eq.s32.totalorder %s25, 0
      %p67 = por %p65, %p66
      %p68 = scmp.ne.s32.totalorder %s56, %s57
      %p69 = scmp.eq.s32.totalorder %s26, 1
      %p70 = por %p68, %p69
      %p72 = scmp.ne.s32.totalorder %s57, %s71
      %p73 = scmp.eq.s32.totalorder %s26, 0
      %p74 = por %p72, %p73
      %s75 = ssub.s32 %s20, %s27
      %p76 = scmp.eq.s32.totalorder %s75, 0
      %s78 = sadd.s32 %s77, 1
      %s79 = scalar_select %p76, %s77, %s78
      %p82 = pneg %p76
      %p83 = scmp.eq.s32.totalorder %s20, 1
      %p84 = por %p82, %p83
      %p85 = scmp.ne.s32.totalorder %s77, %s80
      %p86 = scmp.eq.s32.totalorder %s20, 0
      %p87 = por %p85, %p86
      %p88 = scmp.ne.s32.totalorder %s77, %s80
      %p89 = scmp.eq.s32.totalorder %s25, 1
      %p90 = por %p88, %p89
      %p91 = scmp.ne.s32.totalorder %s80, %s81
      %p92 = scmp.eq.s32.totalorder %s25, 0
      %p93 = por %p91, %p92
      %p94 = scmp.ne.s32.totalorder %s80, %s81
      %p95 = scmp.eq.s32.totalorder %s26, 1
      %p96 = por %p94, %p95
      %p98 = scmp.ne.s32.totalorder %s81, %s97
      %p99 = scmp.eq.s32.totalorder %s26, 0
      %p100 = por %p98, %p99
      %s101 = ssub.s32 %s20, %s27
      %p102 = scmp.eq.s32.totalorder %s101, 0
      %s104 = sadd.s32 %s103, 1
      %s105 = scalar_select %p102, %s103, %s104
      %p108 = pneg %p102
      %p109 = scmp.eq.s32.totalorder %s20, 1
      %p110 = por %p108, %p109
      %p111 = scmp.ne.s32.totalorder %s103, %s106
      %p112 = scmp.eq.s32.totalorder %s20, 0
      %p113 = por %p111, %p112
      %p114 = scmp.ne.s32.totalorder %s103, %s106
      %p115 = scmp.eq.s32.totalorder %s25, 1
      %p116 = por %p114, %p115
      %p117 = scmp.ne.s32.totalorder %s106, %s107
      %p118 = scmp.eq.s32.totalorder %s25, 0
      %p119 = por %p117, %p118
      %p120 = scmp.ne.s32.totalorder %s106, %s107
      %p121 = scmp.eq.s32.totalorder %s26, 1
      %p122 = por %p120, %p121
      %p124 = scmp.ne.s32.totalorder %s107, %s123
      %p125 = scmp.eq.s32.totalorder %s26, 0
      %p126 = por %p124, %p125
      %p127 = scmp.le.s32.totalorder 1, %s20
      %p128 = scmp.lt.s32.totalorder %s20, 3
      %p129 = pnand %p127, %p128
      %p130 = pneg %p129
      // Predicated region
      $region9: #{bottleneck_forward.4} parent=5 // pred_check
        _
      $region10: #{bottleneck_forward.4} parent=5 // pred_check_branch
        %132 = sbr.rel (%p129) target = $region12
      $region11: #{bottleneck_forward.4} parent=5 // pred_region
        %s133 = ssub.s32 %s20, 1
        // Predicated region
        $region13: #{bottleneck_forward.4} parent=11 // pred_check
          %p134 = pneg %p67
        $region14: #{bottleneck_forward.4} parent=11 // pred_check_branch
          %136 = sbr.rel (%p134) target = $region16
        $region15: #{bottleneck_forward.4} parent=11 // pred_region
          %s138 = ssub.s32 2048, 2048
          %139 = vsyncadd [#allocation6], %s138
          %s140 = sshll.u32 [#allocation5], 4
          %s141 = int_to_ptr.vmem [resolvable:$true] %s140
          %146 = dma.hbm_to_vmem [thread:$0]  %s1, 2048, %s141, [#allocation6], 128, 128, 8
        $region16: #{bottleneck_forward.4} parent=11 // pred_fallthru
          _
      $region12: #{bottleneck_forward.4} parent=5 // pred_fallthru
        _
      %p147 = scmp.lt.s32.totalorder %s20, 2
      // Predicated region
      $region17: #{bottleneck_forward.4} parent=5 // pred_check
        %p148 = pneg %p147
      $region18: #{bottleneck_forward.4} parent=5 // pred_check_branch
        %150 = sbr.rel (%p148) target = $region20
      $region19: #{bottleneck_forward.4} parent=5 // pred_region
        // Predicated region
        $region21: #{bottleneck_forward.4} parent=19 // pred_check
          %p151 = pneg %p40
        $region22: #{bottleneck_forward.4} parent=19 // pred_check_branch
          %153 = sbr.rel (%p151) target = $region24
        $region23: #{bottleneck_forward.4} parent=19 // pred_region
          %s154 = sand.u32 %s30, 1
          %s155 = scalar_lea.sflag [#allocation3], %s154
          %s156 = sand.u32 %s30, 1
          %s157 = smul.addr %s156, 256
          %s158 = scalar_lea.vmem [#allocation2], %s157
          %s160 = ssub.s32 4096, 4096
          %161 = vsyncadd %s155, %s160
          %s162 = smul.addr %s20, 32
          %s163 = smul.addr %s162, 128
          %s164 = scalar_lea.hbm %s0, %s163
          %s165 = sshll.u32 %s158, 4
          %s166 = int_to_ptr.vmem [resolvable:$true] %s165
          %171 = dma.hbm_to_vmem [thread:$0]  %s164, 4096, %s166, %s155, 128, 128, 8
        $region24: #{bottleneck_forward.4} parent=19 // pred_fallthru
          _
      $region20: #{bottleneck_forward.4} parent=5 // pred_fallthru
        _
      %p172 = scmp.le.s32.totalorder 1, %s20
      %p173 = scmp.lt.s32.totalorder %s20, 3
      %p174 = pnand %p172, %p173
      %p175 = pneg %p174
      // Predicated region
      $region25: #{bottleneck_forward.4} parent=5 // pred_check
        _
      $region26: #{bottleneck_forward.4} parent=5 // pred_check_branch
        %177 = sbr.rel (%p174) target = $region28
      $region27: #{bottleneck_forward.4} parent=5 // pred_region
        %s178 = ssub.s32 %s20, 1
        %s179 = sand.u32 %s33, 1
        %s180 = scalar_lea.sflag [#allocation3], %s179
        %s181 = sand.u32 %s33, 1
        %s182 = smul.addr %s181, 256
        %s183 = scalar_lea.vmem [#allocation2], %s182
        // Predicated region
        $region29: #{bottleneck_forward.4} parent=27 // pred_check
          %p184 = pneg %p46
        $region30: #{bottleneck_forward.4} parent=27 // pred_check_branch
          %186 = sbr.rel (%p184) target = $region32
        $region31: #{bottleneck_forward.4} parent=27 // pred_region
          %187 = dma.done %s180, 4096
        $region32: #{bottleneck_forward.4} parent=27 // pred_fallthru
          _
        // Predicated region
        $region33: #{bottleneck_forward.4} parent=27 // pred_check
          %p188 = pneg %p67
        $region34: #{bottleneck_forward.4} parent=27 // pred_check_branch
          %190 = sbr.rel (%p188) target = $region36
        $region35: #{bottleneck_forward.4} parent=27 // pred_region
          %191 = dma.done [#allocation6], 2048
        $region36: #{bottleneck_forward.4} parent=27 // pred_fallthru
          _
        %s192 = sand.u32 %s33, 1
        %s193 = scalar_lea.sflag [#allocation3], %s192
        %s194 = sand.u32 %s33, 1
        %s195 = smul.addr %s194, 256
        %s196 = scalar_lea.vmem [#allocation2], %s195
        %p197 = pneg %p46
        %p198 = pneg %p43
        %p199 = pneg %p67
        %p200 = pneg %p64
        %p201 = pneg %p93
        %p202 = pneg %p90
        %s203 = sand.u32 %s80, 1
        %s204 = scalar_lea.sflag [#allocation4], %s203
        %s205 = sand.u32 %s80, 1
        %s206 = smul.addr %s205, 256
        %s207 = scalar_lea.vmem [#allocation7], %s206
        %p208 = pneg %p119
        %p209 = pneg %p116
        %s210 = sand.u32 %s106, 1
        %s211 = scalar_lea.sflag [#allocation9], %s210
        %s212 = sand.u32 %s106, 1
        %s213 = smul.addr %s212, 2
        %s214 = scalar_lea.vmem [#allocation8], %s213
        %v215 = vld [vmem:[%s183] sm:$0xff]
        %v216 = vld [vmem:[%s183 + $0x8] sm:$0xff]
        %v217 = vld [vmem:[%s183 + $0x10] sm:$0xff]
        %v218 = vld [vmem:[%s183 + $0x18] sm:$0xff]
        %v219 = vld [vmem:[%s183 + $0x20] sm:$0xff]
        %v220 = vld [vmem:[%s183 + $0x28] sm:$0xff]
        %v221 = vld [vmem:[%s183 + $0x30] sm:$0xff]
        %v222 = vld [vmem:[%s183 + $0x38] sm:$0xff]
        %v223 = vld [vmem:[%s183 + $0x40] sm:$0xff]
        %v224 = vld [vmem:[%s183 + $0x48] sm:$0xff]
        %v225 = vld [vmem:[%s183 + $0x50] sm:$0xff]
        %v226 = vld [vmem:[%s183 + $0x58] sm:$0xff]
        %v227 = vld [vmem:[%s183 + $0x60] sm:$0xff]
        %v228 = vld [vmem:[%s183 + $0x68] sm:$0xff]
        %v229 = vld [vmem:[%s183 + $0x70] sm:$0xff]
        %v230 = vld [vmem:[%s183 + $0x78] sm:$0xff]
        %v231 = vld [vmem:[%s183 + $0x80] sm:$0xff]
        %v232 = vld [vmem:[%s183 + $0x88] sm:$0xff]
        %v233 = vld [vmem:[%s183 + $0x90] sm:$0xff]
        %v234 = vld [vmem:[%s183 + $0x98] sm:$0xff]
        %v235 = vld [vmem:[%s183 + $0xa0] sm:$0xff]
        %v236 = vld [vmem:[%s183 + $0xa8] sm:$0xff]
        %v237 = vld [vmem:[%s183 + $0xb0] sm:$0xff]
        %v238 = vld [vmem:[%s183 + $0xb8] sm:$0xff]
        %v239 = vld [vmem:[%s183 + $0xc0] sm:$0xff]
        %v240 = vld [vmem:[%s183 + $0xc8] sm:$0xff]
        %v241 = vld [vmem:[%s183 + $0xd0] sm:$0xff]
        %v242 = vld [vmem:[%s183 + $0xd8] sm:$0xff]
        %v243 = vld [vmem:[%s183 + $0xe0] sm:$0xff]
        %v244 = vld [vmem:[%s183 + $0xe8] sm:$0xff]
        %v245 = vld [vmem:[%s183 + $0xf0] sm:$0xff]
        %v246 = vld [vmem:[%s183 + $0xf8] sm:$0xff]
        %v247 = vld [vmem:[#allocation5] sm:$0xff]
        %v248 = vld [vmem:[#allocation5 + $0x8] sm:$0xff]
        %v249 = vld [vmem:[#allocation5 + $0x10] sm:$0xff]
        %v250 = vld [vmem:[#allocation5 + $0x18] sm:$0xff]
        %v251 = vld [vmem:[#allocation5 + $0x20] sm:$0xff]
        %v252 = vld [vmem:[#allocation5 + $0x28] sm:$0xff]
        %v253 = vld [vmem:[#allocation5 + $0x30] sm:$0xff]
        %v254 = vld [vmem:[#allocation5 + $0x38] sm:$0xff]
        %v255 = vld [vmem:[#allocation5 + $0x40] sm:$0xff]
        %v256 = vld [vmem:[#allocation5 + $0x48] sm:$0xff]
        %v257 = vld [vmem:[#allocation5 + $0x50] sm:$0xff]
        %v258 = vld [vmem:[#allocation5 + $0x58] sm:$0xff]
        %v259 = vld [vmem:[#allocation5 + $0x60] sm:$0xff]
        %v260 = vld [vmem:[#allocation5 + $0x68] sm:$0xff]
        %v261 = vld [vmem:[#allocation5 + $0x70] sm:$0xff]
        %v262 = vld [vmem:[#allocation5 + $0x78] sm:$0xff]
        %263 = vmatprep.subr.mxu0 0.0
        %264 = vmatpush1.msra.mxu0 %v247
        %265 = vmatprep.subr.mxu0 0.0
        %266 = vmatpush1.msra.mxu0 %v248
        %267 = vmatprep.subr.mxu0 0.0
        %268 = vmatpush1.msra.mxu0 %v249
        %269 = vmatprep.subr.mxu0 0.0
        %270 = vmatpush1.msra.mxu0 %v250
        %271 = vmatprep.subr.mxu0 0.0
        %272 = vmatpush1.msra.mxu0 %v251
        %273 = vmatprep.subr.mxu0 0.0
        %274 = vmatpush1.msra.mxu0 %v252
        %275 = vmatprep.subr.mxu0 0.0
        %276 = vmatpush1.msra.mxu0 %v253
        %277 = vmatprep.subr.mxu0 0.0
        %278 = vmatpush1.msra.mxu0 %v254
        %279 = vmatprep.subr.mxu0 0.0
        %280 = vmatpush1.msra.mxu0 %v255
        %281 = vmatprep.subr.mxu0 0.0
        %282 = vmatpush1.msra.mxu0 %v256
        %283 = vmatprep.subr.mxu0 0.0
        %284 = vmatpush1.msra.mxu0 %v257
        %285 = vmatprep.subr.mxu0 0.0
        %286 = vmatpush1.msra.mxu0 %v258
        %287 = vmatprep.subr.mxu0 0.0
        %288 = vmatpush1.msra.mxu0 %v259
        %289 = vmatprep.subr.mxu0 0.0
        %290 = vmatpush1.msra.mxu0 %v260
        %291 = vmatprep.subr.mxu0 0.0
        %292 = vmatpush1.msra.mxu0 %v261
        %293 = vmatprep.subr.mxu0 0.0
        %294 = vmatpush1.msra.mxu0 %v262
        %295 = vmatprep.subr.mxu0 0.0
        %296 = vmatpush1.msra.mxu0 0.0
        %297 = vmatprep.subr.mxu0 0.0
        %298 = vmatpush1.msra.mxu0 0.0
        %299 = vmatprep.subr.mxu0 0.0
        %300 = vmatpush1.msra.mxu0 0.0
        %301 = vmatprep.subr.mxu0 0.0
        %302 = vmatpush1.msra.mxu0 0.0
        %303 = vmatprep.subr.mxu0 0.0
        %304 = vmatpush1.msra.mxu0 0.0
        %305 = vmatprep.subr.mxu0 0.0
        %306 = vmatpush1.msra.mxu0 0.0
        %307 = vmatprep.subr.mxu0 0.0
        %308 = vmatpush1.msra.mxu0 0.0
        %309 = vmatprep.subr.mxu0 0.0
        %310 = vmatpush1.msra.mxu0 0.0
        %311 = vmatprep.subr.mxu0 0.0
        %312 = vmatpush1.msra.mxu0 0.0
        %313 = vmatprep.subr.mxu0 0.0
        %314 = vmatpush1.msra.mxu0 0.0
        %315 = vmatprep.subr.mxu0 0.0
        %316 = vmatpush1.msra.mxu0 0.0
        %317 = vmatprep.subr.mxu0 0.0
        %318 = vmatpush1.msra.mxu0 0.0
        %319 = vmatprep.subr.mxu0 0.0
        %320 = vmatpush1.msra.mxu0 0.0
        %321 = vmatprep.subr.mxu0 0.0
        %322 = vmatpush1.msra.mxu0 0.0
        %323 = vmatprep.subr.mxu0 0.0
        %324 = vmatpush1.msra.mxu0 0.0
        %325 = vmatprep.subr.mxu0 0.0
        %326 = vmatpush1.msra.mxu0 0.0
        %327 = vmatprep.mubr.f32.mxu0 0.0
        %328 = vmatmul.mubr.f32.gmra.mrb[0].mxu0 %v215
        %v329 = vpop.f32.mrb[0].mxu0
        %v330 = vadd.f32 0.0, %v329
        %v331 = vpop.f32.mrb[0].mxu0
        %332 = vmatprep.mubr.f32.mxu0 0.0
        %333 = vmatmul.mubr.f32.gmra.mrb[0].mxu0 %v216
        %v334 = vpop.f32.mrb[0].mxu0
        %v335 = vadd.f32 0.0, %v334
        %v336 = vpop.f32.mrb[0].mxu0
        %337 = vmatprep.mubr.f32.mxu0 0.0
        %338 = vmatmul.mubr.f32.gmra.mrb[0].mxu0 %v217
        %v339 = vpop.f32.mrb[0].mxu0
        %v340 = vadd.f32 0.0, %v339
        %v341 = vpop.f32.mrb[0].mxu0
        %342 = vmatprep.mubr.f32.mxu0 0.0
        %343 = vmatmul.mubr.f32.gmra.mrb[0].mxu0 %v218
        %v344 = vpop.f32.mrb[0].mxu0
        %v345 = vadd.f32 0.0, %v344
        %v346 = vpop.f32.mrb[0].mxu0
        %347 = vmatprep.mubr.f32.mxu0 0.0
        %348 = vmatmul.mubr.f32.gmra.mrb[0].mxu0 %v219
        %v349 = vpop.f32.mrb[0].mxu0
        %v350 = vadd.f32 0.0, %v349
        %v351 = vpop.f32.mrb[0].mxu0
        %352 = vmatprep.mubr.f32.mxu0 0.0
        %353 = vmatmul.mubr.f32.gmra.mrb[0].mxu0 %v220
        %v354 = vpop.f32.mrb[0].mxu0
        %v355 = vadd.f32 0.0, %v354
        %v356 = vpop.f32.mrb[0].mxu0
        %357 = vmatprep.mubr.f32.mxu0 0.0
        %358 = vmatmul.mubr.f32.gmra.mrb[0].mxu0 %v221
        %v359 = vpop.f32.mrb[0].mxu0
        %v360 = vadd.f32 0.0, %v359
        %v361 = vpop.f32.mrb[0].mxu0
        %362 = vmatprep.mubr.f32.mxu0 0.0
        %363 = vmatmul.mubr.f32.gmra.mrb[0].mxu0 %v222
        %v364 = vpop.f32.mrb[0].mxu0
        %v365 = vadd.f32 0.0, %v364
        %v366 = vpop.f32.mrb[0].mxu0
        %367 = vmatprep.mubr.f32.mxu0 0.0
        %368 = vmatmul.mubr.f32.gmra.mrb[0].mxu0 %v223
        %v369 = vpop.f32.mrb[0].mxu0
        %v370 = vadd.f32 0.0, %v369
        %v371 = vpop.f32.mrb[0].mxu0
        %372 = vmatprep.mubr.f32.mxu0 0.0
        %373 = vmatmul.mubr.f32.gmra.mrb[0].mxu0 %v224
        %v374 = vpop.f32.mrb[0].mxu0
        %v375 = vadd.f32 0.0, %v374
        %v376 = vpop.f32.mrb[0].mxu0
        %377 = vmatprep.mubr.f32.mxu0 0.0
        %378 = vmatmul.mubr.f32.gmra.mrb[0].mxu0 %v225
        %v379 = vpop.f32.mrb[0].mxu0
        %v380 = vadd.f32 0.0, %v379
        %v381 = vpop.f32.mrb[0].mxu0
        %382 = vmatprep.mubr.f32.mxu0 0.0
        %383 = vmatmul.mubr.f32.gmra.mrb[0].mxu0 %v226
        %v384 = vpop.f32.mrb[0].mxu0
        %v385 = vadd.f32 0.0, %v384
        %v386 = vpop.f32.mrb[0].mxu0
        %387 = vmatprep.mubr.f32.mxu0 0.0
        %388 = vmatmul.mubr.f32.gmra.mrb[0].mxu0 %v227
        %v389 = vpop.f32.mrb[0].mxu0
        %v390 = vadd.f32 0.0, %v389
        %v391 = vpop.f32.mrb[0].mxu0
        %392 = vmatprep.mubr.f32.mxu0 0.0
        %393 = vmatmul.mubr.f32.gmra.mrb[0].mxu0 %v228
        %v394 = vpop.f32.mrb[0].mxu0
        %v395 = vadd.f32 0.0, %v394
        %v396 = vpop.f32.mrb[0].mxu0
        %397 = vmatprep.mubr.f32.mxu0 0.0
        %398 = vmatmul.mubr.f32.gmra.mrb[0].mxu0 %v229
        %v399 = vpop.f32.mrb[0].mxu0
        %v400 = vadd.f32 0.0, %v399
        %v401 = vpop.f32.mrb[0].mxu0
        %402 = vmatprep.mubr.f32.mxu0 0.0
        %403 = vmatmul.mubr.f32.gmra.mrb[0].mxu0 %v230
        %v404 = vpop.f32.mrb[0].mxu0
        %v405 = vadd.f32 0.0, %v404
        %v406 = vpop.f32.mrb[0].mxu0
        %407 = vmatprep.mubr.f32.mxu0 0.0
        %408 = vmatmul.mubr.f32.gmra.mrb[0].mxu0 %v231
        %v409 = vpop.f32.mrb[0].mxu0
        %v410 = vadd.f32 0.0, %v409
        %v411 = vpop.f32.mrb[0].mxu0
        %412 = vmatprep.mubr.f32.mxu0 0.0
        %413 = vmatmul.mubr.f32.gmra.mrb[0].mxu0 %v232
        %v414 = vpop.f32.mrb[0].mxu0
        %v415 = vadd.f32 0.0, %v414
        %v416 = vpop.f32.mrb[0].mxu0
        %417 = vmatprep.mubr.f32.mxu0 0.0
        %418 = vmatmul.mubr.f32.gmra.mrb[0].mxu0 %v233
        %v419 = vpop.f32.mrb[0].mxu0
        %v420 = vadd.f32 0.0, %v419
        %v421 = vpop.f32.mrb[0].mxu0
        %422 = vmatprep.mubr.f32.mxu0 0.0
        %423 = vmatmul.mubr.f32.gmra.mrb[0].mxu0 %v234
        %v424 = vpop.f32.mrb[0].mxu0
        %v425 = vadd.f32 0.0, %v424
        %v426 = vpop.f32.mrb[0].mxu0
        %427 = vmatprep.mubr.f32.mxu0 0.0
        %428 = vmatmul.mubr.f32.gmra.mrb[0].mxu0 %v235
        %v429 = vpop.f32.mrb[0].mxu0
        %v430 = vadd.f32 0.0, %v429
        %v431 = vpop.f32.mrb[0].mxu0
        %432 = vmatprep.mubr.f32.mxu0 0.0
        %433 = vmatmul.mubr.f32.gmra.mrb[0].mxu0 %v236
        %v434 = vpop.f32.mrb[0].mxu0
        %v435 = vadd.f32 0.0, %v434
        %v436 = vpop.f32.mrb[0].mxu0
        %437 = vmatprep.mubr.f32.mxu0 0.0
        %438 = vmatmul.mubr.f32.gmra.mrb[0].mxu0 %v237
        %v439 = vpop.f32.mrb[0].mxu0
        %v440 = vadd.f32 0.0, %v439
        %v441 = vpop.f32.mrb[0].mxu0
        %442 = vmatprep.mubr.f32.mxu0 0.0
        %443 = vmatmul.mubr.f32.gmra.mrb[0].mxu0 %v238
        %v444 = vpop.f32.mrb[0].mxu0
        %v445 = vadd.f32 0.0, %v444
        %v446 = vpop.f32.mrb[0].mxu0
        %447 = vmatprep.mubr.f32.mxu0 0.0
        %448 = vmatmul.mubr.f32.gmra.mrb[0].mxu0 %v239
        %v449 = vpop.f32.mrb[0].mxu0
        %v450 = vadd.f32 0.0, %v449
        %v451 = vpop.f32.mrb[0].mxu0
        %452 = vmatprep.mubr.f32.mxu0 0.0
        %453 = vmatmul.mubr.f32.gmra.mrb[0].mxu0 %v240
        %v454 = vpop.f32.mrb[0].mxu0
        %v455 = vadd.f32 0.0, %v454
        %v456 = vpop.f32.mrb[0].mxu0
        %457 = vmatprep.mubr.f32.mxu0 0.0
        %458 = vmatmul.mubr.f32.gmra.mrb[0].mxu0 %v241
        %v459 = vpop.f32.mrb[0].mxu0
        %v460 = vadd.f32 0.0, %v459
        %v461 = vpop.f32.mrb[0].mxu0
        %462 = vmatprep.mubr.f32.mxu0 0.0
        %463 = vmatmul.mubr.f32.gmra.mrb[0].mxu0 %v242
        %v464 = vpop.f32.mrb[0].mxu0
        %v465 = vadd.f32 0.0, %v464
        %v466 = vpop.f32.mrb[0].mxu0
        %467 = vmatprep.mubr.f32.mxu0 0.0
        %468 = vmatmul.mubr.f32.gmra.mrb[0].mxu0 %v243
        %v469 = vpop.f32.mrb[0].mxu0
        %v470 = vadd.f32 0.0, %v469
        %v471 = vpop.f32.mrb[0].mxu0
        %472 = vmatprep.mubr.f32.mxu0 0.0
        %473 = vmatmul.mubr.f32.gmra.mrb[0].mxu0 %v244
        %v474 = vpop.f32.mrb[0].mxu0
        %v475 = vadd.f32 0.0, %v474
        %v476 = vpop.f32.mrb[0].mxu0
        %477 = vmatprep.mubr.f32.mxu0 0.0
        %478 = vmatmul.mubr.f32.gmra.mrb[0].mxu0 %v245
        %v479 = vpop.f32.mrb[0].mxu0
        %v480 = vadd.f32 0.0, %v479
        %v481 = vpop.f32.mrb[0].mxu0
        %482 = vmatprep.mubr.f32.mxu0 0.0
        %483 = vmatmul.mubr.f32.gmra.mrb[0].mxu0 %v246
        %v484 = vpop.f32.mrb[0].mxu0
        %v485 = vadd.f32 0.0, %v484
        %v486 = vpop.f32.mrb[0].mxu0
        %487 = vdwg.mxu0
        %488 = vst [vmem:[%s207] sm:$0xff] %v330
        %489 = vst [vmem:[%s207 + $0x8] sm:$0xff] %v335
        %490 = vst [vmem:[%s207 + $0x10] sm:$0xff] %v340
        %491 = vst [vmem:[%s207 + $0x18] sm:$0xff] %v345
        %492 = vst [vmem:[%s207 + $0x20] sm:$0xff] %v350
        %493 = vst [vmem:[%s207 + $0x28] sm:$0xff] %v355
        %494 = vst [vmem:[%s207 + $0x30] sm:$0xff] %v360
        %495 = vst [vmem:[%s207 + $0x38] sm:$0xff] %v365
        %496 = vst [vmem:[%s207 + $0x40] sm:$0xff] %v370
        %497 = vst [vmem:[%s207 + $0x48] sm:$0xff] %v375
        %498 = vst [vmem:[%s207 + $0x50] sm:$0xff] %v380
        %499 = vst [vmem:[%s207 + $0x58] sm:$0xff] %v385
        %500 = vst [vmem:[%s207 + $0x60] sm:$0xff] %v390
        %501 = vst [vmem:[%s207 + $0x68] sm:$0xff] %v395
        %502 = vst [vmem:[%s207 + $0x70] sm:$0xff] %v400
        %503 = vst [vmem:[%s207 + $0x78] sm:$0xff] %v405
        %504 = vst [vmem:[%s207 + $0x80] sm:$0xff] %v410
        %505 = vst [vmem:[%s207 + $0x88] sm:$0xff] %v415
        %506 = vst [vmem:[%s207 + $0x90] sm:$0xff] %v420
        %507 = vst [vmem:[%s207 + $0x98] sm:$0xff] %v425
        %508 = vst [vmem:[%s207 + $0xa0] sm:$0xff] %v430
        %509 = vst [vmem:[%s207 + $0xa8] sm:$0xff] %v435
        %510 = vst [vmem:[%s207 + $0xb0] sm:$0xff] %v440
        %511 = vst [vmem:[%s207 + $0xb8] sm:$0xff] %v445
        %512 = vst [vmem:[%s207 + $0xc0] sm:$0xff] %v450
        %513 = vst [vmem:[%s207 + $0xc8] sm:$0xff] %v455
        %514 = vst [vmem:[%s207 + $0xd0] sm:$0xff] %v460
        %515 = vst [vmem:[%s207 + $0xd8] sm:$0xff] %v465
        %516 = vst [vmem:[%s207 + $0xe0] sm:$0xff] %v470
        %517 = vst [vmem:[%s207 + $0xe8] sm:$0xff] %v475
        %518 = vst [vmem:[%s207 + $0xf0] sm:$0xff] %v480
        %519 = vst [vmem:[%s207 + $0xf8] sm:$0xff] %v485
        %v520 = vadd.f32 %v330, %v335
        %v521 = vadd.f32 %v520, %v340
        %v522 = vadd.f32 %v521, %v345
        %v523 = vadd.f32 %v522, %v350
        %v524 = vadd.f32 %v523, %v355
        %v525 = vadd.f32 %v524, %v360
        %v526 = vadd.f32 %v525, %v365
        %v527 = vadd.f32 %v526, %v370
        %v528 = vadd.f32 %v527, %v375
        %v529 = vadd.f32 %v528, %v380
        %v530 = vadd.f32 %v529, %v385
        %v531 = vadd.f32 %v530, %v390
        %v532 = vadd.f32 %v531, %v395
        %v533 = vadd.f32 %v532, %v400
        %v534 = vadd.f32 %v533, %v405
        %v535 = vadd.f32 %v534, %v410
        %v536 = vadd.f32 %v535, %v415
        %v537 = vadd.f32 %v536, %v420
        %v538 = vadd.f32 %v537, %v425
        %v539 = vadd.f32 %v538, %v430
        %v540 = vadd.f32 %v539, %v435
        %v541 = vadd.f32 %v540, %v440
        %v542 = vadd.f32 %v541, %v445
        %v543 = vadd.f32 %v542, %v450
        %v544 = vadd.f32 %v543, %v455
        %v545 = vadd.f32 %v544, %v460
        %v546 = vadd.f32 %v545, %v465
        %v547 = vadd.f32 %v546, %v470
        %v548 = vadd.f32 %v547, %v475
        %v549 = vadd.f32 %v548, %v480
        %v550 = vadd.f32 %v549, %v485
        %v551 = vrot.slane %v550, 4
        %v552 = vadd.f32 %v550, %v551
        %v553 = vrot.slane %v552, 2
        %v554 = vadd.f32 %v552, %v553
        %v555 = vrot.slane %v554, 1
        %v556 = vadd.f32 %v554, %v555
        %v557 = vmul.f32 %v330, %v330
        %v558 = vmul.f32 %v335, %v335
        %v559 = vmul.f32 %v340, %v340
        %v560 = vmul.f32 %v345, %v345
        %v561 = vmul.f32 %v350, %v350
        %v562 = vmul.f32 %v355, %v355
        %v563 = vmul.f32 %v360, %v360
        %v564 = vmul.f32 %v365, %v365
        %v565 = vmul.f32 %v370, %v370
        %v566 = vmul.f32 %v375, %v375
        %v567 = vmul.f32 %v380, %v380
        %v568 = vmul.f32 %v385, %v385
        %v569 = vmul.f32 %v390, %v390
        %v570 = vmul.f32 %v395, %v395
        %v571 = vmul.f32 %v400, %v400
        %v572 = vmul.f32 %v405, %v405
        %v573 = vmul.f32 %v410, %v410
        %v574 = vmul.f32 %v415, %v415
        %v575 = vmul.f32 %v420, %v420
        %v576 = vmul.f32 %v425, %v425
        %v577 = vmul.f32 %v430, %v430
        %v578 = vmul.f32 %v435, %v435
        %v579 = vmul.f32 %v440, %v440
        %v580 = vmul.f32 %v445, %v445
        %v581 = vmul.f32 %v450, %v450
        %v582 = vmul.f32 %v455, %v455
        %v583 = vmul.f32 %v460, %v460
        %v584 = vmul.f32 %v465, %v465
        %v585 = vmul.f32 %v470, %v470
        %v586 = vmul.f32 %v475, %v475
        %v587 = vmul.f32 %v480, %v480
        %v588 = vmul.f32 %v485, %v485
        %v589 = vadd.f32 %v557, %v558
        %v590 = vadd.f32 %v589, %v559
        %v591 = vadd.f32 %v590, %v560
        %v592 = vadd.f32 %v591, %v561
        %v593 = vadd.f32 %v592, %v562
        %v594 = vadd.f32 %v593, %v563
        %v595 = vadd.f32 %v594, %v564
        %v596 = vadd.f32 %v595, %v565
        %v597 = vadd.f32 %v596, %v566
        %v598 = vadd.f32 %v597, %v567
        %v599 = vadd.f32 %v598, %v568
        %v600 = vadd.f32 %v599, %v569
        %v601 = vadd.f32 %v600, %v570
        %v602 = vadd.f32 %v601, %v571
        %v603 = vadd.f32 %v602, %v572
        %v604 = vadd.f32 %v603, %v573
        %v605 = vadd.f32 %v604, %v574
        %v606 = vadd.f32 %v605, %v575
        %v607 = vadd.f32 %v606, %v576
        %v608 = vadd.f32 %v607, %v577
        %v609 = vadd.f32 %v608, %v578
        %v610 = vadd.f32 %v609, %v579
        %v611 = vadd.f32 %v610, %v580
        %v612 = vadd.f32 %v611, %v581
        %v613 = vadd.f32 %v612, %v582
        %v614 = vadd.f32 %v613, %v583
        %v615 = vadd.f32 %v614, %v584
        %v616 = vadd.f32 %v615, %v585
        %v617 = vadd.f32 %v616, %v586
        %v618 = vadd.f32 %v617, %v587
        %v619 = vadd.f32 %v618, %v588
        %v620 = vrot.slane %v619, 4
        %v621 = vadd.f32 %v619, %v620
        %v622 = vrot.slane %v621, 2
        %v623 = vadd.f32 %v621, %v622
        %v624 = vrot.slane %v623, 1
        %v625 = vadd.f32 %v623, %v624
        %vm626 = vcmask 1040384
        %v627 = vsel %vm626, %v556, %v625
        %628 = vst [vmem:[%s214] sm:$0x3] %v627
        %s629 = sand.u32 %s80, 1
        %s630 = scalar_lea.sflag [#allocation4], %s629
        %s631 = sand.u32 %s80, 1
        %s632 = smul.addr %s631, 256
        %s633 = scalar_lea.vmem [#allocation7], %s632
        %s634 = sand.u32 %s106, 1
        %s635 = scalar_lea.sflag [#allocation9], %s634
        %s636 = sand.u32 %s106, 1
        %s637 = smul.addr %s636, 2
        %s638 = scalar_lea.vmem [#allocation8], %s637
        // Predicated region
        $region37: #{bottleneck_forward.4} parent=27 // pred_check
          %p639 = pneg %p90
        $region38: #{bottleneck_forward.4} parent=27 // pred_check_branch
          %641 = sbr.rel (%p639) target = $region40
        $region39: #{bottleneck_forward.4} parent=27 // pred_region
          %s643 = ssub.s32 4096, 4096
          %644 = vsyncadd %s630, %s643
          %s645 = smul.addr %s25, 32
          %s646 = smul.addr %s645, 128
          %s647 = scalar_lea.hbm %s2, %s646
          %s648 = sshll.u32 %s633, 4
          %s649 = int_to_ptr.vmem [resolvable:$true] %s648
          %654 = dma.vmem_to_hbm [thread:$0]  %s649, 4096, %s647, %s630, 128, 128, 8
        $region40: #{bottleneck_forward.4} parent=27 // pred_fallthru
          _
        // Predicated region
        $region41: #{bottleneck_forward.4} parent=27 // pred_check
          %p655 = pneg %p116
        $region42: #{bottleneck_forward.4} parent=27 // pred_check_branch
          %657 = sbr.rel (%p655) target = $region44
        $region43: #{bottleneck_forward.4} parent=27 // pred_region
          %s659 = ssub.s32 32, 32
          %660 = vsyncadd %s635, %s659
          %s661 = smul.addr %s25, 32
          %s662 = scalar_lea.hbm %s3, %s661
          %s664 = sshll.u32 %s638, 4
          %s665 = int_to_ptr.vmem [resolvable:$true] %s664
          %667 = dma.vmem_to_hbm [thread:$0]  %s665, 32, %s662, %s635
        $region44: #{bottleneck_forward.4} parent=27 // pred_fallthru
          _
      $region28: #{bottleneck_forward.4} parent=5 // pred_fallthru
        _
      %p668 = scmp.le.s32.totalorder 2, %s20
      // Predicated region
      $region45: #{bottleneck_forward.4} parent=5 // pred_check
        %p669 = pneg %p668
      $region46: #{bottleneck_forward.4} parent=5 // pred_check_branch
        %671 = sbr.rel (%p669) target = $region48
      $region47: #{bottleneck_forward.4} parent=5 // pred_region
        %s672 = ssub.s32 %s20, 2
        // Predicated region
        $region49: #{bottleneck_forward.4} parent=47 // pred_check
          %p673 = pneg %p96
        $region50: #{bottleneck_forward.4} parent=47 // pred_check_branch
          %675 = sbr.rel (%p673) target = $region52
        $region51: #{bottleneck_forward.4} parent=47 // pred_region
          %s676 = sand.u32 %s81, 1
          %s677 = scalar_lea.sflag [#allocation4], %s676
          %s678 = sand.u32 %s81, 1
          %s679 = smul.addr %s678, 256
          %s680 = scalar_lea.vmem [#allocation7], %s679
          %681 = dma.done %s677, 4096
        $region52: #{bottleneck_forward.4} parent=47 // pred_fallthru
          _
        // Predicated region
        $region53: #{bottleneck_forward.4} parent=47 // pred_check
          %p682 = pneg %p122
        $region54: #{bottleneck_forward.4} parent=47 // pred_check_branch
          %684 = sbr.rel (%p682) target = $region56
        $region55: #{bottleneck_forward.4} parent=47 // pred_region
          %s685 = sand.u32 %s107, 1
          %s686 = scalar_lea.sflag [#allocation9], %s685
          %s687 = sand.u32 %s107, 1
          %s688 = smul.addr %s687, 2
          %s689 = scalar_lea.vmem [#allocation8], %s688
          %690 = dma.done %s686, 32
        $region56: #{bottleneck_forward.4} parent=47 // pred_fallthru
          _
      $region48: #{bottleneck_forward.4} parent=5 // pred_fallthru
        _
    $region6: #{bottleneck_forward.4} parent=1 // loop_footer
      %s24 = sadd.s32 1, %s20
    $region7: #{bottleneck_forward.4} parent=1 // loop_footer_branch
      %19 = sbr.rel target = $region3
    $region8: #{bottleneck_forward.4} parent=1 // loop_exit
      _
    %691 = vsyncpa [#allocation3], 1
    %s692 = scalar_lea.sflag [#allocation3], 1
    %693 = vsyncpa %s692, 1
    %694 = vsyncpa [#allocation6], 1
    %695 = vsyncpa [#allocation4], 1
    %s696 = scalar_lea.sflag [#allocation4], 1
    %697 = vsyncpa %s696, 1
    %698 = vsyncpa [#allocation9], 1
    %s699 = scalar_lea.sflag [#allocation9], 1
    %700 = vsyncpa %s699, 1

// kernel: bottleneck_forward.6
$region0: #{bottleneck_forward.6}
  #allocation0 [shape = 'u32[]', space=smem, size = 0x4, offset = 0x4, fixed_abs, tag = 'smem constant byte address 0x4 - core index']
  #allocation1 [shape = 'u32[144,128]{1,0:T(1,128)}', space=vmem, size = 0x12000, scoped, tag = 'internal scratch']
  %s0 = inlined_call_operand.hbm [shape: f32[2,256,128], index: 0, kind: input, shape index: {}]
  %s1 = inlined_call_operand.hbm [shape: f32[1,128], index: 1, kind: input, shape index: {}]
  %s2 = inlined_call_operand.hbm [shape: f32[1,128], index: 2, kind: input, shape index: {}]
  %s3 = inlined_call_operand.hbm [shape: f32[128,128], index: 3, kind: input, shape index: {}]
  %s4 = inlined_call_operand.hbm [shape: f32[2,256,128], index: 4, kind: output, shape index: {0}]
  %s5 = inlined_call_operand.hbm [shape: f32[2,2,128], index: 5, kind: output, shape index: {1}]
  %6 = xla_tuple %s4, %s5
  %s7 = sld [smem:[#allocation0]]
  $region73: #{bottleneck_forward.6} parent=0
    _
  %s9 = ssub.s32 1, %s7
  %s10 = scalar_select 0, %s9, %s7
  $region1: #{bottleneck_forward.6} parent=0
    #allocation2 [shape = 'u8[262144]{0}', space=vmem, size = 0x40000, scoped, tag = 'input window, operand 0']
    #allocation3 [shape = 's32[2]{0}', space=sflag, size = 0x8, scoped, tag = 'scoped memory for bottleneck_forward.6']
    #allocation4 [shape = 's32[2]{0}', space=sflag, size = 0x8, scoped, tag = 'scoped memory for bottleneck_forward.6']
    #allocation5 [shape = 'u8[512]{0}', space=vmem, size = 0x400, scoped, tag = 'input window, operand 1, single buffered']
    #allocation6 [shape = 's32[1]{0}', space=sflag, size = 0x4, scoped, tag = 'scoped memory for bottleneck_forward.6']
    #allocation7 [shape = 'u8[512]{0}', space=vmem, size = 0x400, scoped, tag = 'input window, operand 2, single buffered']
    #allocation8 [shape = 'u8[65536]{0}', space=vmem, size = 0x10000, scoped, tag = 'input window, operand 3, single buffered']
    #allocation9 [shape = 's32[1]{0}', space=sflag, size = 0x4, scoped, tag = 'scoped memory for bottleneck_forward.6']
    #allocation10 [shape = 'u8[262144]{0}', space=vmem, size = 0x40000, scoped, tag = 'output window, operand 0']
    #allocation11 [shape = 'u8[2048]{0}', space=vmem, size = 0x800, scoped, tag = 'output window, operand 1']
    #allocation12 [shape = 's32[2]{0}', space=sflag, size = 0x8, scoped, tag = 'scoped memory for bottleneck_forward.6']
    %11 = vsyncpa [#allocation3], 0
    %s12 = scalar_lea.sflag [#allocation3], 1
    %13 = vsyncpa %s12, 0
    %14 = vsyncpa [#allocation6], 0
    %15 = vsyncpa [#allocation9], 0
    %16 = vsyncpa [#allocation4], 0
    %s17 = scalar_lea.sflag [#allocation4], 1
    %18 = vsyncpa %s17, 0
    %19 = vsyncpa [#allocation12], 0
    %s20 = scalar_lea.sflag [#allocation12], 1
    %21 = vsyncpa %s20, 0
    loop: start=0, step=1, limit=4
    $region2: #{bottleneck_forward.6} parent=1 // loop_pre_header
      _
    $region3: #{bottleneck_forward.6} parent=1 // loop_header
      %s23 = sphi 0, %s27
      %p24 = scmp.ge.s32.totalorder %s23, 4
      %s33 = sphi 0, %s35
      %s36 = sphi 0, %s33
      %s37 = sphi 0, %s36
      %s53 = sphi 0, %s37
      %s57 = sphi 0, %s57
      %s59 = sphi 0, %s57
      %s60 = sphi 0, %s59
      %s74 = sphi 0, %s60
      %s78 = sphi 0, %s78
      %s80 = sphi 0, %s78
      %s81 = sphi 0, %s80
      %s95 = sphi 0, %s81
      %s99 = sphi 0, %s99
      %s101 = sphi 0, %s99
      %s102 = sphi 0, %s101
      %s116 = sphi 0, %s102
      %s122 = sphi 0, %s124
      %s125 = sphi 0, %s122
      %s126 = sphi 0, %s125
      %s142 = sphi 0, %s126
      %s148 = sphi 0, %s150
      %s151 = sphi 0, %s148
      %s152 = sphi 0, %s151
      %s168 = sphi 0, %s152
    $region4: #{bottleneck_forward.6} parent=1 // loop_header_branch
      %26 = sbr.rel (%p24) target = $region8
    $region5: #{bottleneck_forward.6} parent=1 // loop_body
      %s28 = ssub.s32 %s23, 1
      %s29 = ssub.s32 %s23, 2
      %s30 = sadd.s32 %s23, 1
      %s31 = ssub.s32 %s23, %s30
      %p32 = scmp.eq.s32.totalorder %s31, 0
      %s34 = sadd.s32 %s33, 1
      %s35 = scalar_select %p32, %s33, %s34
      %p38 = pneg %p32
      %p39 = scmp.eq.s32.totalorder %s23, 1
      %p40 = por %p38, %p39
      %p41 = scmp.ne.s32.totalorder %s33, %s36
      %p42 = scmp.eq.s32.totalorder %s23, 0
      %p43 = por %p41, %p42
      %p44 = scmp.ne.s32.totalorder %s33, %s36
      %p45 = scmp.eq.s32.totalorder %s28, 1
      %p46 = por %p44, %p45
      %p47 = scmp.ne.s32.totalorder %s36, %s37
      %p48 = scmp.eq.s32.totalorder %s28, 0
      %p49 = por %p47, %p48
      %p50 = scmp.ne.s32.totalorder %s36, %s37
      %p51 = scmp.eq.s32.totalorder %s29, 1
      %p52 = por %p50, %p51
      %p54 = scmp.ne.s32.totalorder %s37, %s53
      %p55 = scmp.eq.s32.totalorder %s29, 0
      %p56 = por %p54, %p55
      %s58 = sadd.s32 %s57, 1
      %p61 = scmp.eq.s32.totalorder %s23, 1
      %p62 = scmp.ne.s32.totalorder %s57, %s59
      %p63 = scmp.eq.s32.totalorder %s23, 0
      %p64 = por %p62, %p63
      %p65 = scmp.ne.s32.totalorder %s57, %s59
      %p66 = scmp.eq.s32.totalorder %s28, 1
      %p67 = por %p65, %p66
      %p68 = scmp.ne.s32.totalorder %s59, %s60
      %p69 = scmp.eq.s32.totalorder %s28, 0
      %p70 = por %p68, %p69
      %p71 = scmp.ne.s32.totalorder %s59, %s60
      %p72 = scmp.eq.s32.totalorder %s29, 1
      %p73 = por %p71, %p72
      %p75 = scmp.ne.s32.totalorder %s60, %s74
      %p76 = scmp.eq.s32.totalorder %s29, 0
      %p77 = por %p75, %p76
      %s79 = sadd.s32 %s78, 1
      %p82 = scmp.eq.s32.totalorder %s23, 1
      %p83 = scmp.ne.s32.totalorder %s78, %s80
      %p84 = scmp.eq.s32.totalorder %s23, 0
      %p85 = por %p83, %p84
      %p86 = scmp.ne.s32.totalorder %s78, %s80
      %p87 = scmp.eq.s32.totalorder %s28, 1
      %p88 = por %p86, %p87
      %p89 = scmp.ne.s32.totalorder %s80, %s81
      %p90 = scmp.eq.s32.totalorder %s28, 0
      %p91 = por %p89, %p90
      %p92 = scmp.ne.s32.totalorder %s80, %s81
      %p93 = scmp.eq.s32.totalorder %s29, 1
      %p94 = por %p92, %p93
      %p96 = scmp.ne.s32.totalorder %s81, %s95
      %p97 = scmp.eq.s32.totalorder %s29, 0
      %p98 = por %p96, %p97
      %s100 = sadd.s32 %s99, 1
      %p103 = scmp.eq.s32.totalorder %s23, 1
      %p104 = scmp.ne.s32.totalorder %s99, %s101
      %p105 = scmp.eq.s32.totalorder %s23, 0
      %p106 = por %p104, %p105
      %p107 = scmp.ne.s32.totalorder %s99, %s101
      %p108 = scmp.eq.s32.totalorder %s28, 1
      %p109 = por %p107, %p108
      %p110 = scmp.ne.s32.totalorder %s101, %s102
      %p111 = scmp.eq.s32.totalorder %s28, 0
      %p112 = por %p110, %p111
      %p113 = scmp.ne.s32.totalorder %s101, %s102
      %p114 = scmp.eq.s32.totalorder %s29, 1
      %p115 = por %p113, %p114
      %p117 = scmp.ne.s32.totalorder %s102, %s116
      %p118 = scmp.eq.s32.totalorder %s29, 0
      %p119 = por %p117, %p118
      %s120 = ssub.s32 %s23, %s30
      %p121 = scmp.eq.s32.totalorder %s120, 0
      %s123 = sadd.s32 %s122, 1
      %s124 = scalar_select %p121, %s122, %s123
      %p127 = pneg %p121
      %p128 = scmp.eq.s32.totalorder %s23, 1
      %p129 = por %p127, %p128
      %p130 = scmp.ne.s32.totalorder %s122, %s125
      %p131 = scmp.eq.s32.totalorder %s23, 0
      %p132 = por %p130, %p131
      %p133 = scmp.ne.s32.totalorder %s122, %s125
      %p134 = scmp.eq.s32.totalorder %s28, 1
      %p135 = por %p133, %p134
      %p136 = scmp.ne.s32.totalorder %s125, %s126
      %p137 = scmp.eq.s32.totalorder %s28, 0
      %p138 = por %p136, %p137
      %p139 = scmp.ne.s32.totalorder %s125, %s126
      %p140 = scmp.eq.s32.totalorder %s29, 1
      %p141 = por %p139, %p140
      %p143 = scmp.ne.s32.totalorder %s126, %s142
      %p144 = scmp.eq.s32.totalorder %s29, 0
      %p145 = por %p143, %p144
      %s146 = ssub.s32 %s23, %s30
      %p147 = scmp.eq.s32.totalorder %s146, 0
      %s149 = sadd.s32 %s148, 1
      %s150 = scalar_select %p147, %s148, %s149
      %p153 = pneg %p147
      %p154 = scmp.eq.s32.totalorder %s23, 1
      %p155 = por %p153, %p154
      %p156 = scmp.ne.s32.totalorder %s148, %s151
      %p157 = scmp.eq.s32.totalorder %s23, 0
      %p158 = por %p156, %p157
      %p159 = scmp.ne.s32.totalorder %s148, %s151
      %p160 = scmp.eq.s32.totalorder %s28, 1
      %p161 = por %p159, %p160
      %p162 = scmp.ne.s32.totalorder %s151, %s152
      %p163 = scmp.eq.s32.totalorder %s28, 0
      %p164 = por %p162, %p163
      %p165 = scmp.ne.s32.totalorder %s151, %s152
      %p166 = scmp.eq.s32.totalorder %s29, 1
      %p167 = por %p165, %p166
      %p169 = scmp.ne.s32.totalorder %s152, %s168
      %p170 = scmp.eq.s32.totalorder %s29, 0
      %p171 = por %p169, %p170
      %p172 = scmp.le.s32.totalorder 1, %s23
      %p173 = scmp.lt.s32.totalorder %s23, 3
      %p174 = pnand %p172, %p173
      %p175 = pneg %p174
      // Predicated region
      $region9: #{bottleneck_forward.6} parent=5 // pred_check
        _
      $region10: #{bottleneck_forward.6} parent=5 // pred_check_branch
        %177 = sbr.rel (%p174) target = $region12
      $region11: #{bottleneck_forward.6} parent=5 // pred_region
        %s178 = ssub.s32 %s23, 1
        // Predicated region
        $region13: #{bottleneck_forward.6} parent=11 // pred_check
          %p179 = pneg %p70
        $region14: #{bottleneck_forward.6} parent=11 // pred_check_branch
          %181 = sbr.rel (%p179) target = $region16
        $region15: #{bottleneck_forward.6} parent=11 // pred_region
          %s183 = ssub.s32 16, 16
          %184 = vsyncadd [#allocation6], %s183
          %s186 = sshll.u32 [#allocation5], 4
          %s187 = int_to_ptr.vmem [resolvable:$true] %s186
          %189 = dma.hbm_to_vmem [thread:$0]  %s1, 16, %s187, [#allocation6]
        $region16: #{bottleneck_forward.6} parent=11 // pred_fallthru
          _
        // Predicated region
        $region17: #{bottleneck_forward.6} parent=11 // pred_check
          %p190 = pneg %p91
        $region18: #{bottleneck_forward.6} parent=11 // pred_check_branch
          %192 = sbr.rel (%p190) target = $region20
        $region19: #{bottleneck_forward.6} parent=11 // pred_region
          %s194 = ssub.s32 16, 16
          %195 = vsyncadd [#allocation6], %s194
          %s197 = sshll.u32 [#allocation7], 4
          %s198 = int_to_ptr.vmem [resolvable:$true] %s197
          %200 = dma.hbm_to_vmem [thread:$0]  %s2, 16, %s198, [#allocation6]
        $region20: #{bottleneck_forward.6} parent=11 // pred_fallthru
          _
        // Predicated region
        $region21: #{bottleneck_forward.6} parent=11 // pred_check
          %p201 = pneg %p112
        $region22: #{bottleneck_forward.6} parent=11 // pred_check_branch
          %203 = sbr.rel (%p201) target = $region24
        $region23: #{bottleneck_forward.6} parent=11 // pred_region
          %s205 = ssub.s32 2048, 2048
          %206 = vsyncadd [#allocation9], %s205
          %s207 = sshll.u32 [#allocation8], 4
          %s208 = int_to_ptr.vmem [resolvable:$true] %s207
          %213 = dma.hbm_to_vmem [thread:$0]  %s3, 2048, %s208, [#allocation9], 128, 128, 8
        $region24: #{bottleneck_forward.6} parent=11 // pred_fallthru
          _
      $region12: #{bottleneck_forward.6} parent=5 // pred_fallthru
        _
      %p214 = scmp.lt.s32.totalorder %s23, 2
      // Predicated region
      $region25: #{bottleneck_forward.6} parent=5 // pred_check
        %p215 = pneg %p214
      $region26: #{bottleneck_forward.6} parent=5 // pred_check_branch
        %217 = sbr.rel (%p215) target = $region28
      $region27: #{bottleneck_forward.6} parent=5 // pred_region
        // Predicated region
        $region29: #{bottleneck_forward.6} parent=27 // pred_check
          %p218 = pneg %p43
        $region30: #{bottleneck_forward.6} parent=27 // pred_check_branch
          %220 = sbr.rel (%p218) target = $region32
        $region31: #{bottleneck_forward.6} parent=27 // pred_region
          %s221 = sand.u32 %s33, 1
          %s222 = scalar_lea.sflag [#allocation3], %s221
          %s223 = sand.u32 %s33, 1
          %s224 = smul.addr %s223, 256
          %s225 = scalar_lea.vmem [#allocation2], %s224
          %s227 = ssub.s32 4096, 4096
          %228 = vsyncadd %s222, %s227
          %s229 = smul.addr %s23, 32
          %s230 = smul.addr %s229, 128
          %s231 = scalar_lea.hbm %s0, %s230
          %s232 = sshll.u32 %s225, 4
          %s233 = int_to_ptr.vmem [resolvable:$true] %s232
          %238 = dma.hbm_to_vmem [thread:$0]  %s231, 4096, %s233, %s222, 128, 128, 8
        $region32: #{bottleneck_forward.6} parent=27 // pred_fallthru
          _
      $region28: #{bottleneck_forward.6} parent=5 // pred_fallthru
        _
      %p239 = scmp.le.s32.totalorder 1, %s23
      %p240 = scmp.lt.s32.totalorder %s23, 3
      %p241 = pnand %p239, %p240
      %p242 = pneg %p241
      // Predicated region
      $region33: #{bottleneck_forward.6} parent=5 // pred_check
        _
      $region34: #{bottleneck_forward.6} parent=5 // pred_check_branch
        %244 = sbr.rel (%p241) target = $region36
      $region35: #{bottleneck_forward.6} parent=5 // pred_region
        %s245 = ssub.s32 %s23, 1
        %s246 = sand.u32 %s36, 1
        %s247 = scalar_lea.sflag [#allocation3], %s246
        %s248 = sand.u32 %s36, 1
        %s249 = smul.addr %s248, 256
        %s250 = scalar_lea.vmem [#allocation2], %s249
        // Predicated region
        $region37: #{bottleneck_forward.6} parent=35 // pred_check
          %p251 = pneg %p49
        $region38: #{bottleneck_forward.6} parent=35 // pred_check_branch
          %253 = sbr.rel (%p251) target = $region40
        $region39: #{bottleneck_forward.6} parent=35 // pred_region
          %254 = dma.done %s247, 4096
        $region40: #{bottleneck_forward.6} parent=35 // pred_fallthru
          _
        // Predicated region
        $region41: #{bottleneck_forward.6} parent=35 // pred_check
          %p255 = pneg %p70
        $region42: #{bottleneck_forward.6} parent=35 // pred_check_branch
          %257 = sbr.rel (%p255) target = $region44
        $region43: #{bottleneck_forward.6} parent=35 // pred_region
          %258 = dma.done [#allocation6], 16
        $region44: #{bottleneck_forward.6} parent=35 // pred_fallthru
          _
        // Predicated region
        $region45: #{bottleneck_forward.6} parent=35 // pred_check
          %p259 = pneg %p91
        $region46: #{bottleneck_forward.6} parent=35 // pred_check_branch
          %261 = sbr.rel (%p259) target = $region48
        $region47: #{bottleneck_forward.6} parent=35 // pred_region
          %262 = dma.done [#allocation6], 16
        $region48: #{bottleneck_forward.6} parent=35 // pred_fallthru
          _
        // Predicated region
        $region49: #{bottleneck_forward.6} parent=35 // pred_check
          %p263 = pneg %p112
        $region50: #{bottleneck_forward.6} parent=35 // pred_check_branch
          %265 = sbr.rel (%p263) target = $region52
        $region51: #{bottleneck_forward.6} parent=35 // pred_region
          %266 = dma.done [#allocation9], 2048
        $region52: #{bottleneck_forward.6} parent=35 // pred_fallthru
          _
        %s267 = sand.u32 %s36, 1
        %s268 = scalar_lea.sflag [#allocation3], %s267
        %s269 = sand.u32 %s36, 1
        %s270 = smul.addr %s269, 256
        %s271 = scalar_lea.vmem [#allocation2], %s270
        %p272 = pneg %p49
        %p273 = pneg %p46
        %p274 = pneg %p70
        %p275 = pneg %p67
        %p276 = pneg %p91
        %p277 = pneg %p88
        %p278 = pneg %p112
        %p279 = pneg %p109
        %p280 = pneg %p138
        %p281 = pneg %p135
        %s282 = sand.u32 %s125, 1
        %s283 = scalar_lea.sflag [#allocation4], %s282
        %s284 = sand.u32 %s125, 1
        %s285 = smul.addr %s284, 256
        %s286 = scalar_lea.vmem [#allocation10], %s285
        %p287 = pneg %p164
        %p288 = pneg %p161
        %s289 = sand.u32 %s151, 1
        %s290 = scalar_lea.sflag [#allocation12], %s289
        %s291 = sand.u32 %s151, 1
        %s292 = smul.addr %s291, 2
        %s293 = scalar_lea.vmem [#allocation11], %s292
        %v294 = vld [vmem:[%s250] sm:$0xff]
        %v295 = vld [vmem:[%s250 + $0x8] sm:$0xff]
        %v296 = vld [vmem:[%s250 + $0x10] sm:$0xff]
        %v297 = vld [vmem:[%s250 + $0x18] sm:$0xff]
        %v298 = vld [vmem:[%s250 + $0x20] sm:$0xff]
        %v299 = vld [vmem:[%s250 + $0x28] sm:$0xff]
        %v300 = vld [vmem:[%s250 + $0x30] sm:$0xff]
        %v301 = vld [vmem:[%s250 + $0x38] sm:$0xff]
        %v302 = vld [vmem:[%s250 + $0x40] sm:$0xff]
        %v303 = vld [vmem:[%s250 + $0x48] sm:$0xff]
        %v304 = vld [vmem:[%s250 + $0x50] sm:$0xff]
        %v305 = vld [vmem:[%s250 + $0x58] sm:$0xff]
        %v306 = vld [vmem:[%s250 + $0x60] sm:$0xff]
        %v307 = vld [vmem:[%s250 + $0x68] sm:$0xff]
        %v308 = vld [vmem:[%s250 + $0x70] sm:$0xff]
        %v309 = vld [vmem:[%s250 + $0x78] sm:$0xff]
        %v310 = vld [vmem:[%s250 + $0x80] sm:$0xff]
        %v311 = vld [vmem:[%s250 + $0x88] sm:$0xff]
        %v312 = vld [vmem:[%s250 + $0x90] sm:$0xff]
        %v313 = vld [vmem:[%s250 + $0x98] sm:$0xff]
        %v314 = vld [vmem:[%s250 + $0xa0] sm:$0xff]
        %v315 = vld [vmem:[%s250 + $0xa8] sm:$0xff]
        %v316 = vld [vmem:[%s250 + $0xb0] sm:$0xff]
        %v317 = vld [vmem:[%s250 + $0xb8] sm:$0xff]
        %v318 = vld [vmem:[%s250 + $0xc0] sm:$0xff]
        %v319 = vld [vmem:[%s250 + $0xc8] sm:$0xff]
        %v320 = vld [vmem:[%s250 + $0xd0] sm:$0xff]
        %v321 = vld [vmem:[%s250 + $0xd8] sm:$0xff]
        %v322 = vld [vmem:[%s250 + $0xe0] sm:$0xff]
        %v323 = vld [vmem:[%s250 + $0xe8] sm:$0xff]
        %v324 = vld [vmem:[%s250 + $0xf0] sm:$0xff]
        %v325 = vld [vmem:[%s250 + $0xf8] sm:$0xff]
        %v326 = vld [vmem:[#allocation5] sm:$0x1]
        %v328 = vlaneseq
        %v329 = vshrl.u32 %v328, 7
        %v330 = vsub.s32 0, %v329
        %v331 = vrot.slane %v326, %v330
        %v333 = vmul.f32 %v294, %v331
        %v334 = vmul.f32 %v295, %v331
        %v335 = vmul.f32 %v296, %v331
        %v336 = vmul.f32 %v297, %v331
        %v337 = vmul.f32 %v298, %v331
        %v338 = vmul.f32 %v299, %v331
        %v339 = vmul.f32 %v300, %v331
        %v340 = vmul.f32 %v301, %v331
        %v341 = vmul.f32 %v302, %v331
        %v342 = vmul.f32 %v303, %v331
        %v343 = vmul.f32 %v304, %v331
        %v344 = vmul.f32 %v305, %v331
        %v345 = vmul.f32 %v306, %v331
        %v346 = vmul.f32 %v307, %v331
        %v347 = vmul.f32 %v308, %v331
        %v348 = vmul.f32 %v309, %v331
        %v349 = vmul.f32 %v310, %v331
        %v350 = vmul.f32 %v311, %v331
        %v351 = vmul.f32 %v312, %v331
        %v352 = vmul.f32 %v313, %v331
        %v353 = vmul.f32 %v314, %v331
        %v354 = vmul.f32 %v315, %v331
        %v355 = vmul.f32 %v316, %v331
        %v356 = vmul.f32 %v317, %v331
        %v357 = vmul.f32 %v318, %v331
        %v358 = vmul.f32 %v319, %v331
        %v359 = vmul.f32 %v320, %v331
        %v360 = vmul.f32 %v321, %v331
        %v361 = vmul.f32 %v322, %v331
        %v362 = vmul.f32 %v323, %v331
        %v363 = vmul.f32 %v324, %v331
        %v364 = vmul.f32 %v325, %v331
        %v365 = vld [vmem:[#allocation7] sm:$0x1]
        %v367 = vlaneseq
        %v368 = vshrl.u32 %v367, 7
        %v369 = vsub.s32 0, %v368
        %v370 = vrot.slane %v365, %v369
        %v372 = vadd.f32 %v333, %v370
        %v373 = vadd.f32 %v334, %v370
        %v374 = vadd.f32 %v335, %v370
        %v375 = vadd.f32 %v336, %v370
        %v376 = vadd.f32 %v337, %v370
        %v377 = vadd.f32 %v338, %v370
        %v378 = vadd.f32 %v339, %v370
        %v379 = vadd.f32 %v340, %v370
        %v380 = vadd.f32 %v341, %v370
        %v381 = vadd.f32 %v342, %v370
        %v382 = vadd.f32 %v343, %v370
        %v383 = vadd.f32 %v344, %v370
        %v384 = vadd.f32 %v345, %v370
        %v385 = vadd.f32 %v346, %v370
        %v386 = vadd.f32 %v347, %v370
        %v387 = vadd.f32 %v348, %v370
        %v388 = vadd.f32 %v349, %v370
        %v389 = vadd.f32 %v350, %v370
        %v390 = vadd.f32 %v351, %v370
        %v391 = vadd.f32 %v352, %v370
        %v392 = vadd.f32 %v353, %v370
        %v393 = vadd.f32 %v354, %v370
        %v394 = vadd.f32 %v355, %v370
        %v395 = vadd.f32 %v356, %v370
        %v396 = vadd.f32 %v357, %v370
        %v397 = vadd.f32 %v358, %v370
        %v398 = vadd.f32 %v359, %v370
        %v399 = vadd.f32 %v360, %v370
        %v400 = vadd.f32 %v361, %v370
        %v401 = vadd.f32 %v362, %v370
        %v402 = vadd.f32 %v363, %v370
        %v403 = vadd.f32 %v364, %v370
        %v404 = vmax.f32 %v372, 0.0
        %v405 = vmax.f32 %v373, 0.0
        %v406 = vmax.f32 %v374, 0.0
        %v407 = vmax.f32 %v375, 0.0
        %v408 = vmax.f32 %v376, 0.0
        %v409 = vmax.f32 %v377, 0.0
        %v410 = vmax.f32 %v378, 0.0
        %v411 = vmax.f32 %v379, 0.0
        %v412 = vmax.f32 %v380, 0.0
        %v413 = vmax.f32 %v381, 0.0
        %v414 = vmax.f32 %v382, 0.0
        %v415 = vmax.f32 %v383, 0.0
        %v416 = vmax.f32 %v384, 0.0
        %v417 = vmax.f32 %v385, 0.0
        %v418 = vmax.f32 %v386, 0.0
        %v419 = vmax.f32 %v387, 0.0
        %v420 = vmax.f32 %v388, 0.0
        %v421 = vmax.f32 %v389, 0.0
        %v422 = vmax.f32 %v390, 0.0
        %v423 = vmax.f32 %v391, 0.0
        %v424 = vmax.f32 %v392, 0.0
        %v425 = vmax.f32 %v393, 0.0
        %v426 = vmax.f32 %v394, 0.0
        %v427 = vmax.f32 %v395, 0.0
        %v428 = vmax.f32 %v396, 0.0
        %v429 = vmax.f32 %v397, 0.0
        %v430 = vmax.f32 %v398, 0.0
        %v431 = vmax.f32 %v399, 0.0
        %v432 = vmax.f32 %v400, 0.0
        %v433 = vmax.f32 %v401, 0.0
        %v434 = vmax.f32 %v402, 0.0
        %v435 = vmax.f32 %v403, 0.0
        %v436 = vld [vmem:[#allocation8] sm:$0xff]
        %v437 = vld [vmem:[#allocation8 + $0x8] sm:$0xff]
        %v438 = vld [vmem:[#allocation8 + $0x10] sm:$0xff]
        %v439 = vld [vmem:[#allocation8 + $0x18] sm:$0xff]
        %v440 = vld [vmem:[#allocation8 + $0x20] sm:$0xff]
        %v441 = vld [vmem:[#allocation8 + $0x28] sm:$0xff]
        %v442 = vld [vmem:[#allocation8 + $0x30] sm:$0xff]
        %v443 = vld [vmem:[#allocation8 + $0x38] sm:$0xff]
        %v444 = vld [vmem:[#allocation8 + $0x40] sm:$0xff]
        %v445 = vld [vmem:[#allocation8 + $0x48] sm:$0xff]
        %v446 = vld [vmem:[#allocation8 + $0x50] sm:$0xff]
        %v447 = vld [vmem:[#allocation8 + $0x58] sm:$0xff]
        %v448 = vld [vmem:[#allocation8 + $0x60] sm:$0xff]
        %v449 = vld [vmem:[#allocation8 + $0x68] sm:$0xff]
        %v450 = vld [vmem:[#allocation8 + $0x70] sm:$0xff]
        %v451 = vld [vmem:[#allocation8 + $0x78] sm:$0xff]
        %452 = vmatprep.subr.mxu0 0.0
        %453 = vmatpush1.msra.mxu0 %v436
        %454 = vmatprep.subr.mxu0 0.0
        %455 = vmatpush1.msra.mxu0 %v437
        %456 = vmatprep.subr.mxu0 0.0
        %457 = vmatpush1.msra.mxu0 %v438
        %458 = vmatprep.subr.mxu0 0.0
        %459 = vmatpush1.msra.mxu0 %v439
        %460 = vmatprep.subr.mxu0 0.0
        %461 = vmatpush1.msra.mxu0 %v440
        %462 = vmatprep.subr.mxu0 0.0
        %463 = vmatpush1.msra.mxu0 %v441
        %464 = vmatprep.subr.mxu0 0.0
        %465 = vmatpush1.msra.mxu0 %v442
        %466 = vmatprep.subr.mxu0 0.0
        %467 = vmatpush1.msra.mxu0 %v443
        %468 = vmatprep.subr.mxu0 0.0
        %469 = vmatpush1.msra.mxu0 %v444
        %470 = vmatprep.subr.mxu0 0.0
        %471 = vmatpush1.msra.mxu0 %v445
        %472 = vmatprep.subr.mxu0 0.0
        %473 = vmatpush1.msra.mxu0 %v446
        %474 = vmatprep.subr.mxu0 0.0
        %475 = vmatpush1.msra.mxu0 %v447
        %476 = vmatprep.subr.mxu0 0.0
        %477 = vmatpush1.msra.mxu0 %v448
        %478 = vmatprep.subr.mxu0 0.0
        %479 = vmatpush1.msra.mxu0 %v449
        %480 = vmatprep.subr.mxu0 0.0
        %481 = vmatpush1.msra.mxu0 %v450
        %482 = vmatprep.subr.mxu0 0.0
        %483 = vmatpush1.msra.mxu0 %v451
        %484 = vmatprep.subr.mxu0 0.0
        %485 = vmatpush1.msra.mxu0 0.0
        %486 = vmatprep.subr.mxu0 0.0
        %487 = vmatpush1.msra.mxu0 0.0
        %488 = vmatprep.subr.mxu0 0.0
        %489 = vmatpush1.msra.mxu0 0.0
        %490 = vmatprep.subr.mxu0 0.0
        %491 = vmatpush1.msra.mxu0 0.0
        %492 = vmatprep.subr.mxu0 0.0
        %493 = vmatpush1.msra.mxu0 0.0
        %494 = vmatprep.subr.mxu0 0.0
        %495 = vmatpush1.msra.mxu0 0.0
        %496 = vmatprep.subr.mxu0 0.0
        %497 = vmatpush1.msra.mxu0 0.0
        %498 = vmatprep.subr.mxu0 0.0
        %499 = vmatpush1.msra.mxu0 0.0
        %500 = vmatprep.subr.mxu0 0.0
        %501 = vmatpush1.msra.mxu0 0.0
        %502 = vmatprep.subr.mxu0 0.0
        %503 = vmatpush1.msra.mxu0 0.0
        %504 = vmatprep.subr.mxu0 0.0
        %505 = vmatpush1.msra.mxu0 0.0
        %506 = vmatprep.subr.mxu0 0.0
        %507 = vmatpush1.msra.mxu0 0.0
        %508 = vmatprep.subr.mxu0 0.0
        %509 = vmatpush1.msra.mxu0 0.0
        %510 = vmatprep.subr.mxu0 0.0
        %511 = vmatpush1.msra.mxu0 0.0
        %512 = vmatprep.subr.mxu0 0.0
        %513 = vmatpush1.msra.mxu0 0.0
        %514 = vmatprep.subr.mxu0 0.0
        %515 = vmatpush1.msra.mxu0 0.0
        %516 = vmatprep.mubr.f32.mxu0 0.0
        %517 = vmatmul.mubr.f32.gmra.mrb[0].mxu0 %v404
        %v518 = vpop.f32.mrb[0].mxu0
        %v519 = vadd.f32 0.0, %v518
        %v520 = vpop.f32.mrb[0].mxu0
        %521 = vmatprep.mubr.f32.mxu0 0.0
        %522 = vmatmul.mubr.f32.gmra.mrb[0].mxu0 %v405
        %v523 = vpop.f32.mrb[0].mxu0
        %v524 = vadd.f32 0.0, %v523
        %v525 = vpop.f32.mrb[0].mxu0
        %526 = vmatprep.mubr.f32.mxu0 0.0
        %527 = vmatmul.mubr.f32.gmra.mrb[0].mxu0 %v406
        %v528 = vpop.f32.mrb[0].mxu0
        %v529 = vadd.f32 0.0, %v528
        %v530 = vpop.f32.mrb[0].mxu0
        %531 = vmatprep.mubr.f32.mxu0 0.0
        %532 = vmatmul.mubr.f32.gmra.mrb[0].mxu0 %v407
        %v533 = vpop.f32.mrb[0].mxu0
        %v534 = vadd.f32 0.0, %v533
        %v535 = vpop.f32.mrb[0].mxu0
        %536 = vmatprep.mubr.f32.mxu0 0.0
        %537 = vmatmul.mubr.f32.gmra.mrb[0].mxu0 %v408
        %v538 = vpop.f32.mrb[0].mxu0
        %v539 = vadd.f32 0.0, %v538
        %v540 = vpop.f32.mrb[0].mxu0
        %541 = vmatprep.mubr.f32.mxu0 0.0
        %542 = vmatmul.mubr.f32.gmra.mrb[0].mxu0 %v409
        %v543 = vpop.f32.mrb[0].mxu0
        %v544 = vadd.f32 0.0, %v543
        %v545 = vpop.f32.mrb[0].mxu0
        %546 = vmatprep.mubr.f32.mxu0 0.0
        %547 = vmatmul.mubr.f32.gmra.mrb[0].mxu0 %v410
        %v548 = vpop.f32.mrb[0].mxu0
        %v549 = vadd.f32 0.0, %v548
        %v550 = vpop.f32.mrb[0].mxu0
        %551 = vmatprep.mubr.f32.mxu0 0.0
        %552 = vmatmul.mubr.f32.gmra.mrb[0].mxu0 %v411
        %v553 = vpop.f32.mrb[0].mxu0
        %v554 = vadd.f32 0.0, %v553
        %v555 = vpop.f32.mrb[0].mxu0
        %556 = vmatprep.mubr.f32.mxu0 0.0
        %557 = vmatmul.mubr.f32.gmra.mrb[0].mxu0 %v412
        %v558 = vpop.f32.mrb[0].mxu0
        %v559 = vadd.f32 0.0, %v558
        %v560 = vpop.f32.mrb[0].mxu0
        %561 = vmatprep.mubr.f32.mxu0 0.0
        %562 = vmatmul.mubr.f32.gmra.mrb[0].mxu0 %v413
        %v563 = vpop.f32.mrb[0].mxu0
        %v564 = vadd.f32 0.0, %v563
        %v565 = vpop.f32.mrb[0].mxu0
        %566 = vmatprep.mubr.f32.mxu0 0.0
        %567 = vmatmul.mubr.f32.gmra.mrb[0].mxu0 %v414
        %v568 = vpop.f32.mrb[0].mxu0
        %v569 = vadd.f32 0.0, %v568
        %v570 = vpop.f32.mrb[0].mxu0
        %571 = vmatprep.mubr.f32.mxu0 0.0
        %572 = vmatmul.mubr.f32.gmra.mrb[0].mxu0 %v415
        %v573 = vpop.f32.mrb[0].mxu0
        %v574 = vadd.f32 0.0, %v573
        %v575 = vpop.f32.mrb[0].mxu0
        %576 = vmatprep.mubr.f32.mxu0 0.0
        %577 = vmatmul.mubr.f32.gmra.mrb[0].mxu0 %v416
        %v578 = vpop.f32.mrb[0].mxu0
        %v579 = vadd.f32 0.0, %v578
        %v580 = vpop.f32.mrb[0].mxu0
        %581 = vmatprep.mubr.f32.mxu0 0.0
        %582 = vmatmul.mubr.f32.gmra.mrb[0].mxu0 %v417
        %v583 = vpop.f32.mrb[0].mxu0
        %v584 = vadd.f32 0.0, %v583
        %v585 = vpop.f32.mrb[0].mxu0
        %586 = vmatprep.mubr.f32.mxu0 0.0
        %587 = vmatmul.mubr.f32.gmra.mrb[0].mxu0 %v418
        %v588 = vpop.f32.mrb[0].mxu0
        %v589 = vadd.f32 0.0, %v588
        %v590 = vpop.f32.mrb[0].mxu0
        %591 = vmatprep.mubr.f32.mxu0 0.0
        %592 = vmatmul.mubr.f32.gmra.mrb[0].mxu0 %v419
        %v593 = vpop.f32.mrb[0].mxu0
        %v594 = vadd.f32 0.0, %v593
        %v595 = vpop.f32.mrb[0].mxu0
        %596 = vmatprep.mubr.f32.mxu0 0.0
        %597 = vmatmul.mubr.f32.gmra.mrb[0].mxu0 %v420
        %v598 = vpop.f32.mrb[0].mxu0
        %v599 = vadd.f32 0.0, %v598
        %v600 = vpop.f32.mrb[0].mxu0
        %601 = vmatprep.mubr.f32.mxu0 0.0
        %602 = vmatmul.mubr.f32.gmra.mrb[0].mxu0 %v421
        %v603 = vpop.f32.mrb[0].mxu0
        %v604 = vadd.f32 0.0, %v603
        %v605 = vpop.f32.mrb[0].mxu0
        %606 = vmatprep.mubr.f32.mxu0 0.0
        %607 = vmatmul.mubr.f32.gmra.mrb[0].mxu0 %v422
        %v608 = vpop.f32.mrb[0].mxu0
        %v609 = vadd.f32 0.0, %v608
        %v610 = vpop.f32.mrb[0].mxu0
        %611 = vmatprep.mubr.f32.mxu0 0.0
        %612 = vmatmul.mubr.f32.gmra.mrb[0].mxu0 %v423
        %v613 = vpop.f32.mrb[0].mxu0
        %v614 = vadd.f32 0.0, %v613
        %v615 = vpop.f32.mrb[0].mxu0
        %616 = vmatprep.mubr.f32.mxu0 0.0
        %617 = vmatmul.mubr.f32.gmra.mrb[0].mxu0 %v424
        %v618 = vpop.f32.mrb[0].mxu0
        %v619 = vadd.f32 0.0, %v618
        %v620 = vpop.f32.mrb[0].mxu0
        %621 = vmatprep.mubr.f32.mxu0 0.0
        %622 = vmatmul.mubr.f32.gmra.mrb[0].mxu0 %v425
        %v623 = vpop.f32.mrb[0].mxu0
        %v624 = vadd.f32 0.0, %v623
        %v625 = vpop.f32.mrb[0].mxu0
        %626 = vmatprep.mubr.f32.mxu0 0.0
        %627 = vmatmul.mubr.f32.gmra.mrb[0].mxu0 %v426
        %v628 = vpop.f32.mrb[0].mxu0
        %v629 = vadd.f32 0.0, %v628
        %v630 = vpop.f32.mrb[0].mxu0
        %631 = vmatprep.mubr.f32.mxu0 0.0
        %632 = vmatmul.mubr.f32.gmra.mrb[0].mxu0 %v427
        %v633 = vpop.f32.mrb[0].mxu0
        %v634 = vadd.f32 0.0, %v633
        %v635 = vpop.f32.mrb[0].mxu0
        %636 = vmatprep.mubr.f32.mxu0 0.0
        %637 = vmatmul.mubr.f32.gmra.mrb[0].mxu0 %v428
        %v638 = vpop.f32.mrb[0].mxu0
        %v639 = vadd.f32 0.0, %v638
        %v640 = vpop.f32.mrb[0].mxu0
        %641 = vmatprep.mubr.f32.mxu0 0.0
        %642 = vmatmul.mubr.f32.gmra.mrb[0].mxu0 %v429
        %v643 = vpop.f32.mrb[0].mxu0
        %v644 = vadd.f32 0.0, %v643
        %v645 = vpop.f32.mrb[0].mxu0
        %646 = vmatprep.mubr.f32.mxu0 0.0
        %647 = vmatmul.mubr.f32.gmra.mrb[0].mxu0 %v430
        %v648 = vpop.f32.mrb[0].mxu0
        %v649 = vadd.f32 0.0, %v648
        %v650 = vpop.f32.mrb[0].mxu0
        %651 = vmatprep.mubr.f32.mxu0 0.0
        %652 = vmatmul.mubr.f32.gmra.mrb[0].mxu0 %v431
        %v653 = vpop.f32.mrb[0].mxu0
        %v654 = vadd.f32 0.0, %v653
        %v655 = vpop.f32.mrb[0].mxu0
        %656 = vmatprep.mubr.f32.mxu0 0.0
        %657 = vmatmul.mubr.f32.gmra.mrb[0].mxu0 %v432
        %v658 = vpop.f32.mrb[0].mxu0
        %v659 = vadd.f32 0.0, %v658
        %v660 = vpop.f32.mrb[0].mxu0
        %661 = vmatprep.mubr.f32.mxu0 0.0
        %662 = vmatmul.mubr.f32.gmra.mrb[0].mxu0 %v433
        %v663 = vpop.f32.mrb[0].mxu0
        %v664 = vadd.f32 0.0, %v663
        %v665 = vpop.f32.mrb[0].mxu0
        %666 = vmatprep.mubr.f32.mxu0 0.0
        %667 = vmatmul.mubr.f32.gmra.mrb[0].mxu0 %v434
        %v668 = vpop.f32.mrb[0].mxu0
        %v669 = vadd.f32 0.0, %v668
        %v670 = vpop.f32.mrb[0].mxu0
        %671 = vmatprep.mubr.f32.mxu0 0.0
        %672 = vmatmul.mubr.f32.gmra.mrb[0].mxu0 %v435
        %v673 = vpop.f32.mrb[0].mxu0
        %v674 = vadd.f32 0.0, %v673
        %v675 = vpop.f32.mrb[0].mxu0
        %676 = vdwg.mxu0
        %677 = vst [vmem:[%s286] sm:$0xff] %v519
        %678 = vst [vmem:[%s286 + $0x8] sm:$0xff] %v524
        %679 = vst [vmem:[%s286 + $0x10] sm:$0xff] %v529
        %680 = vst [vmem:[%s286 + $0x18] sm:$0xff] %v534
        %681 = vst [vmem:[%s286 + $0x20] sm:$0xff] %v539
        %682 = vst [vmem:[%s286 + $0x28] sm:$0xff] %v544
        %683 = vst [vmem:[%s286 + $0x30] sm:$0xff] %v549
        %684 = vst [vmem:[%s286 + $0x38] sm:$0xff] %v554
        %685 = vst [vmem:[%s286 + $0x40] sm:$0xff] %v559
        %686 = vst [vmem:[%s286 + $0x48] sm:$0xff] %v564
        %687 = vst [vmem:[%s286 + $0x50] sm:$0xff] %v569
        %688 = vst [vmem:[%s286 + $0x58] sm:$0xff] %v574
        %689 = vst [vmem:[%s286 + $0x60] sm:$0xff] %v579
        %690 = vst [vmem:[%s286 + $0x68] sm:$0xff] %v584
        %691 = vst [vmem:[%s286 + $0x70] sm:$0xff] %v589
        %692 = vst [vmem:[%s286 + $0x78] sm:$0xff] %v594
        %693 = vst [vmem:[%s286 + $0x80] sm:$0xff] %v599
        %694 = vst [vmem:[%s286 + $0x88] sm:$0xff] %v604
        %695 = vst [vmem:[%s286 + $0x90] sm:$0xff] %v609
        %696 = vst [vmem:[%s286 + $0x98] sm:$0xff] %v614
        %697 = vst [vmem:[%s286 + $0xa0] sm:$0xff] %v619
        %698 = vst [vmem:[%s286 + $0xa8] sm:$0xff] %v624
        %699 = vst [vmem:[%s286 + $0xb0] sm:$0xff] %v629
        %700 = vst [vmem:[%s286 + $0xb8] sm:$0xff] %v634
        %701 = vst [vmem:[%s286 + $0xc0] sm:$0xff] %v639
        %702 = vst [vmem:[%s286 + $0xc8] sm:$0xff] %v644
        %703 = vst [vmem:[%s286 + $0xd0] sm:$0xff] %v649
        %704 = vst [vmem:[%s286 + $0xd8] sm:$0xff] %v654
        %705 = vst [vmem:[%s286 + $0xe0] sm:$0xff] %v659
        %706 = vst [vmem:[%s286 + $0xe8] sm:$0xff] %v664
        %707 = vst [vmem:[%s286 + $0xf0] sm:$0xff] %v669
        %708 = vst [vmem:[%s286 + $0xf8] sm:$0xff] %v674
        %v709 = vadd.f32 %v519, %v524
        %v710 = vadd.f32 %v709, %v529
        %v711 = vadd.f32 %v710, %v534
        %v712 = vadd.f32 %v711, %v539
        %v713 = vadd.f32 %v712, %v544
        %v714 = vadd.f32 %v713, %v549
        %v715 = vadd.f32 %v714, %v554
        %v716 = vadd.f32 %v715, %v559
        %v717 = vadd.f32 %v716, %v564
        %v718 = vadd.f32 %v717, %v569
        %v719 = vadd.f32 %v718, %v574
        %v720 = vadd.f32 %v719, %v579
        %v721 = vadd.f32 %v720, %v584
        %v722 = vadd.f32 %v721, %v589
        %v723 = vadd.f32 %v722, %v594
        %v724 = vadd.f32 %v723, %v599
        %v725 = vadd.f32 %v724, %v604
        %v726 = vadd.f32 %v725, %v609
        %v727 = vadd.f32 %v726, %v614
        %v728 = vadd.f32 %v727, %v619
        %v729 = vadd.f32 %v728, %v624
        %v730 = vadd.f32 %v729, %v629
        %v731 = vadd.f32 %v730, %v634
        %v732 = vadd.f32 %v731, %v639
        %v733 = vadd.f32 %v732, %v644
        %v734 = vadd.f32 %v733, %v649
        %v735 = vadd.f32 %v734, %v654
        %v736 = vadd.f32 %v735, %v659
        %v737 = vadd.f32 %v736, %v664
        %v738 = vadd.f32 %v737, %v669
        %v739 = vadd.f32 %v738, %v674
        %v740 = vrot.slane %v739, 4
        %v741 = vadd.f32 %v739, %v740
        %v742 = vrot.slane %v741, 2
        %v743 = vadd.f32 %v741, %v742
        %v744 = vrot.slane %v743, 1
        %v745 = vadd.f32 %v743, %v744
        %v746 = vmul.f32 %v519, %v519
        %v747 = vmul.f32 %v524, %v524
        %v748 = vmul.f32 %v529, %v529
        %v749 = vmul.f32 %v534, %v534
        %v750 = vmul.f32 %v539, %v539
        %v751 = vmul.f32 %v544, %v544
        %v752 = vmul.f32 %v549, %v549
        %v753 = vmul.f32 %v554, %v554
        %v754 = vmul.f32 %v559, %v559
        %v755 = vmul.f32 %v564, %v564
        %v756 = vmul.f32 %v569, %v569
        %v757 = vmul.f32 %v574, %v574
        %v758 = vmul.f32 %v579, %v579
        %v759 = vmul.f32 %v584, %v584
        %v760 = vmul.f32 %v589, %v589
        %v761 = vmul.f32 %v594, %v594
        %v762 = vmul.f32 %v599, %v599
        %v763 = vmul.f32 %v604, %v604
        %v764 = vmul.f32 %v609, %v609
        %v765 = vmul.f32 %v614, %v614
        %v766 = vmul.f32 %v619, %v619
        %v767 = vmul.f32 %v624, %v624
        %v768 = vmul.f32 %v629, %v629
        %v769 = vmul.f32 %v634, %v634
        %v770 = vmul.f32 %v639, %v639
        %v771 = vmul.f32 %v644, %v644
        %v772 = vmul.f32 %v649, %v649
        %v773 = vmul.f32 %v654, %v654
        %v774 = vmul.f32 %v659, %v659
        %v775 = vmul.f32 %v664, %v664
        %v776 = vmul.f32 %v669, %v669
        %v777 = vmul.f32 %v674, %v674
        %v778 = vadd.f32 %v746, %v747
        %v779 = vadd.f32 %v778, %v748
        %v780 = vadd.f32 %v779, %v749
        %v781 = vadd.f32 %v780, %v750
        %v782 = vadd.f32 %v781, %v751
        %v783 = vadd.f32 %v782, %v752
        %v784 = vadd.f32 %v783, %v753
        %v785 = vadd.f32 %v784, %v754
        %v786 = vadd.f32 %v785, %v755
        %v787 = vadd.f32 %v786, %v756
        %v788 = vadd.f32 %v787, %v757
        %v789 = vadd.f32 %v788, %v758
        %v790 = vadd.f32 %v789, %v759
        %v791 = vadd.f32 %v790, %v760
        %v792 = vadd.f32 %v791, %v761
        %v793 = vadd.f32 %v792, %v762
        %v794 = vadd.f32 %v793, %v763
        %v795 = vadd.f32 %v794, %v764
        %v796 = vadd.f32 %v795, %v765
        %v797 = vadd.f32 %v796, %v766
        %v798 = vadd.f32 %v797, %v767
        %v799 = vadd.f32 %v798, %v768
        %v800 = vadd.f32 %v799, %v769
        %v801 = vadd.f32 %v800, %v770
        %v802 = vadd.f32 %v801, %v771
        %v803 = vadd.f32 %v802, %v772
        %v804 = vadd.f32 %v803, %v773
        %v805 = vadd.f32 %v804, %v774
        %v806 = vadd.f32 %v805, %v775
        %v807 = vadd.f32 %v806, %v776
        %v808 = vadd.f32 %v807, %v777
        %v809 = vrot.slane %v808, 4
        %v810 = vadd.f32 %v808, %v809
        %v811 = vrot.slane %v810, 2
        %v812 = vadd.f32 %v810, %v811
        %v813 = vrot.slane %v812, 1
        %v814 = vadd.f32 %v812, %v813
        %vm815 = vcmask 1040384
        %v816 = vsel %vm815, %v745, %v814
        %817 = vst [vmem:[%s293] sm:$0x3] %v816
        %s818 = sand.u32 %s125, 1
        %s819 = scalar_lea.sflag [#allocation4], %s818
        %s820 = sand.u32 %s125, 1
        %s821 = smul.addr %s820, 256
        %s822 = scalar_lea.vmem [#allocation10], %s821
        %s823 = sand.u32 %s151, 1
        %s824 = scalar_lea.sflag [#allocation12], %s823
        %s825 = sand.u32 %s151, 1
        %s826 = smul.addr %s825, 2
        %s827 = scalar_lea.vmem [#allocation11], %s826
        // Predicated region
        $region53: #{bottleneck_forward.6} parent=35 // pred_check
          %p828 = pneg %p135
        $region54: #{bottleneck_forward.6} parent=35 // pred_check_branch
          %830 = sbr.rel (%p828) target = $region56
        $region55: #{bottleneck_forward.6} parent=35 // pred_region
          %s832 = ssub.s32 4096, 4096
          %833 = vsyncadd %s819, %s832
          %s834 = smul.addr %s28, 32
          %s835 = smul.addr %s834, 128
          %s836 = scalar_lea.hbm %s4, %s835
          %s837 = sshll.u32 %s822, 4
          %s838 = int_to_ptr.vmem [resolvable:$true] %s837
          %843 = dma.vmem_to_hbm [thread:$0]  %s838, 4096, %s836, %s819, 128, 128, 8
        $region56: #{bottleneck_forward.6} parent=35 // pred_fallthru
          _
        // Predicated region
        $region57: #{bottleneck_forward.6} parent=35 // pred_check
          %p844 = pneg %p161
        $region58: #{bottleneck_forward.6} parent=35 // pred_check_branch
          %846 = sbr.rel (%p844) target = $region60
        $region59: #{bottleneck_forward.6} parent=35 // pred_region
          %s848 = ssub.s32 32, 32
          %849 = vsyncadd %s824, %s848
          %s850 = smul.addr %s28, 32
          %s851 = scalar_lea.hbm %s5, %s850
          %s853 = sshll.u32 %s827, 4
          %s854 = int_to_ptr.vmem [resolvable:$true] %s853
          %856 = dma.vmem_to_hbm [thread:$0]  %s854, 32, %s851, %s824
        $region60: #{bottleneck_forward.6} parent=35 // pred_fallthru
          _
      $region36: #{bottleneck_forward.6} parent=5 // pred_fallthru
        _
      %p857 = scmp.le.s32.totalorder 2, %s23
      // Predicated region
      $region61: #{bottleneck_forward.6} parent=5 // pred_check
        %p858 = pneg %p857
      $region62: #{bottleneck_forward.6} parent=5 // pred_check_branch
        %860 = sbr.rel (%p858) target = $region64
      $region63: #{bottleneck_forward.6} parent=5 // pred_region
        %s861 = ssub.s32 %s23, 2
        // Predicated region
        $region65: #{bottleneck_forward.6} parent=63 // pred_check
          %p862 = pneg %p141
        $region66: #{bottleneck_forward.6} parent=63 // pred_check_branch
          %864 = sbr.rel (%p862) target = $region68
        $region67: #{bottleneck_forward.6} parent=63 // pred_region
          %s865 = sand.u32 %s126, 1
          %s866 = scalar_lea.sflag [#allocation4], %s865
          %s867 = sand.u32 %s126, 1
          %s868 = smul.addr %s867, 256
          %s869 = scalar_lea.vmem [#allocation10], %s868
          %870 = dma.done %s866, 4096
        $region68: #{bottleneck_forward.6} parent=63 // pred_fallthru
          _
        // Predicated region
        $region69: #{bottleneck_forward.6} parent=63 // pred_check
          %p871 = pneg %p167
        $region70: #{bottleneck_forward.6} parent=63 // pred_check_branch
          %873 = sbr.rel (%p871) target = $region72
        $region71: #{bottleneck_forward.6} parent=63 // pred_region
          %s874 = sand.u32 %s152, 1
          %s875 = scalar_lea.sflag [#allocation12], %s874
          %s876 = sand.u32 %s152, 1
          %s877 = smul.addr %s876, 2
          %s878 = scalar_lea.vmem [#allocation11], %s877
          %879 = dma.done %s875, 32
        $region72: #{bottleneck_forward.6} parent=63 // pred_fallthru
          _
      $region64: #{bottleneck_forward.6} parent=5 // pred_fallthru
        _
    $region6: #{bottleneck_forward.6} parent=1 // loop_footer
      %s27 = sadd.s32 1, %s23
    $region7: #{bottleneck_forward.6} parent=1 // loop_footer_branch
      %22 = sbr.rel target = $region3
    $region8: #{bottleneck_forward.6} parent=1 // loop_exit
      _
    %880 = vsyncpa [#allocation3], 1
    %s881 = scalar_lea.sflag [#allocation3], 1
    %882 = vsyncpa %s881, 1
    %883 = vsyncpa [#allocation6], 1
    %884 = vsyncpa [#allocation9], 1
    %885 = vsyncpa [#allocation4], 1
    %s886 = scalar_lea.sflag [#allocation4], 1
    %887 = vsyncpa %s886, 1
    %888 = vsyncpa [#allocation12], 1
    %s889 = scalar_lea.sflag [#allocation12], 1
    %890 = vsyncpa %s889, 1

// kernel: bottleneck_forward.7
$region0: #{bottleneck_forward.7}
  #allocation0 [shape = 'u32[]', space=smem, size = 0x4, offset = 0x4, fixed_abs, tag = 'smem constant byte address 0x4 - core index']
  #allocation1 [shape = 'u32[144,128]{1,0:T(1,128)}', space=vmem, size = 0x12000, scoped, tag = 'internal scratch']
  %s0 = inlined_call_operand.hbm [shape: f32[2,256,128], index: 0, kind: input, shape index: {}]
  %s1 = inlined_call_operand.hbm [shape: f32[2,256,128], index: 1, kind: input, shape index: {}]
  %s2 = inlined_call_operand.hbm [shape: f32[1,128], index: 2, kind: input, shape index: {}]
  %s3 = inlined_call_operand.hbm [shape: f32[1,128], index: 3, kind: input, shape index: {}]
  %s4 = inlined_call_operand.hbm [shape: f32[2,256,128], index: 4, kind: output, shape index: {}]
  %s5 = sld [smem:[#allocation0]]
  $region65: #{bottleneck_forward.7} parent=0
    _
  %s7 = ssub.s32 1, %s5
  %s8 = scalar_select 0, %s7, %s5
  $region1: #{bottleneck_forward.7} parent=0
    #allocation2 [shape = 'u8[262144]{0}', space=vmem, size = 0x40000, scoped, tag = 'input window, operand 0']
    #allocation3 [shape = 's32[2]{0}', space=sflag, size = 0x8, scoped, tag = 'scoped memory for bottleneck_forward.7']
    #allocation4 [shape = 's32[2]{0}', space=sflag, size = 0x8, scoped, tag = 'scoped memory for bottleneck_forward.7']
    #allocation5 [shape = 'u8[262144]{0}', space=vmem, size = 0x40000, scoped, tag = 'input window, operand 1']
    #allocation6 [shape = 's32[2]{0}', space=sflag, size = 0x8, scoped, tag = 'scoped memory for bottleneck_forward.7']
    #allocation7 [shape = 'u8[512]{0}', space=vmem, size = 0x400, scoped, tag = 'input window, operand 2, single buffered']
    #allocation8 [shape = 'u8[512]{0}', space=vmem, size = 0x400, scoped, tag = 'input window, operand 3, single buffered']
    #allocation9 [shape = 's32[1]{0}', space=sflag, size = 0x4, scoped, tag = 'scoped memory for bottleneck_forward.7']
    #allocation10 [shape = 'u8[262144]{0}', space=vmem, size = 0x40000, scoped, tag = 'output window, operand 0']
    %9 = vsyncpa [#allocation3], 0
    %s10 = scalar_lea.sflag [#allocation3], 1
    %11 = vsyncpa %s10, 0
    %12 = vsyncpa [#allocation6], 0
    %s13 = scalar_lea.sflag [#allocation6], 1
    %14 = vsyncpa %s13, 0
    %15 = vsyncpa [#allocation9], 0
    %16 = vsyncpa [#allocation4], 0
    %s17 = scalar_lea.sflag [#allocation4], 1
    %18 = vsyncpa %s17, 0
    loop: start=0, step=1, limit=4
    $region2: #{bottleneck_forward.7} parent=1 // loop_pre_header
      _
    $region3: #{bottleneck_forward.7} parent=1 // loop_header
      %s20 = sphi 0, %s24
      %p21 = scmp.ge.s32.totalorder %s20, 4
      %s30 = sphi 0, %s32
      %s33 = sphi 0, %s30
      %s34 = sphi 0, %s33
      %s50 = sphi 0, %s34
      %s56 = sphi 0, %s58
      %s59 = sphi 0, %s56
      %s60 = sphi 0, %s59
      %s76 = sphi 0, %s60
      %s80 = sphi 0, %s80
      %s82 = sphi 0, %s80
      %s83 = sphi 0, %s82
      %s97 = sphi 0, %s83
      %s101 = sphi 0, %s101
      %s103 = sphi 0, %s101
      %s104 = sphi 0, %s103
      %s118 = sphi 0, %s104
      %s124 = sphi 0, %s126
      %s127 = sphi 0, %s124
      %s128 = sphi 0, %s127
      %s144 = sphi 0, %s128
    $region4: #{bottleneck_forward.7} parent=1 // loop_header_branch
      %23 = sbr.rel (%p21) target = $region8
    $region5: #{bottleneck_forward.7} parent=1 // loop_body
      %s25 = ssub.s32 %s20, 1
      %s26 = ssub.s32 %s20, 2
      %s27 = sadd.s32 %s20, 1
      %s28 = ssub.s32 %s20, %s27
      %p29 = scmp.eq.s32.totalorder %s28, 0
      %s31 = sadd.s32 %s30, 1
      %s32 = scalar_select %p29, %s30, %s31
      %p35 = pneg %p29
      %p36 = scmp.eq.s32.totalorder %s20, 1
      %p37 = por %p35, %p36
      %p38 = scmp.ne.s32.totalorder %s30, %s33
      %p39 = scmp.eq.s32.totalorder %s20, 0
      %p40 = por %p38, %p39
      %p41 = scmp.ne.s32.totalorder %s30, %s33
      %p42 = scmp.eq.s32.totalorder %s25, 1
      %p43 = por %p41, %p42
      %p44 = scmp.ne.s32.totalorder %s33, %s34
      %p45 = scmp.eq.s32.totalorder %s25, 0
      %p46 = por %p44, %p45
      %p47 = scmp.ne.s32.totalorder %s33, %s34
      %p48 = scmp.eq.s32.totalorder %s26, 1
      %p49 = por %p47, %p48
      %p51 = scmp.ne.s32.totalorder %s34, %s50
      %p52 = scmp.eq.s32.totalorder %s26, 0
      %p53 = por %p51, %p52
      %s54 = ssub.s32 %s20, %s27
      %p55 = scmp.eq.s32.totalorder %s54, 0
      %s57 = sadd.s32 %s56, 1
      %s58 = scalar_select %p55, %s56, %s57
      %p61 = pneg %p55
      %p62 = scmp.eq.s32.totalorder %s20, 1
      %p63 = por %p61, %p62
      %p64 = scmp.ne.s32.totalorder %s56, %s59
      %p65 = scmp.eq.s32.totalorder %s20, 0
      %p66 = por %p64, %p65
      %p67 = scmp.ne.s32.totalorder %s56, %s59
      %p68 = scmp.eq.s32.totalorder %s25, 1
      %p69 = por %p67, %p68
      %p70 = scmp.ne.s32.totalorder %s59, %s60
      %p71 = scmp.eq.s32.totalorder %s25, 0
      %p72 = por %p70, %p71
      %p73 = scmp.ne.s32.totalorder %s59, %s60
      %p74 = scmp.eq.s32.totalorder %s26, 1
      %p75 = por %p73, %p74
      %p77 = scmp.ne.s32.totalorder %s60, %s76
      %p78 = scmp.eq.s32.totalorder %s26, 0
      %p79 = por %p77, %p78
      %s81 = sadd.s32 %s80, 1
      %p84 = scmp.eq.s32.totalorder %s20, 1
      %p85 = scmp.ne.s32.totalorder %s80, %s82
      %p86 = scmp.eq.s32.totalorder %s20, 0
      %p87 = por %p85, %p86
      %p88 = scmp.ne.s32.totalorder %s80, %s82
      %p89 = scmp.eq.s32.totalorder %s25, 1
      %p90 = por %p88, %p89
      %p91 = scmp.ne.s32.totalorder %s82, %s83
      %p92 = scmp.eq.s32.totalorder %s25, 0
      %p93 = por %p91, %p92
      %p94 = scmp.ne.s32.totalorder %s82, %s83
      %p95 = scmp.eq.s32.totalorder %s26, 1
      %p96 = por %p94, %p95
      %p98 = scmp.ne.s32.totalorder %s83, %s97
      %p99 = scmp.eq.s32.totalorder %s26, 0
      %p100 = por %p98, %p99
      %s102 = sadd.s32 %s101, 1
      %p105 = scmp.eq.s32.totalorder %s20, 1
      %p106 = scmp.ne.s32.totalorder %s101, %s103
      %p107 = scmp.eq.s32.totalorder %s20, 0
      %p108 = por %p106, %p107
      %p109 = scmp.ne.s32.totalorder %s101, %s103
      %p110 = scmp.eq.s32.totalorder %s25, 1
      %p111 = por %p109, %p110
      %p112 = scmp.ne.s32.totalorder %s103, %s104
      %p113 = scmp.eq.s32.totalorder %s25, 0
      %p114 = por %p112, %p113
      %p115 = scmp.ne.s32.totalorder %s103, %s104
      %p116 = scmp.eq.s32.totalorder %s26, 1
      %p117 = por %p115, %p116
      %p119 = scmp.ne.s32.totalorder %s104, %s118
      %p120 = scmp.eq.s32.totalorder %s26, 0
      %p121 = por %p119, %p120
      %s122 = ssub.s32 %s20, %s27
      %p123 = scmp.eq.s32.totalorder %s122, 0
      %s125 = sadd.s32 %s124, 1
      %s126 = scalar_select %p123, %s124, %s125
      %p129 = pneg %p123
      %p130 = scmp.eq.s32.totalorder %s20, 1
      %p131 = por %p129, %p130
      %p132 = scmp.ne.s32.totalorder %s124, %s127
      %p133 = scmp.eq.s32.totalorder %s20, 0
      %p134 = por %p132, %p133
      %p135 = scmp.ne.s32.totalorder %s124, %s127
      %p136 = scmp.eq.s32.totalorder %s25, 1
      %p137 = por %p135, %p136
      %p138 = scmp.ne.s32.totalorder %s127, %s128
      %p139 = scmp.eq.s32.totalorder %s25, 0
      %p140 = por %p138, %p139
      %p141 = scmp.ne.s32.totalorder %s127, %s128
      %p142 = scmp.eq.s32.totalorder %s26, 1
      %p143 = por %p141, %p142
      %p145 = scmp.ne.s32.totalorder %s128, %s144
      %p146 = scmp.eq.s32.totalorder %s26, 0
      %p147 = por %p145, %p146
      %p148 = scmp.le.s32.totalorder 1, %s20
      %p149 = scmp.lt.s32.totalorder %s20, 3
      %p150 = pnand %p148, %p149
      %p151 = pneg %p150
      // Predicated region
      $region9: #{bottleneck_forward.7} parent=5 // pred_check
        _
      $region10: #{bottleneck_forward.7} parent=5 // pred_check_branch
        %153 = sbr.rel (%p150) target = $region12
      $region11: #{bottleneck_forward.7} parent=5 // pred_region
        %s154 = ssub.s32 %s20, 1
        // Predicated region
        $region13: #{bottleneck_forward.7} parent=11 // pred_check
          %p155 = pneg %p93
        $region14: #{bottleneck_forward.7} parent=11 // pred_check_branch
          %157 = sbr.rel (%p155) target = $region16
        $region15: #{bottleneck_forward.7} parent=11 // pred_region
          %s159 = ssub.s32 16, 16
          %160 = vsyncadd [#allocation6], %s159
          %s162 = sshll.u32 [#allocation7], 4
          %s163 = int_to_ptr.vmem [resolvable:$true] %s162
          %165 = dma.hbm_to_vmem [thread:$0]  %s2, 16, %s163, [#allocation6]
        $region16: #{bottleneck_forward.7} parent=11 // pred_fallthru
          _
        // Predicated region
        $region17: #{bottleneck_forward.7} parent=11 // pred_check
          %p166 = pneg %p114
        $region18: #{bottleneck_forward.7} parent=11 // pred_check_branch
          %168 = sbr.rel (%p166) target = $region20
        $region19: #{bottleneck_forward.7} parent=11 // pred_region
          %s170 = ssub.s32 16, 16
          %171 = vsyncadd [#allocation9], %s170
          %s173 = sshll.u32 [#allocation8], 4
          %s174 = int_to_ptr.vmem [resolvable:$true] %s173
          %176 = dma.hbm_to_vmem [thread:$0]  %s3, 16, %s174, [#allocation9]
        $region20: #{bottleneck_forward.7} parent=11 // pred_fallthru
          _
      $region12: #{bottleneck_forward.7} parent=5 // pred_fallthru
        _
      %p177 = scmp.lt.s32.totalorder %s20, 2
      // Predicated region
      $region21: #{bottleneck_forward.7} parent=5 // pred_check
        %p178 = pneg %p177
      $region22: #{bottleneck_forward.7} parent=5 // pred_check_branch
        %180 = sbr.rel (%p178) target = $region24
      $region23: #{bottleneck_forward.7} parent=5 // pred_region
        // Predicated region
        $region25: #{bottleneck_forward.7} parent=23 // pred_check
          %p181 = pneg %p40
        $region26: #{bottleneck_forward.7} parent=23 // pred_check_branch
          %183 = sbr.rel (%p181) target = $region28
        $region27: #{bottleneck_forward.7} parent=23 // pred_region
          %s184 = sand.u32 %s30, 1
          %s185 = scalar_lea.sflag [#allocation3], %s184
          %s186 = sand.u32 %s30, 1
          %s187 = smul.addr %s186, 256
          %s188 = scalar_lea.vmem [#allocation2], %s187
          %s190 = ssub.s32 4096, 4096
          %191 = vsyncadd %s185, %s190
          %s192 = smul.addr %s20, 32
          %s193 = smul.addr %s192, 128
          %s194 = scalar_lea.hbm %s0, %s193
          %s195 = sshll.u32 %s188, 4
          %s196 = int_to_ptr.vmem [resolvable:$true] %s195
          %201 = dma.hbm_to_vmem [thread:$0]  %s194, 4096, %s196, %s185, 128, 128, 8
        $region28: #{bottleneck_forward.7} parent=23 // pred_fallthru
          _
        // Predicated region
        $region29: #{bottleneck_forward.7} parent=23 // pred_check
          %p202 = pneg %p66
        $region30: #{bottleneck_forward.7} parent=23 // pred_check_branch
          %204 = sbr.rel (%p202) target = $region32
        $region31: #{bottleneck_forward.7} parent=23 // pred_region
          %s205 = sand.u32 %s20, 1
          %s206 = scalar_lea.sflag [#allocation6], %s205
          %s207 = sand.u32 %s56, 1
          %s208 = smul.addr %s207, 256
          %s209 = scalar_lea.vmem [#allocation5], %s208
          %s211 = ssub.s32 4096, 4096
          %212 = vsyncadd %s206, %s211
          %s213 = smul.addr %s20, 32
          %s214 = smul.addr %s213, 128
          %s215 = scalar_lea.hbm %s1, %s214
          %s216 = sshll.u32 %s209, 4
          %s217 = int_to_ptr.vmem [resolvable:$true] %s216
          %222 = dma.hbm_to_vmem [thread:$0]  %s215, 4096, %s217, %s206, 128, 128, 8
        $region32: #{bottleneck_forward.7} parent=23 // pred_fallthru
          _
      $region24: #{bottleneck_forward.7} parent=5 // pred_fallthru
        _
      %p223 = scmp.le.s32.totalorder 1, %s20
      %p224 = scmp.lt.s32.totalorder %s20, 3
      %p225 = pnand %p223, %p224
      %p226 = pneg %p225
      // Predicated region
      $region33: #{bottleneck_forward.7} parent=5 // pred_check
        _
      $region34: #{bottleneck_forward.7} parent=5 // pred_check_branch
        %228 = sbr.rel (%p225) target = $region36
      $region35: #{bottleneck_forward.7} parent=5 // pred_region
        %s229 = ssub.s32 %s20, 1
        %s230 = sand.u32 %s33, 1
        %s231 = scalar_lea.sflag [#allocation3], %s230
        %s232 = sand.u32 %s33, 1
        %s233 = smul.addr %s232, 256
        %s234 = scalar_lea.vmem [#allocation2], %s233
        // Predicated region
        $region37: #{bottleneck_forward.7} parent=35 // pred_check
          %p235 = pneg %p46
        $region38: #{bottleneck_forward.7} parent=35 // pred_check_branch
          %237 = sbr.rel (%p235) target = $region40
        $region39: #{bottleneck_forward.7} parent=35 // pred_region
          %238 = dma.done %s231, 4096
        $region40: #{bottleneck_forward.7} parent=35 // pred_fallthru
          _
        %s239 = sand.u32 %s25, 1
        %s240 = scalar_lea.sflag [#allocation6], %s239
        %s241 = sand.u32 %s59, 1
        %s242 = smul.addr %s241, 256
        %s243 = scalar_lea.vmem [#allocation5], %s242
        // Predicated region
        $region41: #{bottleneck_forward.7} parent=35 // pred_check
          %p244 = pneg %p72
        $region42: #{bottleneck_forward.7} parent=35 // pred_check_branch
          %246 = sbr.rel (%p244) target = $region44
        $region43: #{bottleneck_forward.7} parent=35 // pred_region
          %247 = dma.done %s240, 4096
        $region44: #{bottleneck_forward.7} parent=35 // pred_fallthru
          _
        // Predicated region
        $region45: #{bottleneck_forward.7} parent=35 // pred_check
          %p248 = pneg %p93
        $region46: #{bottleneck_forward.7} parent=35 // pred_check_branch
          %250 = sbr.rel (%p248) target = $region48
        $region47: #{bottleneck_forward.7} parent=35 // pred_region
          %251 = dma.done [#allocation6], 16
        $region48: #{bottleneck_forward.7} parent=35 // pred_fallthru
          _
        // Predicated region
        $region49: #{bottleneck_forward.7} parent=35 // pred_check
          %p252 = pneg %p114
        $region50: #{bottleneck_forward.7} parent=35 // pred_check_branch
          %254 = sbr.rel (%p252) target = $region52
        $region51: #{bottleneck_forward.7} parent=35 // pred_region
          %255 = dma.done [#allocation9], 16
        $region52: #{bottleneck_forward.7} parent=35 // pred_fallthru
          _
        %s256 = sand.u32 %s33, 1
        %s257 = scalar_lea.sflag [#allocation3], %s256
        %s258 = sand.u32 %s33, 1
        %s259 = smul.addr %s258, 256
        %s260 = scalar_lea.vmem [#allocation2], %s259
        %p261 = pneg %p46
        %p262 = pneg %p43
        %s263 = sand.u32 %s25, 1
        %s264 = scalar_lea.sflag [#allocation6], %s263
        %s265 = sand.u32 %s59, 1
        %s266 = smul.addr %s265, 256
        %s267 = scalar_lea.vmem [#allocation5], %s266
        %p268 = pneg %p72
        %p269 = pneg %p69
        %p270 = pneg %p93
        %p271 = pneg %p90
        %p272 = pneg %p114
        %p273 = pneg %p111
        %p274 = pneg %p140
        %p275 = pneg %p137
        %s276 = sand.u32 %s127, 1
        %s277 = scalar_lea.sflag [#allocation4], %s276
        %s278 = sand.u32 %s127, 1
        %s279 = smul.addr %s278, 256
        %s280 = scalar_lea.vmem [#allocation10], %s279
        %v281 = vld [vmem:[%s234] sm:$0xff]
        %v282 = vld [vmem:[%s234 + $0x8] sm:$0xff]
        %v283 = vld [vmem:[%s234 + $0x10] sm:$0xff]
        %v284 = vld [vmem:[%s234 + $0x18] sm:$0xff]
        %v285 = vld [vmem:[%s234 + $0x20] sm:$0xff]
        %v286 = vld [vmem:[%s234 + $0x28] sm:$0xff]
        %v287 = vld [vmem:[%s234 + $0x30] sm:$0xff]
        %v288 = vld [vmem:[%s234 + $0x38] sm:$0xff]
        %v289 = vld [vmem:[%s234 + $0x40] sm:$0xff]
        %v290 = vld [vmem:[%s234 + $0x48] sm:$0xff]
        %v291 = vld [vmem:[%s234 + $0x50] sm:$0xff]
        %v292 = vld [vmem:[%s234 + $0x58] sm:$0xff]
        %v293 = vld [vmem:[%s234 + $0x60] sm:$0xff]
        %v294 = vld [vmem:[%s234 + $0x68] sm:$0xff]
        %v295 = vld [vmem:[%s234 + $0x70] sm:$0xff]
        %v296 = vld [vmem:[%s234 + $0x78] sm:$0xff]
        %v297 = vld [vmem:[%s234 + $0x80] sm:$0xff]
        %v298 = vld [vmem:[%s234 + $0x88] sm:$0xff]
        %v299 = vld [vmem:[%s234 + $0x90] sm:$0xff]
        %v300 = vld [vmem:[%s234 + $0x98] sm:$0xff]
        %v301 = vld [vmem:[%s234 + $0xa0] sm:$0xff]
        %v302 = vld [vmem:[%s234 + $0xa8] sm:$0xff]
        %v303 = vld [vmem:[%s234 + $0xb0] sm:$0xff]
        %v304 = vld [vmem:[%s234 + $0xb8] sm:$0xff]
        %v305 = vld [vmem:[%s234 + $0xc0] sm:$0xff]
        %v306 = vld [vmem:[%s234 + $0xc8] sm:$0xff]
        %v307 = vld [vmem:[%s234 + $0xd0] sm:$0xff]
        %v308 = vld [vmem:[%s234 + $0xd8] sm:$0xff]
        %v309 = vld [vmem:[%s234 + $0xe0] sm:$0xff]
        %v310 = vld [vmem:[%s234 + $0xe8] sm:$0xff]
        %v311 = vld [vmem:[%s234 + $0xf0] sm:$0xff]
        %v312 = vld [vmem:[%s234 + $0xf8] sm:$0xff]
        %v313 = vld [vmem:[#allocation7] sm:$0x1]
        %v315 = vlaneseq
        %v316 = vshrl.u32 %v315, 7
        %v317 = vsub.s32 0, %v316
        %v318 = vrot.slane %v313, %v317
        %v320 = vmul.f32 %v281, %v318
        %v321 = vmul.f32 %v282, %v318
        %v322 = vmul.f32 %v283, %v318
        %v323 = vmul.f32 %v284, %v318
        %v324 = vmul.f32 %v285, %v318
        %v325 = vmul.f32 %v286, %v318
        %v326 = vmul.f32 %v287, %v318
        %v327 = vmul.f32 %v288, %v318
        %v328 = vmul.f32 %v289, %v318
        %v329 = vmul.f32 %v290, %v318
        %v330 = vmul.f32 %v291, %v318
        %v331 = vmul.f32 %v292, %v318
        %v332 = vmul.f32 %v293, %v318
        %v333 = vmul.f32 %v294, %v318
        %v334 = vmul.f32 %v295, %v318
        %v335 = vmul.f32 %v296, %v318
        %v336 = vmul.f32 %v297, %v318
        %v337 = vmul.f32 %v298, %v318
        %v338 = vmul.f32 %v299, %v318
        %v339 = vmul.f32 %v300, %v318
        %v340 = vmul.f32 %v301, %v318
        %v341 = vmul.f32 %v302, %v318
        %v342 = vmul.f32 %v303, %v318
        %v343 = vmul.f32 %v304, %v318
        %v344 = vmul.f32 %v305, %v318
        %v345 = vmul.f32 %v306, %v318
        %v346 = vmul.f32 %v307, %v318
        %v347 = vmul.f32 %v308, %v318
        %v348 = vmul.f32 %v309, %v318
        %v349 = vmul.f32 %v310, %v318
        %v350 = vmul.f32 %v311, %v318
        %v351 = vmul.f32 %v312, %v318
        %v352 = vld [vmem:[#allocation8] sm:$0x1]
        %v354 = vlaneseq
        %v355 = vshrl.u32 %v354, 7
        %v356 = vsub.s32 0, %v355
        %v357 = vrot.slane %v352, %v356
        %v359 = vadd.f32 %v320, %v357
        %v360 = vadd.f32 %v321, %v357
        %v361 = vadd.f32 %v322, %v357
        %v362 = vadd.f32 %v323, %v357
        %v363 = vadd.f32 %v324, %v357
        %v364 = vadd.f32 %v325, %v357
        %v365 = vadd.f32 %v326, %v357
        %v366 = vadd.f32 %v327, %v357
        %v367 = vadd.f32 %v328, %v357
        %v368 = vadd.f32 %v329, %v357
        %v369 = vadd.f32 %v330, %v357
        %v370 = vadd.f32 %v331, %v357
        %v371 = vadd.f32 %v332, %v357
        %v372 = vadd.f32 %v333, %v357
        %v373 = vadd.f32 %v334, %v357
        %v374 = vadd.f32 %v335, %v357
        %v375 = vadd.f32 %v336, %v357
        %v376 = vadd.f32 %v337, %v357
        %v377 = vadd.f32 %v338, %v357
        %v378 = vadd.f32 %v339, %v357
        %v379 = vadd.f32 %v340, %v357
        %v380 = vadd.f32 %v341, %v357
        %v381 = vadd.f32 %v342, %v357
        %v382 = vadd.f32 %v343, %v357
        %v383 = vadd.f32 %v344, %v357
        %v384 = vadd.f32 %v345, %v357
        %v385 = vadd.f32 %v346, %v357
        %v386 = vadd.f32 %v347, %v357
        %v387 = vadd.f32 %v348, %v357
        %v388 = vadd.f32 %v349, %v357
        %v389 = vadd.f32 %v350, %v357
        %v390 = vadd.f32 %v351, %v357
        %v391 = vld [vmem:[%s243] sm:$0xff]
        %v392 = vld [vmem:[%s243 + $0x8] sm:$0xff]
        %v393 = vld [vmem:[%s243 + $0x10] sm:$0xff]
        %v394 = vld [vmem:[%s243 + $0x18] sm:$0xff]
        %v395 = vld [vmem:[%s243 + $0x20] sm:$0xff]
        %v396 = vld [vmem:[%s243 + $0x28] sm:$0xff]
        %v397 = vld [vmem:[%s243 + $0x30] sm:$0xff]
        %v398 = vld [vmem:[%s243 + $0x38] sm:$0xff]
        %v399 = vld [vmem:[%s243 + $0x40] sm:$0xff]
        %v400 = vld [vmem:[%s243 + $0x48] sm:$0xff]
        %v401 = vld [vmem:[%s243 + $0x50] sm:$0xff]
        %v402 = vld [vmem:[%s243 + $0x58] sm:$0xff]
        %v403 = vld [vmem:[%s243 + $0x60] sm:$0xff]
        %v404 = vld [vmem:[%s243 + $0x68] sm:$0xff]
        %v405 = vld [vmem:[%s243 + $0x70] sm:$0xff]
        %v406 = vld [vmem:[%s243 + $0x78] sm:$0xff]
        %v407 = vld [vmem:[%s243 + $0x80] sm:$0xff]
        %v408 = vld [vmem:[%s243 + $0x88] sm:$0xff]
        %v409 = vld [vmem:[%s243 + $0x90] sm:$0xff]
        %v410 = vld [vmem:[%s243 + $0x98] sm:$0xff]
        %v411 = vld [vmem:[%s243 + $0xa0] sm:$0xff]
        %v412 = vld [vmem:[%s243 + $0xa8] sm:$0xff]
        %v413 = vld [vmem:[%s243 + $0xb0] sm:$0xff]
        %v414 = vld [vmem:[%s243 + $0xb8] sm:$0xff]
        %v415 = vld [vmem:[%s243 + $0xc0] sm:$0xff]
        %v416 = vld [vmem:[%s243 + $0xc8] sm:$0xff]
        %v417 = vld [vmem:[%s243 + $0xd0] sm:$0xff]
        %v418 = vld [vmem:[%s243 + $0xd8] sm:$0xff]
        %v419 = vld [vmem:[%s243 + $0xe0] sm:$0xff]
        %v420 = vld [vmem:[%s243 + $0xe8] sm:$0xff]
        %v421 = vld [vmem:[%s243 + $0xf0] sm:$0xff]
        %v422 = vld [vmem:[%s243 + $0xf8] sm:$0xff]
        %v423 = vadd.f32 %v359, %v391
        %v424 = vadd.f32 %v360, %v392
        %v425 = vadd.f32 %v361, %v393
        %v426 = vadd.f32 %v362, %v394
        %v427 = vadd.f32 %v363, %v395
        %v428 = vadd.f32 %v364, %v396
        %v429 = vadd.f32 %v365, %v397
        %v430 = vadd.f32 %v366, %v398
        %v431 = vadd.f32 %v367, %v399
        %v432 = vadd.f32 %v368, %v400
        %v433 = vadd.f32 %v369, %v401
        %v434 = vadd.f32 %v370, %v402
        %v435 = vadd.f32 %v371, %v403
        %v436 = vadd.f32 %v372, %v404
        %v437 = vadd.f32 %v373, %v405
        %v438 = vadd.f32 %v374, %v406
        %v439 = vadd.f32 %v375, %v407
        %v440 = vadd.f32 %v376, %v408
        %v441 = vadd.f32 %v377, %v409
        %v442 = vadd.f32 %v378, %v410
        %v443 = vadd.f32 %v379, %v411
        %v444 = vadd.f32 %v380, %v412
        %v445 = vadd.f32 %v381, %v413
        %v446 = vadd.f32 %v382, %v414
        %v447 = vadd.f32 %v383, %v415
        %v448 = vadd.f32 %v384, %v416
        %v449 = vadd.f32 %v385, %v417
        %v450 = vadd.f32 %v386, %v418
        %v451 = vadd.f32 %v387, %v419
        %v452 = vadd.f32 %v388, %v420
        %v453 = vadd.f32 %v389, %v421
        %v454 = vadd.f32 %v390, %v422
        %v455 = vmax.f32 %v423, 0.0
        %v456 = vmax.f32 %v424, 0.0
        %v457 = vmax.f32 %v425, 0.0
        %v458 = vmax.f32 %v426, 0.0
        %v459 = vmax.f32 %v427, 0.0
        %v460 = vmax.f32 %v428, 0.0
        %v461 = vmax.f32 %v429, 0.0
        %v462 = vmax.f32 %v430, 0.0
        %v463 = vmax.f32 %v431, 0.0
        %v464 = vmax.f32 %v432, 0.0
        %v465 = vmax.f32 %v433, 0.0
        %v466 = vmax.f32 %v434, 0.0
        %v467 = vmax.f32 %v435, 0.0
        %v468 = vmax.f32 %v436, 0.0
        %v469 = vmax.f32 %v437, 0.0
        %v470 = vmax.f32 %v438, 0.0
        %v471 = vmax.f32 %v439, 0.0
        %v472 = vmax.f32 %v440, 0.0
        %v473 = vmax.f32 %v441, 0.0
        %v474 = vmax.f32 %v442, 0.0
        %v475 = vmax.f32 %v443, 0.0
        %v476 = vmax.f32 %v444, 0.0
        %v477 = vmax.f32 %v445, 0.0
        %v478 = vmax.f32 %v446, 0.0
        %v479 = vmax.f32 %v447, 0.0
        %v480 = vmax.f32 %v448, 0.0
        %v481 = vmax.f32 %v449, 0.0
        %v482 = vmax.f32 %v450, 0.0
        %v483 = vmax.f32 %v451, 0.0
        %v484 = vmax.f32 %v452, 0.0
        %v485 = vmax.f32 %v453, 0.0
        %v486 = vmax.f32 %v454, 0.0
        %487 = vst [vmem:[%s280] sm:$0xff] %v455
        %488 = vst [vmem:[%s280 + $0x8] sm:$0xff] %v456
        %489 = vst [vmem:[%s280 + $0x10] sm:$0xff] %v457
        %490 = vst [vmem:[%s280 + $0x18] sm:$0xff] %v458
        %491 = vst [vmem:[%s280 + $0x20] sm:$0xff] %v459
        %492 = vst [vmem:[%s280 + $0x28] sm:$0xff] %v460
        %493 = vst [vmem:[%s280 + $0x30] sm:$0xff] %v461
        %494 = vst [vmem:[%s280 + $0x38] sm:$0xff] %v462
        %495 = vst [vmem:[%s280 + $0x40] sm:$0xff] %v463
        %496 = vst [vmem:[%s280 + $0x48] sm:$0xff] %v464
        %497 = vst [vmem:[%s280 + $0x50] sm:$0xff] %v465
        %498 = vst [vmem:[%s280 + $0x58] sm:$0xff] %v466
        %499 = vst [vmem:[%s280 + $0x60] sm:$0xff] %v467
        %500 = vst [vmem:[%s280 + $0x68] sm:$0xff] %v468
        %501 = vst [vmem:[%s280 + $0x70] sm:$0xff] %v469
        %502 = vst [vmem:[%s280 + $0x78] sm:$0xff] %v470
        %503 = vst [vmem:[%s280 + $0x80] sm:$0xff] %v471
        %504 = vst [vmem:[%s280 + $0x88] sm:$0xff] %v472
        %505 = vst [vmem:[%s280 + $0x90] sm:$0xff] %v473
        %506 = vst [vmem:[%s280 + $0x98] sm:$0xff] %v474
        %507 = vst [vmem:[%s280 + $0xa0] sm:$0xff] %v475
        %508 = vst [vmem:[%s280 + $0xa8] sm:$0xff] %v476
        %509 = vst [vmem:[%s280 + $0xb0] sm:$0xff] %v477
        %510 = vst [vmem:[%s280 + $0xb8] sm:$0xff] %v478
        %511 = vst [vmem:[%s280 + $0xc0] sm:$0xff] %v479
        %512 = vst [vmem:[%s280 + $0xc8] sm:$0xff] %v480
        %513 = vst [vmem:[%s280 + $0xd0] sm:$0xff] %v481
        %514 = vst [vmem:[%s280 + $0xd8] sm:$0xff] %v482
        %515 = vst [vmem:[%s280 + $0xe0] sm:$0xff] %v483
        %516 = vst [vmem:[%s280 + $0xe8] sm:$0xff] %v484
        %517 = vst [vmem:[%s280 + $0xf0] sm:$0xff] %v485
        %518 = vst [vmem:[%s280 + $0xf8] sm:$0xff] %v486
        %s519 = sand.u32 %s127, 1
        %s520 = scalar_lea.sflag [#allocation4], %s519
        %s521 = sand.u32 %s127, 1
        %s522 = smul.addr %s521, 256
        %s523 = scalar_lea.vmem [#allocation10], %s522
        // Predicated region
        $region53: #{bottleneck_forward.7} parent=35 // pred_check
          %p524 = pneg %p137
        $region54: #{bottleneck_forward.7} parent=35 // pred_check_branch
          %526 = sbr.rel (%p524) target = $region56
        $region55: #{bottleneck_forward.7} parent=35 // pred_region
          %s528 = ssub.s32 4096, 4096
          %529 = vsyncadd %s520, %s528
          %s530 = smul.addr %s25, 32
          %s531 = smul.addr %s530, 128
          %s532 = scalar_lea.hbm %s4, %s531
          %s533 = sshll.u32 %s523, 4
          %s534 = int_to_ptr.vmem [resolvable:$true] %s533
          %539 = dma.vmem_to_hbm [thread:$0]  %s534, 4096, %s532, %s520, 128, 128, 8
        $region56: #{bottleneck_forward.7} parent=35 // pred_fallthru
          _
      $region36: #{bottleneck_forward.7} parent=5 // pred_fallthru
        _
      %p540 = scmp.le.s32.totalorder 2, %s20
      // Predicated region
      $region57: #{bottleneck_forward.7} parent=5 // pred_check
        %p541 = pneg %p540
      $region58: #{bottleneck_forward.7} parent=5 // pred_check_branch
        %543 = sbr.rel (%p541) target = $region60
      $region59: #{bottleneck_forward.7} parent=5 // pred_region
        %s544 = ssub.s32 %s20, 2
        // Predicated region
        $region61: #{bottleneck_forward.7} parent=59 // pred_check
          %p545 = pneg %p143
        $region62: #{bottleneck_forward.7} parent=59 // pred_check_branch
          %547 = sbr.rel (%p545) target = $region64
        $region63: #{bottleneck_forward.7} parent=59 // pred_region
          %s548 = sand.u32 %s128, 1
          %s549 = scalar_lea.sflag [#allocation4], %s548
          %s550 = sand.u32 %s128, 1
          %s551 = smul.addr %s550, 256
          %s552 = scalar_lea.vmem [#allocation10], %s551
          %553 = dma.done %s549, 4096
        $region64: #{bottleneck_forward.7} parent=59 // pred_fallthru
          _
      $region60: #{bottleneck_forward.7} parent=5 // pred_fallthru
        _
    $region6: #{bottleneck_forward.7} parent=1 // loop_footer
      %s24 = sadd.s32 1, %s20
    $region7: #{bottleneck_forward.7} parent=1 // loop_footer_branch
      %19 = sbr.rel target = $region3
    $region8: #{bottleneck_forward.7} parent=1 // loop_exit
      _
    %554 = vsyncpa [#allocation3], 1
    %s555 = scalar_lea.sflag [#allocation3], 1
    %556 = vsyncpa %s555, 1
    %557 = vsyncpa [#allocation6], 1
    %s558 = scalar_lea.sflag [#allocation6], 1
    %559 = vsyncpa %s558, 1
    %560 = vsyncpa [#allocation9], 1
    %561 = vsyncpa [#allocation4], 1
    %s562 = scalar_lea.sflag [#allocation4], 1
    %563 = vsyncpa %s562, 1

// kernel: bottleneck_forward.5
$region0: #{bottleneck_forward.5}
  #allocation0 [shape = 'u32[]', space=smem, size = 0x4, offset = 0x4, fixed_abs, tag = 'smem constant byte address 0x4 - core index']
  #allocation1 [shape = 'u32[144,128]{1,0:T(1,128)}', space=vmem, size = 0x12000, scoped, tag = 'internal scratch']
  #allocation2 [shape = 'f32[304,128]{1,0:T(8,128)}', space=vmem, size = 0x26000, scoped, tag = 'scratch operand']
  %s0 = inlined_call_operand.hbm [shape: f32[2,256,128], index: 0, kind: input, shape index: {}]
  %s1 = inlined_call_operand.hbm [shape: f32[1,128], index: 1, kind: input, shape index: {}]
  %s2 = inlined_call_operand.hbm [shape: f32[1,128], index: 2, kind: input, shape index: {}]
  %s3 = inlined_call_operand.hbm [shape: f32[256,128], index: 3, kind: input, shape index: {}]
  %s4 = inlined_call_operand.hbm [shape: f32[256,128], index: 4, kind: input, shape index: {}]
  %s5 = inlined_call_operand.hbm [shape: f32[1152,128], index: 5, kind: input, shape index: {}]
  %s6 = inlined_call_operand.hbm [shape: f32[2,256,128], index: 6, kind: output, shape index: {0}]
  %s7 = inlined_call_operand.hbm [shape: f32[2,2,128], index: 7, kind: output, shape index: {1}]
  %8 = xla_tuple %s6, %s7
  %s9 = sld [smem:[#allocation0]]
  $region89: #{bottleneck_forward.5} parent=0
    _
  %s11 = ssub.s32 1, %s9
  %s12 = scalar_select 0, %s11, %s9
  $region1: #{bottleneck_forward.5} parent=0
    #allocation3 [shape = 'u8[262144]{0}', space=vmem, size = 0x40000, scoped, tag = 'input window, operand 0']
    #allocation4 [shape = 's32[2]{0}', space=sflag, size = 0x8, scoped, tag = 'scoped memory for bottleneck_forward.5']
    #allocation5 [shape = 's32[2]{0}', space=sflag, size = 0x8, scoped, tag = 'scoped memory for bottleneck_forward.5']
    #allocation6 [shape = 'u8[512]{0}', space=vmem, size = 0x400, scoped, tag = 'input window, operand 1, single buffered']
    #allocation7 [shape = 's32[1]{0}', space=sflag, size = 0x4, scoped, tag = 'scoped memory for bottleneck_forward.5']
    #allocation8 [shape = 'u8[512]{0}', space=vmem, size = 0x400, scoped, tag = 'input window, operand 2, single buffered']
    #allocation9 [shape = 'u8[131072]{0}', space=vmem, size = 0x20000, scoped, tag = 'input window, operand 3, single buffered']
    #allocation10 [shape = 's32[1]{0}', space=sflag, size = 0x4, scoped, tag = 'scoped memory for bottleneck_forward.5']
    #allocation11 [shape = 'u8[131072]{0}', space=vmem, size = 0x20000, scoped, tag = 'input window, operand 4, single buffered']
    #allocation12 [shape = 'u8[589824]{0}', space=vmem, size = 0x90000, scoped, tag = 'input window, operand 5, single buffered']
    #allocation13 [shape = 's32[1]{0}', space=sflag, size = 0x4, scoped, tag = 'scoped memory for bottleneck_forward.5']
    #allocation14 [shape = 'u8[262144]{0}', space=vmem, size = 0x40000, scoped, tag = 'output window, operand 0']
    #allocation15 [shape = 'u8[2048]{0}', space=vmem, size = 0x800, scoped, tag = 'output window, operand 1']
    #allocation16 [shape = 's32[2]{0}', space=sflag, size = 0x8, scoped, tag = 'scoped memory for bottleneck_forward.5']
    %13 = vsyncpa [#allocation4], 0
    %s14 = scalar_lea.sflag [#allocation4], 1
    %15 = vsyncpa %s14, 0
    %16 = vsyncpa [#allocation7], 0
    %17 = vsyncpa [#allocation10], 0
    %18 = vsyncpa [#allocation13], 0
    %19 = vsyncpa [#allocation5], 0
    %s20 = scalar_lea.sflag [#allocation5], 1
    %21 = vsyncpa %s20, 0
    %22 = vsyncpa [#allocation16], 0
    %s23 = scalar_lea.sflag [#allocation16], 1
    %24 = vsyncpa %s23, 0
    loop: start=0, step=1, limit=4
    $region2: #{bottleneck_forward.5} parent=1 // loop_pre_header
      _
    $region3: #{bottleneck_forward.5} parent=1 // loop_header
      %s26 = sphi 0, %s30
      %p27 = scmp.ge.s32.totalorder %s26, 4
      %s36 = sphi 0, %s38
      %s39 = sphi 0, %s36
      %s40 = sphi 0, %s39
      %s56 = sphi 0, %s40
      %s60 = sphi 0, %s60
      %s62 = sphi 0, %s60
      %s63 = sphi 0, %s62
      %s77 = sphi 0, %s63
      %s81 = sphi 0, %s81
      %s83 = sphi 0, %s81
      %s84 = sphi 0, %s83
      %s98 = sphi 0, %s84
      %s102 = sphi 0, %s102
      %s104 = sphi 0, %s102
      %s105 = sphi 0, %s104
      %s119 = sphi 0, %s105
      %s123 = sphi 0, %s123
      %s125 = sphi 0, %s123
      %s126 = sphi 0, %s125
      %s140 = sphi 0, %s126
      %s144 = sphi 0, %s144
      %s146 = sphi 0, %s144
      %s147 = sphi 0, %s146
      %s161 = sphi 0, %s147
      %s167 = sphi 0, %s169
      %s170 = sphi 0, %s167
      %s171 = sphi 0, %s170
      %s187 = sphi 0, %s171
      %s193 = sphi 0, %s195
      %s196 = sphi 0, %s193
      %s197 = sphi 0, %s196
      %s213 = sphi 0, %s197
    $region4: #{bottleneck_forward.5} parent=1 // loop_header_branch
      %29 = sbr.rel (%p27) target = $region8
    $region5: #{bottleneck_forward.5} parent=1 // loop_body
      %s31 = ssub.s32 %s26, 1
      %s32 = ssub.s32 %s26, 2
      %s33 = sadd.s32 %s26, 1
      %s34 = ssub.s32 %s26, %s33
      %p35 = scmp.eq.s32.totalorder %s34, 0
      %s37 = sadd.s32 %s36, 1
      %s38 = scalar_select %p35, %s36, %s37
      %p41 = pneg %p35
      %p42 = scmp.eq.s32.totalorder %s26, 1
      %p43 = por %p41, %p42
      %p44 = scmp.ne.s32.totalorder %s36, %s39
      %p45 = scmp.eq.s32.totalorder %s26, 0
      %p46 = por %p44, %p45
      %p47 = scmp.ne.s32.totalorder %s36, %s39
      %p48 = scmp.eq.s32.totalorder %s31, 1
      %p49 = por %p47, %p48
      %p50 = scmp.ne.s32.totalorder %s39, %s40
      %p51 = scmp.eq.s32.totalorder %s31, 0
      %p52 = por %p50, %p51
      %p53 = scmp.ne.s32.totalorder %s39, %s40
      %p54 = scmp.eq.s32.totalorder %s32, 1
      %p55 = por %p53, %p54
      %p57 = scmp.ne.s32.totalorder %s40, %s56
      %p58 = scmp.eq.s32.totalorder %s32, 0
      %p59 = por %p57, %p58
      %s61 = sadd.s32 %s60, 1
      %p64 = scmp.eq.s32.totalorder %s26, 1
      %p65 = scmp.ne.s32.totalorder %s60, %s62
      %p66 = scmp.eq.s32.totalorder %s26, 0
      %p67 = por %p65, %p66
      %p68 = scmp.ne.s32.totalorder %s60, %s62
      %p69 = scmp.eq.s32.totalorder %s31, 1
      %p70 = por %p68, %p69
      %p71 = scmp.ne.s32.totalorder %s62, %s63
      %p72 = scmp.eq.s32.totalorder %s31, 0
      %p73 = por %p71, %p72
      %p74 = scmp.ne.s32.totalorder %s62, %s63
      %p75 = scmp.eq.s32.totalorder %s32, 1
      %p76 = por %p74, %p75
      %p78 = scmp.ne.s32.totalorder %s63, %s77
      %p79 = scmp.eq.s32.totalorder %s32, 0
      %p80 = por %p78, %p79
      %s82 = sadd.s32 %s81, 1
      %p85 = scmp.eq.s32.totalorder %s26, 1
      %p86 = scmp.ne.s32.totalorder %s81, %s83
      %p87 = scmp.eq.s32.totalorder %s26, 0
      %p88 = por %p86, %p87
      %p89 = scmp.ne.s32.totalorder %s81, %s83
      %p90 = scmp.eq.s32.totalorder %s31, 1
      %p91 = por %p89, %p90
      %p92 = scmp.ne.s32.totalorder %s83, %s84
      %p93 = scmp.eq.s32.totalorder %s31, 0
      %p94 = por %p92, %p93
      %p95 = scmp.ne.s32.totalorder %s83, %s84
      %p96 = scmp.eq.s32.totalorder %s32, 1
      %p97 = por %p95, %p96
      %p99 = scmp.ne.s32.totalorder %s84, %s98
      %p100 = scmp.eq.s32.totalorder %s32, 0
      %p101 = por %p99, %p100
      %s103 = sadd.s32 %s102, 1
      %p106 = scmp.eq.s32.totalorder %s26, 1
      %p107 = scmp.ne.s32.totalorder %s102, %s104
      %p108 = scmp.eq.s32.totalorder %s26, 0
      %p109 = por %p107, %p108
      %p110 = scmp.ne.s32.totalorder %s102, %s104
      %p111 = scmp.eq.s32.totalorder %s31, 1
      %p112 = por %p110, %p111
      %p113 = scmp.ne.s32.totalorder %s104, %s105
      %p114 = scmp.eq.s32.totalorder %s31, 0
      %p115 = por %p113, %p114
      %p116 = scmp.ne.s32.totalorder %s104, %s105
      %p117 = scmp.eq.s32.totalorder %s32, 1
      %p118 = por %p116, %p117
      %p120 = scmp.ne.s32.totalorder %s105, %s119
      %p121 = scmp.eq.s32.totalorder %s32, 0
      %p122 = por %p120, %p121
      %s124 = sadd.s32 %s123, 1
      %p127 = scmp.eq.s32.totalorder %s26, 1
      %p128 = scmp.ne.s32.totalorder %s123, %s125
      %p129 = scmp.eq.s32.totalorder %s26, 0
      %p130 = por %p128, %p129
      %p131 = scmp.ne.s32.totalorder %s123, %s125
      %p132 = scmp.eq.s32.totalorder %s31, 1
      %p133 = por %p131, %p132
      %p134 = scmp.ne.s32.totalorder %s125, %s126
      %p135 = scmp.eq.s32.totalorder %s31, 0
      %p136 = por %p134, %p135
      %p137 = scmp.ne.s32.totalorder %s125, %s126
      %p138 = scmp.eq.s32.totalorder %s32, 1
      %p139 = por %p137, %p138
      %p141 = scmp.ne.s32.totalorder %s126, %s140
      %p142 = scmp.eq.s32.totalorder %s32, 0
      %p143 = por %p141, %p142
      %s145 = sadd.s32 %s144, 1
      %p148 = scmp.eq.s32.totalorder %s26, 1
      %p149 = scmp.ne.s32.totalorder %s144, %s146
      %p150 = scmp.eq.s32.totalorder %s26, 0
      %p151 = por %p149, %p150
      %p152 = scmp.ne.s32.totalorder %s144, %s146
      %p153 = scmp.eq.s32.totalorder %s31, 1
      %p154 = por %p152, %p153
      %p155 = scmp.ne.s32.totalorder %s146, %s147
      %p156 = scmp.eq.s32.totalorder %s31, 0
      %p157 = por %p155, %p156
      %p158 = scmp.ne.s32.totalorder %s146, %s147
      %p159 = scmp.eq.s32.totalorder %s32, 1
      %p160 = por %p158, %p159
      %p162 = scmp.ne.s32.totalorder %s147, %s161
      %p163 = scmp.eq.s32.totalorder %s32, 0
      %p164 = por %p162, %p163
      %s165 = ssub.s32 %s26, %s33
      %p166 = scmp.eq.s32.totalorder %s165, 0
      %s168 = sadd.s32 %s167, 1
      %s169 = scalar_select %p166, %s167, %s168
      %p172 = pneg %p166
      %p173 = scmp.eq.s32.totalorder %s26, 1
      %p174 = por %p172, %p173
      %p175 = scmp.ne.s32.totalorder %s167, %s170
      %p176 = scmp.eq.s32.totalorder %s26, 0
      %p177 = por %p175, %p176
      %p178 = scmp.ne.s32.totalorder %s167, %s170
      %p179 = scmp.eq.s32.totalorder %s31, 1
      %p180 = por %p178, %p179
      %p181 = scmp.ne.s32.totalorder %s170, %s171
      %p182 = scmp.eq.s32.totalorder %s31, 0
      %p183 = por %p181, %p182
      %p184 = scmp.ne.s32.totalorder %s170, %s171
      %p185 = scmp.eq.s32.totalorder %s32, 1
      %p186 = por %p184, %p185
      %p188 = scmp.ne.s32.totalorder %s171, %s187
      %p189 = scmp.eq.s32.totalorder %s32, 0
      %p190 = por %p188, %p189
      %s191 = ssub.s32 %s26, %s33
      %p192 = scmp.eq.s32.totalorder %s191, 0
      %s194 = sadd.s32 %s193, 1
      %s195 = scalar_select %p192, %s193, %s194
      %p198 = pneg %p192
      %p199 = scmp.eq.s32.totalorder %s26, 1
      %p200 = por %p198, %p199
      %p201 = scmp.ne.s32.totalorder %s193, %s196
      %p202 = scmp.eq.s32.totalorder %s26, 0
      %p203 = por %p201, %p202
      %p204 = scmp.ne.s32.totalorder %s193, %s196
      %p205 = scmp.eq.s32.totalorder %s31, 1
      %p206 = por %p204, %p205
      %p207 = scmp.ne.s32.totalorder %s196, %s197
      %p208 = scmp.eq.s32.totalorder %s31, 0
      %p209 = por %p207, %p208
      %p210 = scmp.ne.s32.totalorder %s196, %s197
      %p211 = scmp.eq.s32.totalorder %s32, 1
      %p212 = por %p210, %p211
      %p214 = scmp.ne.s32.totalorder %s197, %s213
      %p215 = scmp.eq.s32.totalorder %s32, 0
      %p216 = por %p214, %p215
      %p217 = scmp.le.s32.totalorder 1, %s26
      %p218 = scmp.lt.s32.totalorder %s26, 3
      %p219 = pnand %p217, %p218
      %p220 = pneg %p219
      // Predicated region
      $region9: #{bottleneck_forward.5} parent=5 // pred_check
        _
      $region10: #{bottleneck_forward.5} parent=5 // pred_check_branch
        %222 = sbr.rel (%p219) target = $region12
      $region11: #{bottleneck_forward.5} parent=5 // pred_region
        %s223 = ssub.s32 %s26, 1
        // Predicated region
        $region13: #{bottleneck_forward.5} parent=11 // pred_check
          %p224 = pneg %p73
        $region14: #{bottleneck_forward.5} parent=11 // pred_check_branch
          %226 = sbr.rel (%p224) target = $region16
        $region15: #{bottleneck_forward.5} parent=11 // pred_region
          %s228 = ssub.s32 16, 16
          %229 = vsyncadd [#allocation7], %s228
          %s231 = sshll.u32 [#allocation6], 4
          %s232 = int_to_ptr.vmem [resolvable:$true] %s231
          %234 = dma.hbm_to_vmem [thread:$0]  %s1, 16, %s232, [#allocation7]
        $region16: #{bottleneck_forward.5} parent=11 // pred_fallthru
          _
        // Predicated region
        $region17: #{bottleneck_forward.5} parent=11 // pred_check
          %p235 = pneg %p94
        $region18: #{bottleneck_forward.5} parent=11 // pred_check_branch
          %237 = sbr.rel (%p235) target = $region20
        $region19: #{bottleneck_forward.5} parent=11 // pred_region
          %s239 = ssub.s32 16, 16
          %240 = vsyncadd [#allocation7], %s239
          %s242 = sshll.u32 [#allocation8], 4
          %s243 = int_to_ptr.vmem [resolvable:$true] %s242
          %245 = dma.hbm_to_vmem [thread:$0]  %s2, 16, %s243, [#allocation7]
        $region20: #{bottleneck_forward.5} parent=11 // pred_fallthru
          _
        // Predicated region
        $region21: #{bottleneck_forward.5} parent=11 // pred_check
          %p246 = pneg %p115
        $region22: #{bottleneck_forward.5} parent=11 // pred_check_branch
          %248 = sbr.rel (%p246) target = $region24
        $region23: #{bottleneck_forward.5} parent=11 // pred_region
          %s250 = ssub.s32 4096, 4096
          %251 = vsyncadd [#allocation10], %s250
          %s252 = sshll.u32 [#allocation9], 4
          %s253 = int_to_ptr.vmem [resolvable:$true] %s252
          %258 = dma.hbm_to_vmem [thread:$0]  %s3, 4096, %s253, [#allocation10], 128, 128, 8
        $region24: #{bottleneck_forward.5} parent=11 // pred_fallthru
          _
        // Predicated region
        $region25: #{bottleneck_forward.5} parent=11 // pred_check
          %p259 = pneg %p136
        $region26: #{bottleneck_forward.5} parent=11 // pred_check_branch
          %261 = sbr.rel (%p259) target = $region28
        $region27: #{bottleneck_forward.5} parent=11 // pred_region
          %s263 = ssub.s32 4096, 4096
          %264 = vsyncadd [#allocation10], %s263
          %s265 = sshll.u32 [#allocation11], 4
          %s266 = int_to_ptr.vmem [resolvable:$true] %s265
          %271 = dma.hbm_to_vmem [thread:$0]  %s4, 4096, %s266, [#allocation10], 128, 128, 8
        $region28: #{bottleneck_forward.5} parent=11 // pred_fallthru
          _
        // Predicated region
        $region29: #{bottleneck_forward.5} parent=11 // pred_check
          %p272 = pneg %p157
        $region30: #{bottleneck_forward.5} parent=11 // pred_check_branch
          %274 = sbr.rel (%p272) target = $region32
        $region31: #{bottleneck_forward.5} parent=11 // pred_region
          %s276 = ssub.s32 18432, 18432
          %277 = vsyncadd [#allocation13], %s276
          %s278 = sshll.u32 [#allocation12], 4
          %s279 = int_to_ptr.vmem [resolvable:$true] %s278
          %284 = dma.hbm_to_vmem [thread:$0]  %s5, 18432, %s279, [#allocation13], 128, 128, 8
        $region32: #{bottleneck_forward.5} parent=11 // pred_fallthru
          _
      $region12: #{bottleneck_forward.5} parent=5 // pred_fallthru
        _
      %p285 = scmp.lt.s32.totalorder %s26, 2
      // Predicated region
      $region33: #{bottleneck_forward.5} parent=5 // pred_check
        %p286 = pneg %p285
      $region34: #{bottleneck_forward.5} parent=5 // pred_check_branch
        %288 = sbr.rel (%p286) target = $region36
      $region35: #{bottleneck_forward.5} parent=5 // pred_region
        // Predicated region
        $region37: #{bottleneck_forward.5} parent=35 // pred_check
          %p289 = pneg %p46
        $region38: #{bottleneck_forward.5} parent=35 // pred_check_branch
          %291 = sbr.rel (%p289) target = $region40
        $region39: #{bottleneck_forward.5} parent=35 // pred_region
          %s292 = sand.u32 %s36, 1
          %s293 = scalar_lea.sflag [#allocation4], %s292
          %s294 = sand.u32 %s36, 1
          %s295 = smul.addr %s294, 256
          %s296 = scalar_lea.vmem [#allocation3], %s295
          %s298 = ssub.s32 4096, 4096
          %299 = vsyncadd %s293, %s298
          %s300 = smul.addr %s26, 32
          %s301 = smul.addr %s300, 128
          %s302 = scalar_lea.hbm %s0, %s301
          %s303 = sshll.u32 %s296, 4
          %s304 = int_to_ptr.vmem [resolvable:$true] %s303
          %309 = dma.hbm_to_vmem [thread:$0]  %s302, 4096, %s304, %s293, 128, 128, 8
        $region40: #{bottleneck_forward.5} parent=35 // pred_fallthru
          _
      $region36: #{bottleneck_forward.5} parent=5 // pred_fallthru
        _
      %p310 = scmp.le.s32.totalorder 1, %s26
      %p311 = scmp.lt.s32.totalorder %s26, 3
      %p312 = pnand %p310, %p311
      %p313 = pneg %p312
      // Predicated region
      $region41: #{bottleneck_forward.5} parent=5 // pred_check
        _
      $region42: #{bottleneck_forward.5} parent=5 // pred_check_branch
        %315 = sbr.rel (%p312) target = $region44
      $region43: #{bottleneck_forward.5} parent=5 // pred_region
        %s316 = ssub.s32 %s26, 1
        %s317 = sand.u32 %s39, 1
        %s318 = scalar_lea.sflag [#allocation4], %s317
        %s319 = sand.u32 %s39, 1
        %s320 = smul.addr %s319, 256
        %s321 = scalar_lea.vmem [#allocation3], %s320
        // Predicated region
        $region45: #{bottleneck_forward.5} parent=43 // pred_check
          %p322 = pneg %p52
        $region46: #{bottleneck_forward.5} parent=43 // pred_check_branch
          %324 = sbr.rel (%p322) target = $region48
        $region47: #{bottleneck_forward.5} parent=43 // pred_region
          %325 = dma.done %s318, 4096
        $region48: #{bottleneck_forward.5} parent=43 // pred_fallthru
          _
        // Predicated region
        $region49: #{bottleneck_forward.5} parent=43 // pred_check
          %p326 = pneg %p73
        $region50: #{bottleneck_forward.5} parent=43 // pred_check_branch
          %328 = sbr.rel (%p326) target = $region52
        $region51: #{bottleneck_forward.5} parent=43 // pred_region
          %329 = dma.done [#allocation7], 16
        $region52: #{bottleneck_forward.5} parent=43 // pred_fallthru
          _
        // Predicated region
        $region53: #{bottleneck_forward.5} parent=43 // pred_check
          %p330 = pneg %p94
        $region54: #{bottleneck_forward.5} parent=43 // pred_check_branch
          %332 = sbr.rel (%p330) target = $region56
        $region55: #{bottleneck_forward.5} parent=43 // pred_region
          %333 = dma.done [#allocation7], 16
        $region56: #{bottleneck_forward.5} parent=43 // pred_fallthru
          _
        // Predicated region
        $region57: #{bottleneck_forward.5} parent=43 // pred_check
          %p334 = pneg %p115
        $region58: #{bottleneck_forward.5} parent=43 // pred_check_branch
          %336 = sbr.rel (%p334) target = $region60
        $region59: #{bottleneck_forward.5} parent=43 // pred_region
          %337 = dma.done [#allocation10], 4096
        $region60: #{bottleneck_forward.5} parent=43 // pred_fallthru
          _
        // Predicated region
        $region61: #{bottleneck_forward.5} parent=43 // pred_check
          %p338 = pneg %p136
        $region62: #{bottleneck_forward.5} parent=43 // pred_check_branch
          %340 = sbr.rel (%p338) target = $region64
        $region63: #{bottleneck_forward.5} parent=43 // pred_region
          %341 = dma.done [#allocation10], 4096
        $region64: #{bottleneck_forward.5} parent=43 // pred_fallthru
          _
        // Predicated region
        $region65: #{bottleneck_forward.5} parent=43 // pred_check
          %p342 = pneg %p157
        $region66: #{bottleneck_forward.5} parent=43 // pred_check_branch
          %344 = sbr.rel (%p342) target = $region68
        $region67: #{bottleneck_forward.5} parent=43 // pred_region
          %345 = dma.done [#allocation13], 18432
        $region68: #{bottleneck_forward.5} parent=43 // pred_fallthru
          _
        %s346 = sand.u32 %s39, 1
        %s347 = scalar_lea.sflag [#allocation4], %s346
        %s348 = sand.u32 %s39, 1
        %s349 = smul.addr %s348, 256
        %s350 = scalar_lea.vmem [#allocation3], %s349
        %p351 = pneg %p52
        %p352 = pneg %p49
        %p353 = pneg %p73
        %p354 = pneg %p70
        %p355 = pneg %p94
        %p356 = pneg %p91
        %p357 = pneg %p115
        %p358 = pneg %p112
        %p359 = pneg %p136
        %p360 = pneg %p133
        %p361 = pneg %p157
        %p362 = pneg %p154
        %p363 = pneg %p183
        %p364 = pneg %p180
        %s365 = sand.u32 %s170, 1
        %s366 = scalar_lea.sflag [#allocation5], %s365
        %s367 = sand.u32 %s170, 1
        %s368 = smul.addr %s367, 256
        %s369 = scalar_lea.vmem [#allocation14], %s368
        %p370 = pneg %p209
        %p371 = pneg %p206
        %s372 = sand.u32 %s196, 1
        %s373 = scalar_lea.sflag [#allocation16], %s372
        %s374 = sand.u32 %s196, 1
        %s375 = smul.addr %s374, 2
        %s376 = scalar_lea.vmem [#allocation15], %s375
        %v377 = vld [vmem:[%s321] sm:$0xff]
        %v378 = vld [vmem:[%s321 + $0x8] sm:$0xff]
        %v379 = vld [vmem:[%s321 + $0x10] sm:$0xff]
        %v380 = vld [vmem:[%s321 + $0x18] sm:$0xff]
        %v381 = vld [vmem:[%s321 + $0x20] sm:$0xff]
        %v382 = vld [vmem:[%s321 + $0x28] sm:$0xff]
        %v383 = vld [vmem:[%s321 + $0x30] sm:$0xff]
        %v384 = vld [vmem:[%s321 + $0x38] sm:$0xff]
        %v385 = vld [vmem:[%s321 + $0x40] sm:$0xff]
        %v386 = vld [vmem:[%s321 + $0x48] sm:$0xff]
        %v387 = vld [vmem:[%s321 + $0x50] sm:$0xff]
        %v388 = vld [vmem:[%s321 + $0x58] sm:$0xff]
        %v389 = vld [vmem:[%s321 + $0x60] sm:$0xff]
        %v390 = vld [vmem:[%s321 + $0x68] sm:$0xff]
        %v391 = vld [vmem:[%s321 + $0x70] sm:$0xff]
        %v392 = vld [vmem:[%s321 + $0x78] sm:$0xff]
        %v393 = vld [vmem:[%s321 + $0x80] sm:$0xff]
        %v394 = vld [vmem:[%s321 + $0x88] sm:$0xff]
        %v395 = vld [vmem:[%s321 + $0x90] sm:$0xff]
        %v396 = vld [vmem:[%s321 + $0x98] sm:$0xff]
        %v397 = vld [vmem:[%s321 + $0xa0] sm:$0xff]
        %v398 = vld [vmem:[%s321 + $0xa8] sm:$0xff]
        %v399 = vld [vmem:[%s321 + $0xb0] sm:$0xff]
        %v400 = vld [vmem:[%s321 + $0xb8] sm:$0xff]
        %v401 = vld [vmem:[%s321 + $0xc0] sm:$0xff]
        %v402 = vld [vmem:[%s321 + $0xc8] sm:$0xff]
        %v403 = vld [vmem:[%s321 + $0xd0] sm:$0xff]
        %v404 = vld [vmem:[%s321 + $0xd8] sm:$0xff]
        %v405 = vld [vmem:[%s321 + $0xe0] sm:$0xff]
        %v406 = vld [vmem:[%s321 + $0xe8] sm:$0xff]
        %v407 = vld [vmem:[%s321 + $0xf0] sm:$0xff]
        %v408 = vld [vmem:[%s321 + $0xf8] sm:$0xff]
        %v409 = vld [vmem:[#allocation6] sm:$0x1]
        %v411 = vlaneseq
        %v412 = vshrl.u32 %v411, 7
        %v413 = vsub.s32 0, %v412
        %v414 = vrot.slane %v409, %v413
        %v416 = vmul.f32 %v377, %v414
        %v417 = vmul.f32 %v378, %v414
        %v418 = vmul.f32 %v379, %v414
        %v419 = vmul.f32 %v380, %v414
        %v420 = vmul.f32 %v381, %v414
        %v421 = vmul.f32 %v382, %v414
        %v422 = vmul.f32 %v383, %v414
        %v423 = vmul.f32 %v384, %v414
        %v424 = vmul.f32 %v385, %v414
        %v425 = vmul.f32 %v386, %v414
        %v426 = vmul.f32 %v387, %v414
        %v427 = vmul.f32 %v388, %v414
        %v428 = vmul.f32 %v389, %v414
        %v429 = vmul.f32 %v390, %v414
        %v430 = vmul.f32 %v391, %v414
        %v431 = vmul.f32 %v392, %v414
        %v432 = vmul.f32 %v393, %v414
        %v433 = vmul.f32 %v394, %v414
        %v434 = vmul.f32 %v395, %v414
        %v435 = vmul.f32 %v396, %v414
        %v436 = vmul.f32 %v397, %v414
        %v437 = vmul.f32 %v398, %v414
        %v438 = vmul.f32 %v399, %v414
        %v439 = vmul.f32 %v400, %v414
        %v440 = vmul.f32 %v401, %v414
        %v441 = vmul.f32 %v402, %v414
        %v442 = vmul.f32 %v403, %v414
        %v443 = vmul.f32 %v404, %v414
        %v444 = vmul.f32 %v405, %v414
        %v445 = vmul.f32 %v406, %v414
        %v446 = vmul.f32 %v407, %v414
        %v447 = vmul.f32 %v408, %v414
        %v448 = vld [vmem:[#allocation8] sm:$0x1]
        %v450 = vlaneseq
        %v451 = vshrl.u32 %v450, 7
        %v452 = vsub.s32 0, %v451
        %v453 = vrot.slane %v448, %v452
        %v455 = vadd.f32 %v416, %v453
        %v456 = vadd.f32 %v417, %v453
        %v457 = vadd.f32 %v418, %v453
        %v458 = vadd.f32 %v419, %v453
        %v459 = vadd.f32 %v420, %v453
        %v460 = vadd.f32 %v421, %v453
        %v461 = vadd.f32 %v422, %v453
        %v462 = vadd.f32 %v423, %v453
        %v463 = vadd.f32 %v424, %v453
        %v464 = vadd.f32 %v425, %v453
        %v465 = vadd.f32 %v426, %v453
        %v466 = vadd.f32 %v427, %v453
        %v467 = vadd.f32 %v428, %v453
        %v468 = vadd.f32 %v429, %v453
        %v469 = vadd.f32 %v430, %v453
        %v470 = vadd.f32 %v431, %v453
        %v471 = vadd.f32 %v432, %v453
        %v472 = vadd.f32 %v433, %v453
        %v473 = vadd.f32 %v434, %v453
        %v474 = vadd.f32 %v435, %v453
        %v475 = vadd.f32 %v436, %v453
        %v476 = vadd.f32 %v437, %v453
        %v477 = vadd.f32 %v438, %v453
        %v478 = vadd.f32 %v439, %v453
        %v479 = vadd.f32 %v440, %v453
        %v480 = vadd.f32 %v441, %v453
        %v481 = vadd.f32 %v442, %v453
        %v482 = vadd.f32 %v443, %v453
        %v483 = vadd.f32 %v444, %v453
        %v484 = vadd.f32 %v445, %v453
        %v485 = vadd.f32 %v446, %v453
        %v486 = vadd.f32 %v447, %v453
        %v487 = vmax.f32 %v455, 0.0
        %v488 = vmax.f32 %v456, 0.0
        %v489 = vmax.f32 %v457, 0.0
        %v490 = vmax.f32 %v458, 0.0
        %v491 = vmax.f32 %v459, 0.0
        %v492 = vmax.f32 %v460, 0.0
        %v493 = vmax.f32 %v461, 0.0
        %v494 = vmax.f32 %v462, 0.0
        %v495 = vmax.f32 %v463, 0.0
        %v496 = vmax.f32 %v464, 0.0
        %v497 = vmax.f32 %v465, 0.0
        %v498 = vmax.f32 %v466, 0.0
        %v499 = vmax.f32 %v467, 0.0
        %v500 = vmax.f32 %v468, 0.0
        %v501 = vmax.f32 %v469, 0.0
        %v502 = vmax.f32 %v470, 0.0
        %v503 = vmax.f32 %v471, 0.0
        %v504 = vmax.f32 %v472, 0.0
        %v505 = vmax.f32 %v473, 0.0
        %v506 = vmax.f32 %v474, 0.0
        %v507 = vmax.f32 %v475, 0.0
        %v508 = vmax.f32 %v476, 0.0
        %v509 = vmax.f32 %v477, 0.0
        %v510 = vmax.f32 %v478, 0.0
        %v511 = vmax.f32 %v479, 0.0
        %v512 = vmax.f32 %v480, 0.0
        %v513 = vmax.f32 %v481, 0.0
        %v514 = vmax.f32 %v482, 0.0
        %v515 = vmax.f32 %v483, 0.0
        %v516 = vmax.f32 %v484, 0.0
        %v517 = vmax.f32 %v485, 0.0
        %v518 = vmax.f32 %v486, 0.0
        %519 = vst [vmem:[#allocation2] sm:$0xff] 0.0
        %520 = vst [vmem:[#allocation2 + $0x8] sm:$0xff] 0.0
        %521 = vst [vmem:[#allocation2 + $0x10] sm:$0xff] 0.0
        %522 = vst [vmem:[#allocation2 + $0x118] sm:$0xff] 0.0
        %523 = vst [vmem:[#allocation2 + $0x120] sm:$0xff] 0.0
        %524 = vst [vmem:[#allocation2 + $0x128] sm:$0xff] 0.0
        %525 = vst [vmem:[#allocation2 + $0x18] sm:$0xff] %v487
        %526 = vst [vmem:[#allocation2 + $0x20] sm:$0xff] %v488
        %527 = vst [vmem:[#allocation2 + $0x28] sm:$0xff] %v489
        %528 = vst [vmem:[#allocation2 + $0x30] sm:$0xff] %v490
        %529 = vst [vmem:[#allocation2 + $0x38] sm:$0xff] %v491
        %530 = vst [vmem:[#allocation2 + $0x40] sm:$0xff] %v492
        %531 = vst [vmem:[#allocation2 + $0x48] sm:$0xff] %v493
        %532 = vst [vmem:[#allocation2 + $0x50] sm:$0xff] %v494
        %533 = vst [vmem:[#allocation2 + $0x58] sm:$0xff] %v495
        %534 = vst [vmem:[#allocation2 + $0x60] sm:$0xff] %v496
        %535 = vst [vmem:[#allocation2 + $0x68] sm:$0xff] %v497
        %536 = vst [vmem:[#allocation2 + $0x70] sm:$0xff] %v498
        %537 = vst [vmem:[#allocation2 + $0x78] sm:$0xff] %v499
        %538 = vst [vmem:[#allocation2 + $0x80] sm:$0xff] %v500
        %539 = vst [vmem:[#allocation2 + $0x88] sm:$0xff] %v501
        %540 = vst [vmem:[#allocation2 + $0x90] sm:$0xff] %v502
        %541 = vst [vmem:[#allocation2 + $0x98] sm:$0xff] %v503
        %542 = vst [vmem:[#allocation2 + $0xa0] sm:$0xff] %v504
        %543 = vst [vmem:[#allocation2 + $0xa8] sm:$0xff] %v505
        %544 = vst [vmem:[#allocation2 + $0xb0] sm:$0xff] %v506
        %545 = vst [vmem:[#allocation2 + $0xb8] sm:$0xff] %v507
        %546 = vst [vmem:[#allocation2 + $0xc0] sm:$0xff] %v508
        %547 = vst [vmem:[#allocation2 + $0xc8] sm:$0xff] %v509
        %548 = vst [vmem:[#allocation2 + $0xd0] sm:$0xff] %v510
        %549 = vst [vmem:[#allocation2 + $0xd8] sm:$0xff] %v511
        %550 = vst [vmem:[#allocation2 + $0xe0] sm:$0xff] %v512
        %551 = vst [vmem:[#allocation2 + $0xe8] sm:$0xff] %v513
        %552 = vst [vmem:[#allocation2 + $0xf0] sm:$0xff] %v514
        %553 = vst [vmem:[#allocation2 + $0xf8] sm:$0xff] %v515
        %554 = vst [vmem:[#allocation2 + $0x100] sm:$0xff] %v516
        %555 = vst [vmem:[#allocation2 + $0x108] sm:$0xff] %v517
        %556 = vst [vmem:[#allocation2 + $0x110] sm:$0xff] %v518
        %v557 = vld [vmem:[#allocation9] sm:$0xff]
        %v558 = vld [vmem:[#allocation9 + $0x8] sm:$0xff]
        %v559 = vld [vmem:[#allocation9 + $0x10] sm:$0xff]
        %v560 = vld [vmem:[#allocation9 + $0x18] sm:$0xff]
        %v561 = vld [vmem:[#allocation9 + $0x20] sm:$0xff]
        %v562 = vld [vmem:[#allocation9 + $0x28] sm:$0xff]
        %v563 = vld [vmem:[#allocation9 + $0x30] sm:$0xff]
        %v564 = vld [vmem:[#allocation9 + $0x38] sm:$0xff]
        %v565 = vld [vmem:[#allocation9 + $0x40] sm:$0xff]
        %v566 = vld [vmem:[#allocation9 + $0x48] sm:$0xff]
        %v567 = vld [vmem:[#allocation9 + $0x50] sm:$0xff]
        %v568 = vld [vmem:[#allocation9 + $0x58] sm:$0xff]
        %v569 = vld [vmem:[#allocation9 + $0x60] sm:$0xff]
        %v570 = vld [vmem:[#allocation9 + $0x68] sm:$0xff]
        %v571 = vld [vmem:[#allocation9 + $0x70] sm:$0xff]
        %v572 = vld [vmem:[#allocation9 + $0x78] sm:$0xff]
        %v573 = vld [vmem:[#allocation9 + $0x80] sm:$0xff]
        %v574 = vld [vmem:[#allocation9 + $0x88] sm:$0xff]
        %v575 = vld [vmem:[#allocation9 + $0x90] sm:$0xff]
        %v576 = vld [vmem:[#allocation9 + $0x98] sm:$0xff]
        %v577 = vld [vmem:[#allocation9 + $0xa0] sm:$0xff]
        %v578 = vld [vmem:[#allocation9 + $0xa8] sm:$0xff]
        %v579 = vld [vmem:[#allocation9 + $0xb0] sm:$0xff]
        %v580 = vld [vmem:[#allocation9 + $0xb8] sm:$0xff]
        %v581 = vld [vmem:[#allocation9 + $0xc0] sm:$0xff]
        %v582 = vld [vmem:[#allocation9 + $0xc8] sm:$0xff]
        %v583 = vld [vmem:[#allocation9 + $0xd0] sm:$0xff]
        %v584 = vld [vmem:[#allocation9 + $0xd8] sm:$0xff]
        %v585 = vld [vmem:[#allocation9 + $0xe0] sm:$0xff]
        %v586 = vld [vmem:[#allocation9 + $0xe8] sm:$0xff]
        %v587 = vld [vmem:[#allocation9 + $0xf0] sm:$0xff]
        %v588 = vld [vmem:[#allocation9 + $0xf8] sm:$0xff]
        %v589 = vld [vmem:[#allocation11] sm:$0xff]
        %v590 = vld [vmem:[#allocation11 + $0x8] sm:$0xff]
        %v591 = vld [vmem:[#allocation11 + $0x10] sm:$0xff]
        %v592 = vld [vmem:[#allocation11 + $0x18] sm:$0xff]
        %v593 = vld [vmem:[#allocation11 + $0x20] sm:$0xff]
        %v594 = vld [vmem:[#allocation11 + $0x28] sm:$0xff]
        %v595 = vld [vmem:[#allocation11 + $0x30] sm:$0xff]
        %v596 = vld [vmem:[#allocation11 + $0x38] sm:$0xff]
        %v597 = vld [vmem:[#allocation11 + $0x40] sm:$0xff]
        %v598 = vld [vmem:[#allocation11 + $0x48] sm:$0xff]
        %v599 = vld [vmem:[#allocation11 + $0x50] sm:$0xff]
        %v600 = vld [vmem:[#allocation11 + $0x58] sm:$0xff]
        %v601 = vld [vmem:[#allocation11 + $0x60] sm:$0xff]
        %v602 = vld [vmem:[#allocation11 + $0x68] sm:$0xff]
        %v603 = vld [vmem:[#allocation11 + $0x70] sm:$0xff]
        %v604 = vld [vmem:[#allocation11 + $0x78] sm:$0xff]
        %v605 = vld [vmem:[#allocation11 + $0x80] sm:$0xff]
        %v606 = vld [vmem:[#allocation11 + $0x88] sm:$0xff]
        %v607 = vld [vmem:[#allocation11 + $0x90] sm:$0xff]
        %v608 = vld [vmem:[#allocation11 + $0x98] sm:$0xff]
        %v609 = vld [vmem:[#allocation11 + $0xa0] sm:$0xff]
        %v610 = vld [vmem:[#allocation11 + $0xa8] sm:$0xff]
        %v611 = vld [vmem:[#allocation11 + $0xb0] sm:$0xff]
        %v612 = vld [vmem:[#allocation11 + $0xb8] sm:$0xff]
        %v613 = vld [vmem:[#allocation11 + $0xc0] sm:$0xff]
        %v614 = vld [vmem:[#allocation11 + $0xc8] sm:$0xff]
        %v615 = vld [vmem:[#allocation11 + $0xd0] sm:$0xff]
        %v616 = vld [vmem:[#allocation11 + $0xd8] sm:$0xff]
        %v617 = vld [vmem:[#allocation11 + $0xe0] sm:$0xff]
        %v618 = vld [vmem:[#allocation11 + $0xe8] sm:$0xff]
        %v619 = vld [vmem:[#allocation11 + $0xf0] sm:$0xff]
        %v620 = vld [vmem:[#allocation11 + $0xf8] sm:$0xff]
        %v621 = vld [vmem:[#allocation2 + $0x7] sm:$0xff]
        %v622 = vld [vmem:[#allocation2 + $0xf] sm:$0xff]
        %v623 = vld [vmem:[#allocation2 + $0x17] sm:$0xff]
        %v624 = vld [vmem:[#allocation2 + $0x1f] sm:$0xff]
        %v625 = vld [vmem:[#allocation2 + $0x27] sm:$0xff]
        %v626 = vld [vmem:[#allocation2 + $0x2f] sm:$0xff]
        %v627 = vld [vmem:[#allocation2 + $0x37] sm:$0xff]
        %v628 = vld [vmem:[#allocation2 + $0x3f] sm:$0xff]
        %v629 = vld [vmem:[#allocation2 + $0x47] sm:$0xff]
        %v630 = vld [vmem:[#allocation2 + $0x4f] sm:$0xff]
        %v631 = vld [vmem:[#allocation2 + $0x57] sm:$0xff]
        %v632 = vld [vmem:[#allocation2 + $0x5f] sm:$0xff]
        %v633 = vld [vmem:[#allocation2 + $0x67] sm:$0xff]
        %v634 = vld [vmem:[#allocation2 + $0x6f] sm:$0xff]
        %v635 = vld [vmem:[#allocation2 + $0x77] sm:$0xff]
        %v636 = vld [vmem:[#allocation2 + $0x7f] sm:$0xff]
        %v637 = vld [vmem:[#allocation2 + $0x87] sm:$0xff]
        %v638 = vld [vmem:[#allocation2 + $0x8f] sm:$0xff]
        %v639 = vld [vmem:[#allocation2 + $0x97] sm:$0xff]
        %v640 = vld [vmem:[#allocation2 + $0x9f] sm:$0xff]
        %v641 = vld [vmem:[#allocation2 + $0xa7] sm:$0xff]
        %v642 = vld [vmem:[#allocation2 + $0xaf] sm:$0xff]
        %v643 = vld [vmem:[#allocation2 + $0xb7] sm:$0xff]
        %v644 = vld [vmem:[#allocation2 + $0xbf] sm:$0xff]
        %v645 = vld [vmem:[#allocation2 + $0xc7] sm:$0xff]
        %v646 = vld [vmem:[#allocation2 + $0xcf] sm:$0xff]
        %v647 = vld [vmem:[#allocation2 + $0xd7] sm:$0xff]
        %v648 = vld [vmem:[#allocation2 + $0xdf] sm:$0xff]
        %v649 = vld [vmem:[#allocation2 + $0xe7] sm:$0xff]
        %v650 = vld [vmem:[#allocation2 + $0xef] sm:$0xff]
        %v651 = vld [vmem:[#allocation2 + $0xf7] sm:$0xff]
        %v652 = vld [vmem:[#allocation2 + $0xff] sm:$0xff]
        %v653 = vmul.f32 %v621, %v557
        %v654 = vmul.f32 %v622, %v558
        %v655 = vmul.f32 %v623, %v559
        %v656 = vmul.f32 %v624, %v560
        %v657 = vmul.f32 %v625, %v561
        %v658 = vmul.f32 %v626, %v562
        %v659 = vmul.f32 %v627, %v563
        %v660 = vmul.f32 %v628, %v564
        %v661 = vmul.f32 %v629, %v565
        %v662 = vmul.f32 %v630, %v566
        %v663 = vmul.f32 %v631, %v567
        %v664 = vmul.f32 %v632, %v568
        %v665 = vmul.f32 %v633, %v569
        %v666 = vmul.f32 %v634, %v570
        %v667 = vmul.f32 %v635, %v571
        %v668 = vmul.f32 %v636, %v572
        %v669 = vmul.f32 %v637, %v573
        %v670 = vmul.f32 %v638, %v574
        %v671 = vmul.f32 %v639, %v575
        %v672 = vmul.f32 %v640, %v576
        %v673 = vmul.f32 %v641, %v577
        %v674 = vmul.f32 %v642, %v578
        %v675 = vmul.f32 %v643, %v579
        %v676 = vmul.f32 %v644, %v580
        %v677 = vmul.f32 %v645, %v581
        %v678 = vmul.f32 %v646, %v582
        %v679 = vmul.f32 %v647, %v583
        %v680 = vmul.f32 %v648, %v584
        %v681 = vmul.f32 %v649, %v585
        %v682 = vmul.f32 %v650, %v586
        %v683 = vmul.f32 %v651, %v587
        %v684 = vmul.f32 %v652, %v588
        %v685 = vld [vmem:[#allocation2 + $0x8] sm:$0xff]
        %v686 = vld [vmem:[#allocation2 + $0x10] sm:$0xff]
        %v687 = vld [vmem:[#allocation2 + $0x18] sm:$0xff]
        %v688 = vld [vmem:[#allocation2 + $0x20] sm:$0xff]
        %v689 = vld [vmem:[#allocation2 + $0x28] sm:$0xff]
        %v690 = vld [vmem:[#allocation2 + $0x30] sm:$0xff]
        %v691 = vld [vmem:[#allocation2 + $0x38] sm:$0xff]
        %v692 = vld [vmem:[#allocation2 + $0x40] sm:$0xff]
        %v693 = vld [vmem:[#allocation2 + $0x48] sm:$0xff]
        %v694 = vld [vmem:[#allocation2 + $0x50] sm:$0xff]
        %v695 = vld [vmem:[#allocation2 + $0x58] sm:$0xff]
        %v696 = vld [vmem:[#allocation2 + $0x60] sm:$0xff]
        %v697 = vld [vmem:[#allocation2 + $0x68] sm:$0xff]
        %v698 = vld [vmem:[#allocation2 + $0x70] sm:$0xff]
        %v699 = vld [vmem:[#allocation2 + $0x78] sm:$0xff]
        %v700 = vld [vmem:[#allocation2 + $0x80] sm:$0xff]
        %v701 = vld [vmem:[#allocation2 + $0x88] sm:$0xff]
        %v702 = vld [vmem:[#allocation2 + $0x90] sm:$0xff]
        %v703 = vld [vmem:[#allocation2 + $0x98] sm:$0xff]
        %v704 = vld [vmem:[#allocation2 + $0xa0] sm:$0xff]
        %v705 = vld [vmem:[#allocation2 + $0xa8] sm:$0xff]
        %v706 = vld [vmem:[#allocation2 + $0xb0] sm:$0xff]
        %v707 = vld [vmem:[#allocation2 + $0xb8] sm:$0xff]
        %v708 = vld [vmem:[#allocation2 + $0xc0] sm:$0xff]
        %v709 = vld [vmem:[#allocation2 + $0xc8] sm:$0xff]
        %v710 = vld [vmem:[#allocation2 + $0xd0] sm:$0xff]
        %v711 = vld [vmem:[#allocation2 + $0xd8] sm:$0xff]
        %v712 = vld [vmem:[#allocation2 + $0xe0] sm:$0xff]
        %v713 = vld [vmem:[#allocation2 + $0xe8] sm:$0xff]
        %v714 = vld [vmem:[#allocation2 + $0xf0] sm:$0xff]
        %v715 = vld [vmem:[#allocation2 + $0xf8] sm:$0xff]
        %v716 = vld [vmem:[#allocation2 + $0x100] sm:$0xff]
        %v717 = vld [vmem:[#allocation2 + $0x9] sm:$0xff]
        %v718 = vld [vmem:[#allocation2 + $0x11] sm:$0xff]
        %v719 = vld [vmem:[#allocation2 + $0x19] sm:$0xff]
        %v720 = vld [vmem:[#allocation2 + $0x21] sm:$0xff]
        %v721 = vld [vmem:[#allocation2 + $0x29] sm:$0xff]
        %v722 = vld [vmem:[#allocation2 + $0x31] sm:$0xff]
        %v723 = vld [vmem:[#allocation2 + $0x39] sm:$0xff]
        %v724 = vld [vmem:[#allocation2 + $0x41] sm:$0xff]
        %v725 = vld [vmem:[#allocation2 + $0x49] sm:$0xff]
        %v726 = vld [vmem:[#allocation2 + $0x51] sm:$0xff]
        %v727 = vld [vmem:[#allocation2 + $0x59] sm:$0xff]
        %v728 = vld [vmem:[#allocation2 + $0x61] sm:$0xff]
        %v729 = vld [vmem:[#allocation2 + $0x69] sm:$0xff]
        %v730 = vld [vmem:[#allocation2 + $0x71] sm:$0xff]
        %v731 = vld [vmem:[#allocation2 + $0x79] sm:$0xff]
        %v732 = vld [vmem:[#allocation2 + $0x81] sm:$0xff]
        %v733 = vld [vmem:[#allocation2 + $0x89] sm:$0xff]
        %v734 = vld [vmem:[#allocation2 + $0x91] sm:$0xff]
        %v735 = vld [vmem:[#allocation2 + $0x99] sm:$0xff]
        %v736 = vld [vmem:[#allocation2 + $0xa1] sm:$0xff]
        %v737 = vld [vmem:[#allocation2 + $0xa9] sm:$0xff]
        %v738 = vld [vmem:[#allocation2 + $0xb1] sm:$0xff]
        %v739 = vld [vmem:[#allocation2 + $0xb9] sm:$0xff]
        %v740 = vld [vmem:[#allocation2 + $0xc1] sm:$0xff]
        %v741 = vld [vmem:[#allocation2 + $0xc9] sm:$0xff]
        %v742 = vld [vmem:[#allocation2 + $0xd1] sm:$0xff]
        %v743 = vld [vmem:[#allocation2 + $0xd9] sm:$0xff]
        %v744 = vld [vmem:[#allocation2 + $0xe1] sm:$0xff]
        %v745 = vld [vmem:[#allocation2 + $0xe9] sm:$0xff]
        %v746 = vld [vmem:[#allocation2 + $0xf1] sm:$0xff]
        %v747 = vld [vmem:[#allocation2 + $0xf9] sm:$0xff]
        %v748 = vld [vmem:[#allocation2 + $0x101] sm:$0xff]
        %v749 = vmul.f32 %v717, %v589
        %v750 = vmul.f32 %v718, %v590
        %v751 = vmul.f32 %v719, %v591
        %v752 = vmul.f32 %v720, %v592
        %v753 = vmul.f32 %v721, %v593
        %v754 = vmul.f32 %v722, %v594
        %v755 = vmul.f32 %v723, %v595
        %v756 = vmul.f32 %v724, %v596
        %v757 = vmul.f32 %v725, %v597
        %v758 = vmul.f32 %v726, %v598
        %v759 = vmul.f32 %v727, %v599
        %v760 = vmul.f32 %v728, %v600
        %v761 = vmul.f32 %v729, %v601
        %v762 = vmul.f32 %v730, %v602
        %v763 = vmul.f32 %v731, %v603
        %v764 = vmul.f32 %v732, %v604
        %v765 = vmul.f32 %v733, %v605
        %v766 = vmul.f32 %v734, %v606
        %v767 = vmul.f32 %v735, %v607
        %v768 = vmul.f32 %v736, %v608
        %v769 = vmul.f32 %v737, %v609
        %v770 = vmul.f32 %v738, %v610
        %v771 = vmul.f32 %v739, %v611
        %v772 = vmul.f32 %v740, %v612
        %v773 = vmul.f32 %v741, %v613
        %v774 = vmul.f32 %v742, %v614
        %v775 = vmul.f32 %v743, %v615
        %v776 = vmul.f32 %v744, %v616
        %v777 = vmul.f32 %v745, %v617
        %v778 = vmul.f32 %v746, %v618
        %v779 = vmul.f32 %v747, %v619
        %v780 = vmul.f32 %v748, %v620
        %v781 = vld [vmem:[#allocation2 + $0x107] sm:$0xff]
        %v782 = vld [vmem:[#allocation2 + $0x10f] sm:$0xff]
        %v783 = vmul.f32 %v623, %v557
        %v784 = vmul.f32 %v624, %v558
        %v785 = vmul.f32 %v625, %v559
        %v786 = vmul.f32 %v626, %v560
        %v787 = vmul.f32 %v627, %v561
        %v788 = vmul.f32 %v628, %v562
        %v789 = vmul.f32 %v629, %v563
        %v790 = vmul.f32 %v630, %v564
        %v791 = vmul.f32 %v631, %v565
        %v792 = vmul.f32 %v632, %v566
        %v793 = vmul.f32 %v633, %v567
        %v794 = vmul.f32 %v634, %v568
        %v795 = vmul.f32 %v635, %v569
        %v796 = vmul.f32 %v636, %v570
        %v797 = vmul.f32 %v637, %v571
        %v798 = vmul.f32 %v638, %v572
        %v799 = vmul.f32 %v639, %v573
        %v800 = vmul.f32 %v640, %v574
        %v801 = vmul.f32 %v641, %v575
        %v802 = vmul.f32 %v642, %v576
        %v803 = vmul.f32 %v643, %v577
        %v804 = vmul.f32 %v644, %v578
        %v805 = vmul.f32 %v645, %v579
        %v806 = vmul.f32 %v646, %v580
        %v807 = vmul.f32 %v647, %v581
        %v808 = vmul.f32 %v648, %v582
        %v809 = vmul.f32 %v649, %v583
        %v810 = vmul.f32 %v650, %v584
        %v811 = vmul.f32 %v651, %v585
        %v812 = vmul.f32 %v652, %v586
        %v813 = vmul.f32 %v781, %v587
        %v814 = vmul.f32 %v782, %v588
        %v815 = vld [vmem:[#allocation2 + $0x108] sm:$0xff]
        %v816 = vld [vmem:[#allocation2 + $0x110] sm:$0xff]
        %v817 = vld [vmem:[#allocation2 + $0x109] sm:$0xff]
        %v818 = vld [vmem:[#allocation2 + $0x111] sm:$0xff]
        %v819 = vmul.f32 %v719, %v589
        %v820 = vmul.f32 %v720, %v590
        %v821 = vmul.f32 %v721, %v591
        %v822 = vmul.f32 %v722, %v592
        %v823 = vmul.f32 %v723, %v593
        %v824 = vmul.f32 %v724, %v594
        %v825 = vmul.f32 %v725, %v595
        %v826 = vmul.f32 %v726, %v596
        %v827 = vmul.f32 %v727, %v597
        %v828 = vmul.f32 %v728, %v598
        %v829 = vmul.f32 %v729, %v599
        %v830 = vmul.f32 %v730, %v600
        %v831 = vmul.f32 %v731, %v601
        %v832 = vmul.f32 %v732, %v602
        %v833 = vmul.f32 %v733, %v603
        %v834 = vmul.f32 %v734, %v604
        %v835 = vmul.f32 %v735, %v605
        %v836 = vmul.f32 %v736, %v606
        %v837 = vmul.f32 %v737, %v607
        %v838 = vmul.f32 %v738, %v608
        %v839 = vmul.f32 %v739, %v609
        %v840 = vmul.f32 %v740, %v610
        %v841 = vmul.f32 %v741, %v611
        %v842 = vmul.f32 %v742, %v612
        %v843 = vmul.f32 %v743, %v613
        %v844 = vmul.f32 %v744, %v614
        %v845 = vmul.f32 %v745, %v615
        %v846 = vmul.f32 %v746, %v616
        %v847 = vmul.f32 %v747, %v617
        %v848 = vmul.f32 %v748, %v618
        %v849 = vmul.f32 %v817, %v619
        %v850 = vmul.f32 %v818, %v620
        %v851 = vld [vmem:[#allocation2 + $0x117] sm:$0xff]
        %v852 = vld [vmem:[#allocation2 + $0x11f] sm:$0xff]
        %v853 = vmul.f32 %v625, %v557
        %v854 = vmul.f32 %v626, %v558
        %v855 = vmul.f32 %v627, %v559
        %v856 = vmul.f32 %v628, %v560
        %v857 = vmul.f32 %v629, %v561
        %v858 = vmul.f32 %v630, %v562
        %v859 = vmul.f32 %v631, %v563
        %v860 = vmul.f32 %v632, %v564
        %v861 = vmul.f32 %v633, %v565
        %v862 = vmul.f32 %v634, %v566
        %v863 = vmul.f32 %v635, %v567
        %v864 = vmul.f32 %v636, %v568
        %v865 = vmul.f32 %v637, %v569
        %v866 = vmul.f32 %v638, %v570
        %v867 = vmul.f32 %v639, %v571
        %v868 = vmul.f32 %v640, %v572
        %v869 = vmul.f32 %v641, %v573
        %v870 = vmul.f32 %v642, %v574
        %v871 = vmul.f32 %v643, %v575
        %v872 = vmul.f32 %v644, %v576
        %v873 = vmul.f32 %v645, %v577
        %v874 = vmul.f32 %v646, %v578
        %v875 = vmul.f32 %v647, %v579
        %v876 = vmul.f32 %v648, %v580
        %v877 = vmul.f32 %v649, %v581
        %v878 = vmul.f32 %v650, %v582
        %v879 = vmul.f32 %v651, %v583
        %v880 = vmul.f32 %v652, %v584
        %v881 = vmul.f32 %v781, %v585
        %v882 = vmul.f32 %v782, %v586
        %v883 = vmul.f32 %v851, %v587
        %v884 = vmul.f32 %v852, %v588
        %v885 = vld [vmem:[#allocation2 + $0x118] sm:$0xff]
        %v886 = vld [vmem:[#allocation2 + $0x120] sm:$0xff]
        %v887 = vld [vmem:[#allocation2 + $0x119] sm:$0xff]
        %v888 = vld [vmem:[#allocation2 + $0x121] sm:$0xff]
        %v889 = vmul.f32 %v721, %v589
        %v890 = vmul.f32 %v722, %v590
        %v891 = vmul.f32 %v723, %v591
        %v892 = vmul.f32 %v724, %v592
        %v893 = vmul.f32 %v725, %v593
        %v894 = vmul.f32 %v726, %v594
        %v895 = vmul.f32 %v727, %v595
        %v896 = vmul.f32 %v728, %v596
        %v897 = vmul.f32 %v729, %v597
        %v898 = vmul.f32 %v730, %v598
        %v899 = vmul.f32 %v731, %v599
        %v900 = vmul.f32 %v732, %v600
        %v901 = vmul.f32 %v733, %v601
        %v902 = vmul.f32 %v734, %v602
        %v903 = vmul.f32 %v735, %v603
        %v904 = vmul.f32 %v736, %v604
        %v905 = vmul.f32 %v737, %v605
        %v906 = vmul.f32 %v738, %v606
        %v907 = vmul.f32 %v739, %v607
        %v908 = vmul.f32 %v740, %v608
        %v909 = vmul.f32 %v741, %v609
        %v910 = vmul.f32 %v742, %v610
        %v911 = vmul.f32 %v743, %v611
        %v912 = vmul.f32 %v744, %v612
        %v913 = vmul.f32 %v745, %v613
        %v914 = vmul.f32 %v746, %v614
        %v915 = vmul.f32 %v747, %v615
        %v916 = vmul.f32 %v748, %v616
        %v917 = vmul.f32 %v817, %v617
        %v918 = vmul.f32 %v818, %v618
        %v919 = vmul.f32 %v887, %v619
        %v920 = vmul.f32 %v888, %v620
        %v921 = vld [vmem:[#allocation12] sm:$0xff]
        %v922 = vld [vmem:[#allocation12 + $0x8] sm:$0xff]
        %v923 = vld [vmem:[#allocation12 + $0x10] sm:$0xff]
        %v924 = vld [vmem:[#allocation12 + $0x18] sm:$0xff]
        %v925 = vld [vmem:[#allocation12 + $0x20] sm:$0xff]
        %v926 = vld [vmem:[#allocation12 + $0x28] sm:$0xff]
        %v927 = vld [vmem:[#allocation12 + $0x30] sm:$0xff]
        %v928 = vld [vmem:[#allocation12 + $0x38] sm:$0xff]
        %v929 = vld [vmem:[#allocation12 + $0x40] sm:$0xff]
        %v930 = vld [vmem:[#allocation12 + $0x48] sm:$0xff]
        %v931 = vld [vmem:[#allocation12 + $0x50] sm:$0xff]
        %v932 = vld [vmem:[#allocation12 + $0x58] sm:$0xff]
        %v933 = vld [vmem:[#allocation12 + $0x60] sm:$0xff]
        %v934 = vld [vmem:[#allocation12 + $0x68] sm:$0xff]
        %v935 = vld [vmem:[#allocation12 + $0x70] sm:$0xff]
        %v936 = vld [vmem:[#allocation12 + $0x78] sm:$0xff]
        %v937 = vld [vmem:[#allocation12 + $0x80] sm:$0xff]
        %v938 = vld [vmem:[#allocation12 + $0x88] sm:$0xff]
        %v939 = vld [vmem:[#allocation12 + $0x90] sm:$0xff]
        %v940 = vld [vmem:[#allocation12 + $0x98] sm:$0xff]
        %v941 = vld [vmem:[#allocation12 + $0xa0] sm:$0xff]
        %v942 = vld [vmem:[#allocation12 + $0xa8] sm:$0xff]
        %v943 = vld [vmem:[#allocation12 + $0xb0] sm:$0xff]
        %v944 = vld [vmem:[#allocation12 + $0xb8] sm:$0xff]
        %v945 = vld [vmem:[#allocation12 + $0xc0] sm:$0xff]
        %v946 = vld [vmem:[#allocation12 + $0xc8] sm:$0xff]
        %v947 = vld [vmem:[#allocation12 + $0xd0] sm:$0xff]
        %v948 = vld [vmem:[#allocation12 + $0xd8] sm:$0xff]
        %v949 = vld [vmem:[#allocation12 + $0xe0] sm:$0xff]
        %v950 = vld [vmem:[#allocation12 + $0xe8] sm:$0xff]
        %v951 = vld [vmem:[#allocation12 + $0xf0] sm:$0xff]
        %v952 = vld [vmem:[#allocation12 + $0xf8] sm:$0xff]
        %v953 = vld [vmem:[#allocation12 + $0x100] sm:$0xff]
        %v954 = vld [vmem:[#allocation12 + $0x108] sm:$0xff]
        %v955 = vld [vmem:[#allocation12 + $0x110] sm:$0xff]
        %v956 = vld [vmem:[#allocation12 + $0x118] sm:$0xff]
        %v957 = vld [vmem:[#allocation12 + $0x120] sm:$0xff]
        %v958 = vld [vmem:[#allocation12 + $0x128] sm:$0xff]
        %v959 = vld [vmem:[#allocation12 + $0x130] sm:$0xff]
        %v960 = vld [vmem:[#allocation12 + $0x138] sm:$0xff]
        %v961 = vld [vmem:[#allocation12 + $0x140] sm:$0xff]
        %v962 = vld [vmem:[#allocation12 + $0x148] sm:$0xff]
        %v963 = vld [vmem:[#allocation12 + $0x150] sm:$0xff]
        %v964 = vld [vmem:[#allocation12 + $0x158] sm:$0xff]
        %v965 = vld [vmem:[#allocation12 + $0x160] sm:$0xff]
        %v966 = vld [vmem:[#allocation12 + $0x168] sm:$0xff]
        %v967 = vld [vmem:[#allocation12 + $0x170] sm:$0xff]
        %v968 = vld [vmem:[#allocation12 + $0x178] sm:$0xff]
        %v969 = vld [vmem:[#allocation12 + $0x180] sm:$0xff]
        %v970 = vld [vmem:[#allocation12 + $0x188] sm:$0xff]
        %v971 = vld [vmem:[#allocation12 + $0x190] sm:$0xff]
        %v972 = vld [vmem:[#allocation12 + $0x198] sm:$0xff]
        %v973 = vld [vmem:[#allocation12 + $0x1a0] sm:$0xff]
        %v974 = vld [vmem:[#allocation12 + $0x1a8] sm:$0xff]
        %v975 = vld [vmem:[#allocation12 + $0x1b0] sm:$0xff]
        %v976 = vld [vmem:[#allocation12 + $0x1b8] sm:$0xff]
        %v977 = vld [vmem:[#allocation12 + $0x1c0] sm:$0xff]
        %v978 = vld [vmem:[#allocation12 + $0x1c8] sm:$0xff]
        %v979 = vld [vmem:[#allocation12 + $0x1d0] sm:$0xff]
        %v980 = vld [vmem:[#allocation12 + $0x1d8] sm:$0xff]
        %v981 = vld [vmem:[#allocation12 + $0x1e0] sm:$0xff]
        %v982 = vld [vmem:[#allocation12 + $0x1e8] sm:$0xff]
        %v983 = vld [vmem:[#allocation12 + $0x1f0] sm:$0xff]
        %v984 = vld [vmem:[#allocation12 + $0x1f8] sm:$0xff]
        %v985 = vld [vmem:[#allocation12 + $0x200] sm:$0xff]
        %v986 = vld [vmem:[#allocation12 + $0x208] sm:$0xff]
        %v987 = vld [vmem:[#allocation12 + $0x210] sm:$0xff]
        %v988 = vld [vmem:[#allocation12 + $0x218] sm:$0xff]
        %v989 = vld [vmem:[#allocation12 + $0x220] sm:$0xff]
        %v990 = vld [vmem:[#allocation12 + $0x228] sm:$0xff]
        %v991 = vld [vmem:[#allocation12 + $0x230] sm:$0xff]
        %v992 = vld [vmem:[#allocation12 + $0x238] sm:$0xff]
        %v993 = vld [vmem:[#allocation12 + $0x240] sm:$0xff]
        %v994 = vld [vmem:[#allocation12 + $0x248] sm:$0xff]
        %v995 = vld [vmem:[#allocation12 + $0x250] sm:$0xff]
        %v996 = vld [vmem:[#allocation12 + $0x258] sm:$0xff]
        %v997 = vld [vmem:[#allocation12 + $0x260] sm:$0xff]
        %v998 = vld [vmem:[#allocation12 + $0x268] sm:$0xff]
        %v999 = vld [vmem:[#allocation12 + $0x270] sm:$0xff]
        %v1000 = vld [vmem:[#allocation12 + $0x278] sm:$0xff]
        %v1001 = vld [vmem:[#allocation12 + $0x280] sm:$0xff]
        %v1002 = vld [vmem:[#allocation12 + $0x288] sm:$0xff]
        %v1003 = vld [vmem:[#allocation12 + $0x290] sm:$0xff]
        %v1004 = vld [vmem:[#allocation12 + $0x298] sm:$0xff]
        %v1005 = vld [vmem:[#allocation12 + $0x2a0] sm:$0xff]
        %v1006 = vld [vmem:[#allocation12 + $0x2a8] sm:$0xff]
        %v1007 = vld [vmem:[#allocation12 + $0x2b0] sm:$0xff]
        %v1008 = vld [vmem:[#allocation12 + $0x2b8] sm:$0xff]
        %v1009 = vld [vmem:[#allocation12 + $0x2c0] sm:$0xff]
        %v1010 = vld [vmem:[#allocation12 + $0x2c8] sm:$0xff]
        %v1011 = vld [vmem:[#allocation12 + $0x2d0] sm:$0xff]
        %v1012 = vld [vmem:[#allocation12 + $0x2d8] sm:$0xff]
        %v1013 = vld [vmem:[#allocation12 + $0x2e0] sm:$0xff]
        %v1014 = vld [vmem:[#allocation12 + $0x2e8] sm:$0xff]
        %v1015 = vld [vmem:[#allocation12 + $0x2f0] sm:$0xff]
        %v1016 = vld [vmem:[#allocation12 + $0x2f8] sm:$0xff]
        %v1017 = vld [vmem:[#allocation12 + $0x300] sm:$0xff]
        %v1018 = vld [vmem:[#allocation12 + $0x308] sm:$0xff]
        %v1019 = vld [vmem:[#allocation12 + $0x310] sm:$0xff]
        %v1020 = vld [vmem:[#allocation12 + $0x318] sm:$0xff]
        %v1021 = vld [vmem:[#allocation12 + $0x320] sm:$0xff]
        %v1022 = vld [vmem:[#allocation12 + $0x328] sm:$0xff]
        %v1023 = vld [vmem:[#allocation12 + $0x330] sm:$0xff]
        %v1024 = vld [vmem:[#allocation12 + $0x338] sm:$0xff]
        %v1025 = vld [vmem:[#allocation12 + $0x340] sm:$0xff]
        %v1026 = vld [vmem:[#allocation12 + $0x348] sm:$0xff]
        %v1027 = vld [vmem:[#allocation12 + $0x350] sm:$0xff]
        %v1028 = vld [vmem:[#allocation12 + $0x358] sm:$0xff]
        %v1029 = vld [vmem:[#allocation12 + $0x360] sm:$0xff]
        %v1030 = vld [vmem:[#allocation12 + $0x368] sm:$0xff]
        %v1031 = vld [vmem:[#allocation12 + $0x370] sm:$0xff]
        %v1032 = vld [vmem:[#allocation12 + $0x378] sm:$0xff]
        %v1033 = vld [vmem:[#allocation12 + $0x380] sm:$0xff]
        %v1034 = vld [vmem:[#allocation12 + $0x388] sm:$0xff]
        %v1035 = vld [vmem:[#allocation12 + $0x390] sm:$0xff]
        %v1036 = vld [vmem:[#allocation12 + $0x398] sm:$0xff]
        %v1037 = vld [vmem:[#allocation12 + $0x3a0] sm:$0xff]
        %v1038 = vld [vmem:[#allocation12 + $0x3a8] sm:$0xff]
        %v1039 = vld [vmem:[#allocation12 + $0x3b0] sm:$0xff]
        %v1040 = vld [vmem:[#allocation12 + $0x3b8] sm:$0xff]
        %v1041 = vld [vmem:[#allocation12 + $0x3c0] sm:$0xff]
        %v1042 = vld [vmem:[#allocation12 + $0x3c8] sm:$0xff]
        %v1043 = vld [vmem:[#allocation12 + $0x3d0] sm:$0xff]
        %v1044 = vld [vmem:[#allocation12 + $0x3d8] sm:$0xff]
        %v1045 = vld [vmem:[#allocation12 + $0x3e0] sm:$0xff]
        %v1046 = vld [vmem:[#allocation12 + $0x3e8] sm:$0xff]
        %v1047 = vld [vmem:[#allocation12 + $0x3f0] sm:$0xff]
        %v1048 = vld [vmem:[#allocation12 + $0x3f8] sm:$0xff]
        %v1049 = vld [vmem:[#allocation12 + $0x400] sm:$0xff]
        %v1050 = vld [vmem:[#allocation12 + $0x408] sm:$0xff]
        %v1051 = vld [vmem:[#allocation12 + $0x410] sm:$0xff]
        %v1052 = vld [vmem:[#allocation12 + $0x418] sm:$0xff]
        %v1053 = vld [vmem:[#allocation12 + $0x420] sm:$0xff]
        %v1054 = vld [vmem:[#allocation12 + $0x428] sm:$0xff]
        %v1055 = vld [vmem:[#allocation12 + $0x430] sm:$0xff]
        %v1056 = vld [vmem:[#allocation12 + $0x438] sm:$0xff]
        %v1057 = vld [vmem:[#allocation12 + $0x440] sm:$0xff]
        %v1058 = vld [vmem:[#allocation12 + $0x448] sm:$0xff]
        %v1059 = vld [vmem:[#allocation12 + $0x450] sm:$0xff]
        %v1060 = vld [vmem:[#allocation12 + $0x458] sm:$0xff]
        %v1061 = vld [vmem:[#allocation12 + $0x460] sm:$0xff]
        %v1062 = vld [vmem:[#allocation12 + $0x468] sm:$0xff]
        %v1063 = vld [vmem:[#allocation12 + $0x470] sm:$0xff]
        %v1064 = vld [vmem:[#allocation12 + $0x478] sm:$0xff]
        %1065 = vmatprep.subr.mxu0 0.0
        %1066 = vmatpush1.msra.mxu0 %v921
        %1067 = vmatprep.subr.mxu0 0.0
        %1068 = vmatpush1.msra.mxu0 %v922
        %1069 = vmatprep.subr.mxu0 0.0
        %1070 = vmatpush1.msra.mxu0 %v923
        %1071 = vmatprep.subr.mxu0 0.0
        %1072 = vmatpush1.msra.mxu0 %v924
        %1073 = vmatprep.subr.mxu0 0.0
        %1074 = vmatpush1.msra.mxu0 %v925
        %1075 = vmatprep.subr.mxu0 0.0
        %1076 = vmatpush1.msra.mxu0 %v926
        %1077 = vmatprep.subr.mxu0 0.0
        %1078 = vmatpush1.msra.mxu0 %v927
        %1079 = vmatprep.subr.mxu0 0.0
        %1080 = vmatpush1.msra.mxu0 %v928
        %1081 = vmatprep.subr.mxu0 0.0
        %1082 = vmatpush1.msra.mxu0 %v929
        %1083 = vmatprep.subr.mxu0 0.0
        %1084 = vmatpush1.msra.mxu0 %v930
        %1085 = vmatprep.subr.mxu0 0.0
        %1086 = vmatpush1.msra.mxu0 %v931
        %1087 = vmatprep.subr.mxu0 0.0
        %1088 = vmatpush1.msra.mxu0 %v932
        %1089 = vmatprep.subr.mxu0 0.0
        %1090 = vmatpush1.msra.mxu0 %v933
        %1091 = vmatprep.subr.mxu0 0.0
        %1092 = vmatpush1.msra.mxu0 %v934
        %1093 = vmatprep.subr.mxu0 0.0
        %1094 = vmatpush1.msra.mxu0 %v935
        %1095 = vmatprep.subr.mxu0 0.0
        %1096 = vmatpush1.msra.mxu0 %v936
        %1097 = vmatprep.subr.mxu0 0.0
        %1098 = vmatpush1.msra.mxu0 %v937
        %1099 = vmatprep.subr.mxu0 0.0
        %1100 = vmatpush1.msra.mxu0 %v938
        %1101 = vmatprep.subr.mxu0 0.0
        %1102 = vmatpush1.msra.mxu0 %v939
        %1103 = vmatprep.subr.mxu0 0.0
        %1104 = vmatpush1.msra.mxu0 %v940
        %1105 = vmatprep.subr.mxu0 0.0
        %1106 = vmatpush1.msra.mxu0 %v941
        %1107 = vmatprep.subr.mxu0 0.0
        %1108 = vmatpush1.msra.mxu0 %v942
        %1109 = vmatprep.subr.mxu0 0.0
        %1110 = vmatpush1.msra.mxu0 %v943
        %1111 = vmatprep.subr.mxu0 0.0
        %1112 = vmatpush1.msra.mxu0 %v944
        %1113 = vmatprep.subr.mxu0 0.0
        %1114 = vmatpush1.msra.mxu0 %v945
        %1115 = vmatprep.subr.mxu0 0.0
        %1116 = vmatpush1.msra.mxu0 %v946
        %1117 = vmatprep.subr.mxu0 0.0
        %1118 = vmatpush1.msra.mxu0 %v947
        %1119 = vmatprep.subr.mxu0 0.0
        %1120 = vmatpush1.msra.mxu0 %v948
        %1121 = vmatprep.subr.mxu0 0.0
        %1122 = vmatpush1.msra.mxu0 %v949
        %1123 = vmatprep.subr.mxu0 0.0
        %1124 = vmatpush1.msra.mxu0 %v950
        %1125 = vmatprep.subr.mxu0 0.0
        %1126 = vmatpush1.msra.mxu0 %v951
        %1127 = vmatprep.subr.mxu0 0.0
        %1128 = vmatpush1.msra.mxu0 %v952
        %1129 = vmatprep.mubr.f32.mxu0 %v685
        %1130 = vmatmul.mubr.f32.gmra.mrb[0].mxu0 %v653
        %v1131 = vpop.f32.mrb[0].mxu0
        %v1132 = vadd.f32 0.0, %v1131
        %v1133 = vpop.f32.mrb[0].mxu0
        %1134 = vmatprep.mubr.f32.mxu0 %v686
        %1135 = vmatmul.mubr.f32.gmra.mrb[0].mxu0 %v654
        %v1136 = vpop.f32.mrb[0].mxu0
        %v1137 = vadd.f32 0.0, %v1136
        %v1138 = vpop.f32.mrb[0].mxu0
        %1139 = vmatprep.mubr.f32.mxu0 %v687
        %1140 = vmatmul.mubr.f32.gmra.mrb[0].mxu0 %v655
        %v1141 = vpop.f32.mrb[0].mxu0
        %v1142 = vadd.f32 0.0, %v1141
        %v1143 = vpop.f32.mrb[0].mxu0
        %1144 = vmatprep.mubr.f32.mxu0 %v688
        %1145 = vmatmul.mubr.f32.gmra.mrb[0].mxu0 %v656
        %v1146 = vpop.f32.mrb[0].mxu0
        %v1147 = vadd.f32 0.0, %v1146
        %v1148 = vpop.f32.mrb[0].mxu0
        %1149 = vmatprep.mubr.f32.mxu0 %v689
        %1150 = vmatmul.mubr.f32.gmra.mrb[0].mxu0 %v657
        %v1151 = vpop.f32.mrb[0].mxu0
        %v1152 = vadd.f32 0.0, %v1151
        %v1153 = vpop.f32.mrb[0].mxu0
        %1154 = vmatprep.mubr.f32.mxu0 %v690
        %1155 = vmatmul.mubr.f32.gmra.mrb[0].mxu0 %v658
        %v1156 = vpop.f32.mrb[0].mxu0
        %v1157 = vadd.f32 0.0, %v1156
        %v1158 = vpop.f32.mrb[0].mxu0
        %1159 = vmatprep.mubr.f32.mxu0 %v691
        %1160 = vmatmul.mubr.f32.gmra.mrb[0].mxu0 %v659
        %v1161 = vpop.f32.mrb[0].mxu0
        %v1162 = vadd.f32 0.0, %v1161
        %v1163 = vpop.f32.mrb[0].mxu0
        %1164 = vmatprep.mubr.f32.mxu0 %v692
        %1165 = vmatmul.mubr.f32.gmra.mrb[0].mxu0 %v660
        %v1166 = vpop.f32.mrb[0].mxu0
        %v1167 = vadd.f32 0.0, %v1166
        %v1168 = vpop.f32.mrb[0].mxu0
        %1169 = vmatprep.mubr.f32.mxu0 %v693
        %1170 = vmatmul.mubr.f32.gmra.mrb[0].mxu0 %v661
        %v1171 = vpop.f32.mrb[0].mxu0
        %v1172 = vadd.f32 0.0, %v1171
        %v1173 = vpop.f32.mrb[0].mxu0
        %1174 = vmatprep.mubr.f32.mxu0 %v694
        %1175 = vmatmul.mubr.f32.gmra.mrb[0].mxu0 %v662
        %v1176 = vpop.f32.mrb[0].mxu0
        %v1177 = vadd.f32 0.0, %v1176
        %v1178 = vpop.f32.mrb[0].mxu0
        %1179 = vmatprep.mubr.f32.mxu0 %v695
        %1180 = vmatmul.mubr.f32.gmra.mrb[0].mxu0 %v663
        %v1181 = vpop.f32.mrb[0].mxu0
        %v1182 = vadd.f32 0.0, %v1181
        %v1183 = vpop.f32.mrb[0].mxu0
        %1184 = vmatprep.mubr.f32.mxu0 %v696
        %1185 = vmatmul.mubr.f32.gmra.mrb[0].mxu0 %v664
        %v1186 = vpop.f32.mrb[0].mxu0
        %v1187 = vadd.f32 0.0, %v1186
        %v1188 = vpop.f32.mrb[0].mxu0
        %1189 = vmatprep.mubr.f32.mxu0 %v697
        %1190 = vmatmul.mubr.f32.gmra.mrb[0].mxu0 %v665
        %v1191 = vpop.f32.mrb[0].mxu0
        %v1192 = vadd.f32 0.0, %v1191
        %v1193 = vpop.f32.mrb[0].mxu0
        %1194 = vmatprep.mubr.f32.mxu0 %v698
        %1195 = vmatmul.mubr.f32.gmra.mrb[0].mxu0 %v666
        %v1196 = vpop.f32.mrb[0].mxu0
        %v1197 = vadd.f32 0.0, %v1196
        %v1198 = vpop.f32.mrb[0].mxu0
        %1199 = vmatprep.mubr.f32.mxu0 %v699
        %1200 = vmatmul.mubr.f32.gmra.mrb[0].mxu0 %v667
        %v1201 = vpop.f32.mrb[0].mxu0
        %v1202 = vadd.f32 0.0, %v1201
        %v1203 = vpop.f32.mrb[0].mxu0
        %1204 = vmatprep.mubr.f32.mxu0 %v700
        %1205 = vmatmul.mubr.f32.gmra.mrb[0].mxu0 %v668
        %v1206 = vpop.f32.mrb[0].mxu0
        %v1207 = vadd.f32 0.0, %v1206
        %v1208 = vpop.f32.mrb[0].mxu0
        %1209 = vmatprep.mubr.f32.mxu0 %v701
        %1210 = vmatmul.mubr.f32.gmra.mrb[0].mxu0 %v669
        %v1211 = vpop.f32.mrb[0].mxu0
        %v1212 = vadd.f32 0.0, %v1211
        %v1213 = vpop.f32.mrb[0].mxu0
        %1214 = vmatprep.mubr.f32.mxu0 %v702
        %1215 = vmatmul.mubr.f32.gmra.mrb[0].mxu0 %v670
        %v1216 = vpop.f32.mrb[0].mxu0
        %v1217 = vadd.f32 0.0, %v1216
        %v1218 = vpop.f32.mrb[0].mxu0
        %1219 = vmatprep.mubr.f32.mxu0 %v703
        %1220 = vmatmul.mubr.f32.gmra.mrb[0].mxu0 %v671
        %v1221 = vpop.f32.mrb[0].mxu0
        %v1222 = vadd.f32 0.0, %v1221
        %v1223 = vpop.f32.mrb[0].mxu0
        %1224 = vmatprep.mubr.f32.mxu0 %v704
        %1225 = vmatmul.mubr.f32.gmra.mrb[0].mxu0 %v672
        %v1226 = vpop.f32.mrb[0].mxu0
        %v1227 = vadd.f32 0.0, %v1226
        %v1228 = vpop.f32.mrb[0].mxu0
        %1229 = vmatprep.mubr.f32.mxu0 %v705
        %1230 = vmatmul.mubr.f32.gmra.mrb[0].mxu0 %v673
        %v1231 = vpop.f32.mrb[0].mxu0
        %v1232 = vadd.f32 0.0, %v1231
        %v1233 = vpop.f32.mrb[0].mxu0
        %1234 = vmatprep.mubr.f32.mxu0 %v706
        %1235 = vmatmul.mubr.f32.gmra.mrb[0].mxu0 %v674
        %v1236 = vpop.f32.mrb[0].mxu0
        %v1237 = vadd.f32 0.0, %v1236
        %v1238 = vpop.f32.mrb[0].mxu0
        %1239 = vmatprep.mubr.f32.mxu0 %v707
        %1240 = vmatmul.mubr.f32.gmra.mrb[0].mxu0 %v675
        %v1241 = vpop.f32.mrb[0].mxu0
        %v1242 = vadd.f32 0.0, %v1241
        %v1243 = vpop.f32.mrb[0].mxu0
        %1244 = vmatprep.mubr.f32.mxu0 %v708
        %1245 = vmatmul.mubr.f32.gmra.mrb[0].mxu0 %v676
        %v1246 = vpop.f32.mrb[0].mxu0
        %v1247 = vadd.f32 0.0, %v1246
        %v1248 = vpop.f32.mrb[0].mxu0
        %1249 = vmatprep.mubr.f32.mxu0 %v709
        %1250 = vmatmul.mubr.f32.gmra.mrb[0].mxu0 %v677
        %v1251 = vpop.f32.mrb[0].mxu0
        %v1252 = vadd.f32 0.0, %v1251
        %v1253 = vpop.f32.mrb[0].mxu0
        %1254 = vmatprep.mubr.f32.mxu0 %v710
        %1255 = vmatmul.mubr.f32.gmra.mrb[0].mxu0 %v678
        %v1256 = vpop.f32.mrb[0].mxu0
        %v1257 = vadd.f32 0.0, %v1256
        %v1258 = vpop.f32.mrb[0].mxu0
        %1259 = vmatprep.mubr.f32.mxu0 %v711
        %1260 = vmatmul.mubr.f32.gmra.mrb[0].mxu0 %v679
        %v1261 = vpop.f32.mrb[0].mxu0
        %v1262 = vadd.f32 0.0, %v1261
        %v1263 = vpop.f32.mrb[0].mxu0
        %1264 = vmatprep.mubr.f32.mxu0 %v712
        %1265 = vmatmul.mubr.f32.gmra.mrb[0].mxu0 %v680
        %v1266 = vpop.f32.mrb[0].mxu0
        %v1267 = vadd.f32 0.0, %v1266
        %v1268 = vpop.f32.mrb[0].mxu0
        %1269 = vmatprep.mubr.f32.mxu0 %v713
        %1270 = vmatmul.mubr.f32.gmra.mrb[0].mxu0 %v681
        %v1271 = vpop.f32.mrb[0].mxu0
        %v1272 = vadd.f32 0.0, %v1271
        %v1273 = vpop.f32.mrb[0].mxu0
        %1274 = vmatprep.mubr.f32.mxu0 %v714
        %1275 = vmatmul.mubr.f32.gmra.mrb[0].mxu0 %v682
        %v1276 = vpop.f32.mrb[0].mxu0
        %v1277 = vadd.f32 0.0, %v1276
        %v1278 = vpop.f32.mrb[0].mxu0
        %1279 = vmatprep.mubr.f32.mxu0 %v715
        %1280 = vmatmul.mubr.f32.gmra.mrb[0].mxu0 %v683
        %v1281 = vpop.f32.mrb[0].mxu0
        %v1282 = vadd.f32 0.0, %v1281
        %v1283 = vpop.f32.mrb[0].mxu0
        %1284 = vmatprep.mubr.f32.mxu0 %v716
        %1285 = vmatmul.mubr.f32.gmra.mrb[0].mxu0 %v684
        %v1286 = vpop.f32.mrb[0].mxu0
        %v1287 = vadd.f32 0.0, %v1286
        %v1288 = vpop.f32.mrb[0].mxu0
        %1289 = vdwg.mxu0
        %1290 = vmatprep.subr.mxu0 0.0
        %1291 = vmatpush1.msra.mxu0 %v953
        %1292 = vmatprep.subr.mxu0 0.0
        %1293 = vmatpush1.msra.mxu0 %v954
        %1294 = vmatprep.subr.mxu0 0.0
        %1295 = vmatpush1.msra.mxu0 %v955
        %1296 = vmatprep.subr.mxu0 0.0
        %1297 = vmatpush1.msra.mxu0 %v956
        %1298 = vmatprep.subr.mxu0 0.0
        %1299 = vmatpush1.msra.mxu0 %v957
        %1300 = vmatprep.subr.mxu0 0.0
        %1301 = vmatpush1.msra.mxu0 %v958
        %1302 = vmatprep.subr.mxu0 0.0
        %1303 = vmatpush1.msra.mxu0 %v959
        %1304 = vmatprep.subr.mxu0 0.0
        %1305 = vmatpush1.msra.mxu0 %v960
        %1306 = vmatprep.subr.mxu0 0.0
        %1307 = vmatpush1.msra.mxu0 %v961
        %1308 = vmatprep.subr.mxu0 0.0
        %1309 = vmatpush1.msra.mxu0 %v962
        %1310 = vmatprep.subr.mxu0 0.0
        %1311 = vmatpush1.msra.mxu0 %v963
        %1312 = vmatprep.subr.mxu0 0.0
        %1313 = vmatpush1.msra.mxu0 %v964
        %1314 = vmatprep.subr.mxu0 0.0
        %1315 = vmatpush1.msra.mxu0 %v965
        %1316 = vmatprep.subr.mxu0 0.0
        %1317 = vmatpush1.msra.mxu0 %v966
        %1318 = vmatprep.subr.mxu0 0.0
        %1319 = vmatpush1.msra.mxu0 %v967
        %1320 = vmatprep.subr.mxu0 0.0
        %1321 = vmatpush1.msra.mxu0 %v968
        %1322 = vmatprep.subr.mxu0 0.0
        %1323 = vmatpush1.msra.mxu0 %v969
        %1324 = vmatprep.subr.mxu0 0.0
        %1325 = vmatpush1.msra.mxu0 %v970
        %1326 = vmatprep.subr.mxu0 0.0
        %1327 = vmatpush1.msra.mxu0 %v971
        %1328 = vmatprep.subr.mxu0 0.0
        %1329 = vmatpush1.msra.mxu0 %v972
        %1330 = vmatprep.subr.mxu0 0.0
        %1331 = vmatpush1.msra.mxu0 %v973
        %1332 = vmatprep.subr.mxu0 0.0
        %1333 = vmatpush1.msra.mxu0 %v974
        %1334 = vmatprep.subr.mxu0 0.0
        %1335 = vmatpush1.msra.mxu0 %v975
        %1336 = vmatprep.subr.mxu0 0.0
        %1337 = vmatpush1.msra.mxu0 %v976
        %1338 = vmatprep.subr.mxu0 0.0
        %1339 = vmatpush1.msra.mxu0 %v977
        %1340 = vmatprep.subr.mxu0 0.0
        %1341 = vmatpush1.msra.mxu0 %v978
        %1342 = vmatprep.subr.mxu0 0.0
        %1343 = vmatpush1.msra.mxu0 %v979
        %1344 = vmatprep.subr.mxu0 0.0
        %1345 = vmatpush1.msra.mxu0 %v980
        %1346 = vmatprep.subr.mxu0 0.0
        %1347 = vmatpush1.msra.mxu0 %v981
        %1348 = vmatprep.subr.mxu0 0.0
        %1349 = vmatpush1.msra.mxu0 %v982
        %1350 = vmatprep.subr.mxu0 0.0
        %1351 = vmatpush1.msra.mxu0 %v983
        %1352 = vmatprep.subr.mxu0 0.0
        %1353 = vmatpush1.msra.mxu0 %v984
        %1354 = vmatprep.mubr.f32.mxu0 %v783
        %1355 = vmatmul.mubr.f32.gmra.mrb[0].mxu0 %v749
        %v1356 = vpop.f32.mrb[0].mxu0
        %v1357 = vadd.f32 %v1132, %v1356
        %v1358 = vpop.f32.mrb[0].mxu0
        %1359 = vmatprep.mubr.f32.mxu0 %v784
        %1360 = vmatmul.mubr.f32.gmra.mrb[0].mxu0 %v750
        %v1361 = vpop.f32.mrb[0].mxu0
        %v1362 = vadd.f32 %v1137, %v1361
        %v1363 = vpop.f32.mrb[0].mxu0
        %1364 = vmatprep.mubr.f32.mxu0 %v785
        %1365 = vmatmul.mubr.f32.gmra.mrb[0].mxu0 %v751
        %v1366 = vpop.f32.mrb[0].mxu0
        %v1367 = vadd.f32 %v1142, %v1366
        %v1368 = vpop.f32.mrb[0].mxu0
        %1369 = vmatprep.mubr.f32.mxu0 %v786
        %1370 = vmatmul.mubr.f32.gmra.mrb[0].mxu0 %v752
        %v1371 = vpop.f32.mrb[0].mxu0
        %v1372 = vadd.f32 %v1147, %v1371
        %v1373 = vpop.f32.mrb[0].mxu0
        %1374 = vmatprep.mubr.f32.mxu0 %v787
        %1375 = vmatmul.mubr.f32.gmra.mrb[0].mxu0 %v753
        %v1376 = vpop.f32.mrb[0].mxu0
        %v1377 = vadd.f32 %v1152, %v1376
        %v1378 = vpop.f32.mrb[0].mxu0
        %1379 = vmatprep.mubr.f32.mxu0 %v788
        %1380 = vmatmul.mubr.f32.gmra.mrb[0].mxu0 %v754
        %v1381 = vpop.f32.mrb[0].mxu0
        %v1382 = vadd.f32 %v1157, %v1381
        %v1383 = vpop.f32.mrb[0].mxu0
        %1384 = vmatprep.mubr.f32.mxu0 %v789
        %1385 = vmatmul.mubr.f32.gmra.mrb[0].mxu0 %v755
        %v1386 = vpop.f32.mrb[0].mxu0
        %v1387 = vadd.f32 %v1162, %v1386
        %v1388 = vpop.f32.mrb[0].mxu0
        %1389 = vmatprep.mubr.f32.mxu0 %v790
        %1390 = vmatmul.mubr.f32.gmra.mrb[0].mxu0 %v756
        %v1391 = vpop.f32.mrb[0].mxu0
        %v1392 = vadd.f32 %v1167, %v1391
        %v1393 = vpop.f32.mrb[0].mxu0
        %1394 = vmatprep.mubr.f32.mxu0 %v791
        %1395 = vmatmul.mubr.f32.gmra.mrb[0].mxu0 %v757
        %v1396 = vpop.f32.mrb[0].mxu0
        %v1397 = vadd.f32 %v1172, %v1396
        %v1398 = vpop.f32.mrb[0].mxu0
        %1399 = vmatprep.mubr.f32.mxu0 %v792
        %1400 = vmatmul.mubr.f32.gmra.mrb[0].mxu0 %v758
        %v1401 = vpop.f32.mrb[0].mxu0
        %v1402 = vadd.f32 %v1177, %v1401
        %v1403 = vpop.f32.mrb[0].mxu0
        %1404 = vmatprep.mubr.f32.mxu0 %v793
        %1405 = vmatmul.mubr.f32.gmra.mrb[0].mxu0 %v759
        %v1406 = vpop.f32.mrb[0].mxu0
        %v1407 = vadd.f32 %v1182, %v1406
        %v1408 = vpop.f32.mrb[0].mxu0
        %1409 = vmatprep.mubr.f32.mxu0 %v794
        %1410 = vmatmul.mubr.f32.gmra.mrb[0].mxu0 %v760
        %v1411 = vpop.f32.mrb[0].mxu0
        %v1412 = vadd.f32 %v1187, %v1411
        %v1413 = vpop.f32.mrb[0].mxu0
        %1414 = vmatprep.mubr.f32.mxu0 %v795
        %1415 = vmatmul.mubr.f32.gmra.mrb[0].mxu0 %v761
        %v1416 = vpop.f32.mrb[0].mxu0
        %v1417 = vadd.f32 %v1192, %v1416
        %v1418 = vpop.f32.mrb[0].mxu0
        %1419 = vmatprep.mubr.f32.mxu0 %v796
        %1420 = vmatmul.mubr.f32.gmra.mrb[0].mxu0 %v762
        %v1421 = vpop.f32.mrb[0].mxu0
        %v1422 = vadd.f32 %v1197, %v1421
        %v1423 = vpop.f32.mrb[0].mxu0
        %1424 = vmatprep.mubr.f32.mxu0 %v797
        %1425 = vmatmul.mubr.f32.gmra.mrb[0].mxu0 %v763
        %v1426 = vpop.f32.mrb[0].mxu0
        %v1427 = vadd.f32 %v1202, %v1426
        %v1428 = vpop.f32.mrb[0].mxu0
        %1429 = vmatprep.mubr.f32.mxu0 %v798
        %1430 = vmatmul.mubr.f32.gmra.mrb[0].mxu0 %v764
        %v1431 = vpop.f32.mrb[0].mxu0
        %v1432 = vadd.f32 %v1207, %v1431
        %v1433 = vpop.f32.mrb[0].mxu0
        %1434 = vmatprep.mubr.f32.mxu0 %v799
        %1435 = vmatmul.mubr.f32.gmra.mrb[0].mxu0 %v765
        %v1436 = vpop.f32.mrb[0].mxu0
        %v1437 = vadd.f32 %v1212, %v1436
        %v1438 = vpop.f32.mrb[0].mxu0
        %1439 = vmatprep.mubr.f32.mxu0 %v800
        %1440 = vmatmul.mubr.f32.gmra.mrb[0].mxu0 %v766
        %v1441 = vpop.f32.mrb[0].mxu0
        %v1442 = vadd.f32 %v1217, %v1441
        %v1443 = vpop.f32.mrb[0].mxu0
        %1444 = vmatprep.mubr.f32.mxu0 %v801
        %1445 = vmatmul.mubr.f32.gmra.mrb[0].mxu0 %v767
        %v1446 = vpop.f32.mrb[0].mxu0
        %v1447 = vadd.f32 %v1222, %v1446
        %v1448 = vpop.f32.mrb[0].mxu0
        %1449 = vmatprep.mubr.f32.mxu0 %v802
        %1450 = vmatmul.mubr.f32.gmra.mrb[0].mxu0 %v768
        %v1451 = vpop.f32.mrb[0].mxu0
        %v1452 = vadd.f32 %v1227, %v1451
        %v1453 = vpop.f32.mrb[0].mxu0
        %1454 = vmatprep.mubr.f32.mxu0 %v803
        %1455 = vmatmul.mubr.f32.gmra.mrb[0].mxu0 %v769
        %v1456 = vpop.f32.mrb[0].mxu0
        %v1457 = vadd.f32 %v1232, %v1456
        %v1458 = vpop.f32.mrb[0].mxu0
        %1459 = vmatprep.mubr.f32.mxu0 %v804
        %1460 = vmatmul.mubr.f32.gmra.mrb[0].mxu0 %v770
        %v1461 = vpop.f32.mrb[0].mxu0
        %v1462 = vadd.f32 %v1237, %v1461
        %v1463 = vpop.f32.mrb[0].mxu0
        %1464 = vmatprep.mubr.f32.mxu0 %v805
        %1465 = vmatmul.mubr.f32.gmra.mrb[0].mxu0 %v771
        %v1466 = vpop.f32.mrb[0].mxu0
        %v1467 = vadd.f32 %v1242, %v1466
        %v1468 = vpop.f32.mrb[0].mxu0
        %1469 = vmatprep.mubr.f32.mxu0 %v806
        %1470 = vmatmul.mubr.f32.gmra.mrb[0].mxu0 %v772
        %v1471 = vpop.f32.mrb[0].mxu0
        %v1472 = vadd.f32 %v1247, %v1471
        %v1473 = vpop.f32.mrb[0].mxu0
        %1474 = vmatprep.mubr.f32.mxu0 %v807
        %1475 = vmatmul.mubr.f32.gmra.mrb[0].mxu0 %v773
        %v1476 = vpop.f32.mrb[0].mxu0
        %v1477 = vadd.f32 %v1252, %v1476
        %v1478 = vpop.f32.mrb[0].mxu0
        %1479 = vmatprep.mubr.f32.mxu0 %v808
        %1480 = vmatmul.mubr.f32.gmra.mrb[0].mxu0 %v774
        %v1481 = vpop.f32.mrb[0].mxu0
        %v1482 = vadd.f32 %v1257, %v1481
        %v1483 = vpop.f32.mrb[0].mxu0
        %1484 = vmatprep.mubr.f32.mxu0 %v809
        %1485 = vmatmul.mubr.f32.gmra.mrb[0].mxu0 %v775
        %v1486 = vpop.f32.mrb[0].mxu0
        %v1487 = vadd.f32 %v1262, %v1486
        %v1488 = vpop.f32.mrb[0].mxu0
        %1489 = vmatprep.mubr.f32.mxu0 %v810
        %1490 = vmatmul.mubr.f32.gmra.mrb[0].mxu0 %v776
        %v1491 = vpop.f32.mrb[0].mxu0
        %v1492 = vadd.f32 %v1267, %v1491
        %v1493 = vpop.f32.mrb[0].mxu0
        %1494 = vmatprep.mubr.f32.mxu0 %v811
        %1495 = vmatmul.mubr.f32.gmra.mrb[0].mxu0 %v777
        %v1496 = vpop.f32.mrb[0].mxu0
        %v1497 = vadd.f32 %v1272, %v1496
        %v1498 = vpop.f32.mrb[0].mxu0
        %1499 = vmatprep.mubr.f32.mxu0 %v812
        %1500 = vmatmul.mubr.f32.gmra.mrb[0].mxu0 %v778
        %v1501 = vpop.f32.mrb[0].mxu0
        %v1502 = vadd.f32 %v1277, %v1501
        %v1503 = vpop.f32.mrb[0].mxu0
        %1504 = vmatprep.mubr.f32.mxu0 %v813
        %1505 = vmatmul.mubr.f32.gmra.mrb[0].mxu0 %v779
        %v1506 = vpop.f32.mrb[0].mxu0
        %v1507 = vadd.f32 %v1282, %v1506
        %v1508 = vpop.f32.mrb[0].mxu0
        %1509 = vmatprep.mubr.f32.mxu0 %v814
        %1510 = vmatmul.mubr.f32.gmra.mrb[0].mxu0 %v780
        %v1511 = vpop.f32.mrb[0].mxu0
        %v1512 = vadd.f32 %v1287, %v1511
        %v1513 = vpop.f32.mrb[0].mxu0
        %1514 = vdwg.mxu0
        %1515 = vmatprep.subr.mxu0 0.0
        %1516 = vmatpush1.msra.mxu0 %v985
        %1517 = vmatprep.subr.mxu0 0.0
        %1518 = vmatpush1.msra.mxu0 %v986
        %1519 = vmatprep.subr.mxu0 0.0
        %1520 = vmatpush1.msra.mxu0 %v987
        %1521 = vmatprep.subr.mxu0 0.0
        %1522 = vmatpush1.msra.mxu0 %v988
        %1523 = vmatprep.subr.mxu0 0.0
        %1524 = vmatpush1.msra.mxu0 %v989
        %1525 = vmatprep.subr.mxu0 0.0
        %1526 = vmatpush1.msra.mxu0 %v990
        %1527 = vmatprep.subr.mxu0 0.0
        %1528 = vmatpush1.msra.mxu0 %v991
        %1529 = vmatprep.subr.mxu0 0.0
        %1530 = vmatpush1.msra.mxu0 %v992
        %1531 = vmatprep.subr.mxu0 0.0
        %1532 = vmatpush1.msra.mxu0 %v993
        %1533 = vmatprep.subr.mxu0 0.0
        %1534 = vmatpush1.msra.mxu0 %v994
        %1535 = vmatprep.subr.mxu0 0.0
        %1536 = vmatpush1.msra.mxu0 %v995
        %1537 = vmatprep.subr.mxu0 0.0
        %1538 = vmatpush1.msra.mxu0 %v996
        %1539 = vmatprep.subr.mxu0 0.0
        %1540 = vmatpush1.msra.mxu0 %v997
        %1541 = vmatprep.subr.mxu0 0.0
        %1542 = vmatpush1.msra.mxu0 %v998
        %1543 = vmatprep.subr.mxu0 0.0
        %1544 = vmatpush1.msra.mxu0 %v999
        %1545 = vmatprep.subr.mxu0 0.0
        %1546 = vmatpush1.msra.mxu0 %v1000
        %1547 = vmatprep.subr.mxu0 0.0
        %1548 = vmatpush1.msra.mxu0 %v1001
        %1549 = vmatprep.subr.mxu0 0.0
        %1550 = vmatpush1.msra.mxu0 %v1002
        %1551 = vmatprep.subr.mxu0 0.0
        %1552 = vmatpush1.msra.mxu0 %v1003
        %1553 = vmatprep.subr.mxu0 0.0
        %1554 = vmatpush1.msra.mxu0 %v1004
        %1555 = vmatprep.subr.mxu0 0.0
        %1556 = vmatpush1.msra.mxu0 %v1005
        %1557 = vmatprep.subr.mxu0 0.0
        %1558 = vmatpush1.msra.mxu0 %v1006
        %1559 = vmatprep.subr.mxu0 0.0
        %1560 = vmatpush1.msra.mxu0 %v1007
        %1561 = vmatprep.subr.mxu0 0.0
        %1562 = vmatpush1.msra.mxu0 %v1008
        %1563 = vmatprep.subr.mxu0 0.0
        %1564 = vmatpush1.msra.mxu0 %v1009
        %1565 = vmatprep.subr.mxu0 0.0
        %1566 = vmatpush1.msra.mxu0 %v1010
        %1567 = vmatprep.subr.mxu0 0.0
        %1568 = vmatpush1.msra.mxu0 %v1011
        %1569 = vmatprep.subr.mxu0 0.0
        %1570 = vmatpush1.msra.mxu0 %v1012
        %1571 = vmatprep.subr.mxu0 0.0
        %1572 = vmatpush1.msra.mxu0 %v1013
        %1573 = vmatprep.subr.mxu0 0.0
        %1574 = vmatpush1.msra.mxu0 %v1014
        %1575 = vmatprep.subr.mxu0 0.0
        %1576 = vmatpush1.msra.mxu0 %v1015
        %1577 = vmatprep.subr.mxu0 0.0
        %1578 = vmatpush1.msra.mxu0 %v1016
        %1579 = vmatprep.mubr.f32.mxu0 %v819
        %1580 = vmatmul.mubr.f32.gmra.mrb[0].mxu0 %v687
        %v1581 = vpop.f32.mrb[0].mxu0
        %v1582 = vadd.f32 %v1357, %v1581
        %v1583 = vpop.f32.mrb[0].mxu0
        %1584 = vmatprep.mubr.f32.mxu0 %v820
        %1585 = vmatmul.mubr.f32.gmra.mrb[0].mxu0 %v688
        %v1586 = vpop.f32.mrb[0].mxu0
        %v1587 = vadd.f32 %v1362, %v1586
        %v1588 = vpop.f32.mrb[0].mxu0
        %1589 = vmatprep.mubr.f32.mxu0 %v821
        %1590 = vmatmul.mubr.f32.gmra.mrb[0].mxu0 %v689
        %v1591 = vpop.f32.mrb[0].mxu0
        %v1592 = vadd.f32 %v1367, %v1591
        %v1593 = vpop.f32.mrb[0].mxu0
        %1594 = vmatprep.mubr.f32.mxu0 %v822
        %1595 = vmatmul.mubr.f32.gmra.mrb[0].mxu0 %v690
        %v1596 = vpop.f32.mrb[0].mxu0
        %v1597 = vadd.f32 %v1372, %v1596
        %v1598 = vpop.f32.mrb[0].mxu0
        %1599 = vmatprep.mubr.f32.mxu0 %v823
        %1600 = vmatmul.mubr.f32.gmra.mrb[0].mxu0 %v691
        %v1601 = vpop.f32.mrb[0].mxu0
        %v1602 = vadd.f32 %v1377, %v1601
        %v1603 = vpop.f32.mrb[0].mxu0
        %1604 = vmatprep.mubr.f32.mxu0 %v824
        %1605 = vmatmul.mubr.f32.gmra.mrb[0].mxu0 %v692
        %v1606 = vpop.f32.mrb[0].mxu0
        %v1607 = vadd.f32 %v1382, %v1606
        %v1608 = vpop.f32.mrb[0].mxu0
        %1609 = vmatprep.mubr.f32.mxu0 %v825
        %1610 = vmatmul.mubr.f32.gmra.mrb[0].mxu0 %v693
        %v1611 = vpop.f32.mrb[0].mxu0
        %v1612 = vadd.f32 %v1387, %v1611
        %v1613 = vpop.f32.mrb[0].mxu0
        %1614 = vmatprep.mubr.f32.mxu0 %v826
        %1615 = vmatmul.mubr.f32.gmra.mrb[0].mxu0 %v694
        %v1616 = vpop.f32.mrb[0].mxu0
        %v1617 = vadd.f32 %v1392, %v1616
        %v1618 = vpop.f32.mrb[0].mxu0
        %1619 = vmatprep.mubr.f32.mxu0 %v827
        %1620 = vmatmul.mubr.f32.gmra.mrb[0].mxu0 %v695
        %v1621 = vpop.f32.mrb[0].mxu0
        %v1622 = vadd.f32 %v1397, %v1621
        %v1623 = vpop.f32.mrb[0].mxu0
        %1624 = vmatprep.mubr.f32.mxu0 %v828
        %1625 = vmatmul.mubr.f32.gmra.mrb[0].mxu0 %v696
        %v1626 = vpop.f32.mrb[0].mxu0
        %v1627 = vadd.f32 %v1402, %v1626
        %v1628 = vpop.f32.mrb[0].mxu0
        %1629 = vmatprep.mubr.f32.mxu0 %v829
        %1630 = vmatmul.mubr.f32.gmra.mrb[0].mxu0 %v697
        %v1631 = vpop.f32.mrb[0].mxu0
        %v1632 = vadd.f32 %v1407, %v1631
        %v1633 = vpop.f32.mrb[0].mxu0
        %1634 = vmatprep.mubr.f32.mxu0 %v830
        %1635 = vmatmul.mubr.f32.gmra.mrb[0].mxu0 %v698
        %v1636 = vpop.f32.mrb[0].mxu0
        %v1637 = vadd.f32 %v1412, %v1636
        %v1638 = vpop.f32.mrb[0].mxu0
        %1639 = vmatprep.mubr.f32.mxu0 %v831
        %1640 = vmatmul.mubr.f32.gmra.mrb[0].mxu0 %v699
        %v1641 = vpop.f32.mrb[0].mxu0
        %v1642 = vadd.f32 %v1417, %v1641
        %v1643 = vpop.f32.mrb[0].mxu0
        %1644 = vmatprep.mubr.f32.mxu0 %v832
        %1645 = vmatmul.mubr.f32.gmra.mrb[0].mxu0 %v700
        %v1646 = vpop.f32.mrb[0].mxu0
        %v1647 = vadd.f32 %v1422, %v1646
        %v1648 = vpop.f32.mrb[0].mxu0
        %1649 = vmatprep.mubr.f32.mxu0 %v833
        %1650 = vmatmul.mubr.f32.gmra.mrb[0].mxu0 %v701
        %v1651 = vpop.f32.mrb[0].mxu0
        %v1652 = vadd.f32 %v1427, %v1651
        %v1653 = vpop.f32.mrb[0].mxu0
        %1654 = vmatprep.mubr.f32.mxu0 %v834
        %1655 = vmatmul.mubr.f32.gmra.mrb[0].mxu0 %v702
        %v1656 = vpop.f32.mrb[0].mxu0
        %v1657 = vadd.f32 %v1432, %v1656
        %v1658 = vpop.f32.mrb[0].mxu0
        %1659 = vmatprep.mubr.f32.mxu0 %v835
        %1660 = vmatmul.mubr.f32.gmra.mrb[0].mxu0 %v703
        %v1661 = vpop.f32.mrb[0].mxu0
        %v1662 = vadd.f32 %v1437, %v1661
        %v1663 = vpop.f32.mrb[0].mxu0
        %1664 = vmatprep.mubr.f32.mxu0 %v836
        %1665 = vmatmul.mubr.f32.gmra.mrb[0].mxu0 %v704
        %v1666 = vpop.f32.mrb[0].mxu0
        %v1667 = vadd.f32 %v1442, %v1666
        %v1668 = vpop.f32.mrb[0].mxu0
        %1669 = vmatprep.mubr.f32.mxu0 %v837
        %1670 = vmatmul.mubr.f32.gmra.mrb[0].mxu0 %v705
        %v1671 = vpop.f32.mrb[0].mxu0
        %v1672 = vadd.f32 %v1447, %v1671
        %v1673 = vpop.f32.mrb[0].mxu0
        %1674 = vmatprep.mubr.f32.mxu0 %v838
        %1675 = vmatmul.mubr.f32.gmra.mrb[0].mxu0 %v706
        %v1676 = vpop.f32.mrb[0].mxu0
        %v1677 = vadd.f32 %v1452, %v1676
        %v1678 = vpop.f32.mrb[0].mxu0
        %1679 = vmatprep.mubr.f32.mxu0 %v839
        %1680 = vmatmul.mubr.f32.gmra.mrb[0].mxu0 %v707
        %v1681 = vpop.f32.mrb[0].mxu0
        %v1682 = vadd.f32 %v1457, %v1681
        %v1683 = vpop.f32.mrb[0].mxu0
        %1684 = vmatprep.mubr.f32.mxu0 %v840
        %1685 = vmatmul.mubr.f32.gmra.mrb[0].mxu0 %v708
        %v1686 = vpop.f32.mrb[0].mxu0
        %v1687 = vadd.f32 %v1462, %v1686
        %v1688 = vpop.f32.mrb[0].mxu0
        %1689 = vmatprep.mubr.f32.mxu0 %v841
        %1690 = vmatmul.mubr.f32.gmra.mrb[0].mxu0 %v709
        %v1691 = vpop.f32.mrb[0].mxu0
        %v1692 = vadd.f32 %v1467, %v1691
        %v1693 = vpop.f32.mrb[0].mxu0
        %1694 = vmatprep.mubr.f32.mxu0 %v842
        %1695 = vmatmul.mubr.f32.gmra.mrb[0].mxu0 %v710
        %v1696 = vpop.f32.mrb[0].mxu0
        %v1697 = vadd.f32 %v1472, %v1696
        %v1698 = vpop.f32.mrb[0].mxu0
        %1699 = vmatprep.mubr.f32.mxu0 %v843
        %1700 = vmatmul.mubr.f32.gmra.mrb[0].mxu0 %v711
        %v1701 = vpop.f32.mrb[0].mxu0
        %v1702 = vadd.f32 %v1477, %v1701
        %v1703 = vpop.f32.mrb[0].mxu0
        %1704 = vmatprep.mubr.f32.mxu0 %v844
        %1705 = vmatmul.mubr.f32.gmra.mrb[0].mxu0 %v712
        %v1706 = vpop.f32.mrb[0].mxu0
        %v1707 = vadd.f32 %v1482, %v1706
        %v1708 = vpop.f32.mrb[0].mxu0
        %1709 = vmatprep.mubr.f32.mxu0 %v845
        %1710 = vmatmul.mubr.f32.gmra.mrb[0].mxu0 %v713
        %v1711 = vpop.f32.mrb[0].mxu0
        %v1712 = vadd.f32 %v1487, %v1711
        %v1713 = vpop.f32.mrb[0].mxu0
        %1714 = vmatprep.mubr.f32.mxu0 %v846
        %1715 = vmatmul.mubr.f32.gmra.mrb[0].mxu0 %v714
        %v1716 = vpop.f32.mrb[0].mxu0
        %v1717 = vadd.f32 %v1492, %v1716
        %v1718 = vpop.f32.mrb[0].mxu0
        %1719 = vmatprep.mubr.f32.mxu0 %v847
        %1720 = vmatmul.mubr.f32.gmra.mrb[0].mxu0 %v715
        %v1721 = vpop.f32.mrb[0].mxu0
        %v1722 = vadd.f32 %v1497, %v1721
        %v1723 = vpop.f32.mrb[0].mxu0
        %1724 = vmatprep.mubr.f32.mxu0 %v848
        %1725 = vmatmul.mubr.f32.gmra.mrb[0].mxu0 %v716
        %v1726 = vpop.f32.mrb[0].mxu0
        %v1727 = vadd.f32 %v1502, %v1726
        %v1728 = vpop.f32.mrb[0].mxu0
        %1729 = vmatprep.mubr.f32.mxu0 %v849
        %1730 = vmatmul.mubr.f32.gmra.mrb[0].mxu0 %v815
        %v1731 = vpop.f32.mrb[0].mxu0
        %v1732 = vadd.f32 %v1507, %v1731
        %v1733 = vpop.f32.mrb[0].mxu0
        %1734 = vmatprep.mubr.f32.mxu0 %v850
        %1735 = vmatmul.mubr.f32.gmra.mrb[0].mxu0 %v816
        %v1736 = vpop.f32.mrb[0].mxu0
        %v1737 = vadd.f32 %v1512, %v1736
        %v1738 = vpop.f32.mrb[0].mxu0
        %1739 = vdwg.mxu0
        %1740 = vmatprep.subr.mxu0 0.0
        %1741 = vmatpush1.msra.mxu0 %v1017
        %1742 = vmatprep.subr.mxu0 0.0
        %1743 = vmatpush1.msra.mxu0 %v1018
        %1744 = vmatprep.subr.mxu0 0.0
        %1745 = vmatpush1.msra.mxu0 %v1019
        %1746 = vmatprep.subr.mxu0 0.0
        %1747 = vmatpush1.msra.mxu0 %v1020
        %1748 = vmatprep.subr.mxu0 0.0
        %1749 = vmatpush1.msra.mxu0 %v1021
        %1750 = vmatprep.subr.mxu0 0.0
        %1751 = vmatpush1.msra.mxu0 %v1022
        %1752 = vmatprep.subr.mxu0 0.0
        %1753 = vmatpush1.msra.mxu0 %v1023
        %1754 = vmatprep.subr.mxu0 0.0
        %1755 = vmatpush1.msra.mxu0 %v1024
        %1756 = vmatprep.subr.mxu0 0.0
        %1757 = vmatpush1.msra.mxu0 %v1025
        %1758 = vmatprep.subr.mxu0 0.0
        %1759 = vmatpush1.msra.mxu0 %v1026
        %1760 = vmatprep.subr.mxu0 0.0
        %1761 = vmatpush1.msra.mxu0 %v1027
        %1762 = vmatprep.subr.mxu0 0.0
        %1763 = vmatpush1.msra.mxu0 %v1028
        %1764 = vmatprep.subr.mxu0 0.0
        %1765 = vmatpush1.msra.mxu0 %v1029
        %1766 = vmatprep.subr.mxu0 0.0
        %1767 = vmatpush1.msra.mxu0 %v1030
        %1768 = vmatprep.subr.mxu0 0.0
        %1769 = vmatpush1.msra.mxu0 %v1031
        %1770 = vmatprep.subr.mxu0 0.0
        %1771 = vmatpush1.msra.mxu0 %v1032
        %1772 = vmatprep.subr.mxu0 0.0
        %1773 = vmatpush1.msra.mxu0 %v1033
        %1774 = vmatprep.subr.mxu0 0.0
        %1775 = vmatpush1.msra.mxu0 %v1034
        %1776 = vmatprep.subr.mxu0 0.0
        %1777 = vmatpush1.msra.mxu0 %v1035
        %1778 = vmatprep.subr.mxu0 0.0
        %1779 = vmatpush1.msra.mxu0 %v1036
        %1780 = vmatprep.subr.mxu0 0.0
        %1781 = vmatpush1.msra.mxu0 %v1037
        %1782 = vmatprep.subr.mxu0 0.0
        %1783 = vmatpush1.msra.mxu0 %v1038
        %1784 = vmatprep.subr.mxu0 0.0
        %1785 = vmatpush1.msra.mxu0 %v1039
        %1786 = vmatprep.subr.mxu0 0.0
        %1787 = vmatpush1.msra.mxu0 %v1040
        %1788 = vmatprep.subr.mxu0 0.0
        %1789 = vmatpush1.msra.mxu0 %v1041
        %1790 = vmatprep.subr.mxu0 0.0
        %1791 = vmatpush1.msra.mxu0 %v1042
        %1792 = vmatprep.subr.mxu0 0.0
        %1793 = vmatpush1.msra.mxu0 %v1043
        %1794 = vmatprep.subr.mxu0 0.0
        %1795 = vmatpush1.msra.mxu0 %v1044
        %1796 = vmatprep.subr.mxu0 0.0
        %1797 = vmatpush1.msra.mxu0 %v1045
        %1798 = vmatprep.subr.mxu0 0.0
        %1799 = vmatpush1.msra.mxu0 %v1046
        %1800 = vmatprep.subr.mxu0 0.0
        %1801 = vmatpush1.msra.mxu0 %v1047
        %1802 = vmatprep.subr.mxu0 0.0
        %1803 = vmatpush1.msra.mxu0 %v1048
        %1804 = vmatprep.mubr.f32.mxu0 %v689
        %1805 = vmatmul.mubr.f32.gmra.mrb[0].mxu0 %v853
        %v1806 = vpop.f32.mrb[0].mxu0
        %v1807 = vadd.f32 %v1582, %v1806
        %v1808 = vpop.f32.mrb[0].mxu0
        %1809 = vmatprep.mubr.f32.mxu0 %v690
        %1810 = vmatmul.mubr.f32.gmra.mrb[0].mxu0 %v854
        %v1811 = vpop.f32.mrb[0].mxu0
        %v1812 = vadd.f32 %v1587, %v1811
        %v1813 = vpop.f32.mrb[0].mxu0
        %1814 = vmatprep.mubr.f32.mxu0 %v691
        %1815 = vmatmul.mubr.f32.gmra.mrb[0].mxu0 %v855
        %v1816 = vpop.f32.mrb[0].mxu0
        %v1817 = vadd.f32 %v1592, %v1816
        %v1818 = vpop.f32.mrb[0].mxu0
        %1819 = vmatprep.mubr.f32.mxu0 %v692
        %1820 = vmatmul.mubr.f32.gmra.mrb[0].mxu0 %v856
        %v1821 = vpop.f32.mrb[0].mxu0
        %v1822 = vadd.f32 %v1597, %v1821
        %v1823 = vpop.f32.mrb[0].mxu0
        %1824 = vmatprep.mubr.f32.mxu0 %v693
        %1825 = vmatmul.mubr.f32.gmra.mrb[0].mxu0 %v857
        %v1826 = vpop.f32.mrb[0].mxu0
        %v1827 = vadd.f32 %v1602, %v1826
        %v1828 = vpop.f32.mrb[0].mxu0
        %1829 = vmatprep.mubr.f32.mxu0 %v694
        %1830 = vmatmul.mubr.f32.gmra.mrb[0].mxu0 %v858
        %v1831 = vpop.f32.mrb[0].mxu0
        %v1832 = vadd.f32 %v1607, %v1831
        %v1833 = vpop.f32.mrb[0].mxu0
        %1834 = vmatprep.mubr.f32.mxu0 %v695
        %1835 = vmatmul.mubr.f32.gmra.mrb[0].mxu0 %v859
        %v1836 = vpop.f32.mrb[0].mxu0
        %v1837 = vadd.f32 %v1612, %v1836
        %v1838 = vpop.f32.mrb[0].mxu0
        %1839 = vmatprep.mubr.f32.mxu0 %v696
        %1840 = vmatmul.mubr.f32.gmra.mrb[0].mxu0 %v860
        %v1841 = vpop.f32.mrb[0].mxu0
        %v1842 = vadd.f32 %v1617, %v1841
        %v1843 = vpop.f32.mrb[0].mxu0
        %1844 = vmatprep.mubr.f32.mxu0 %v697
        %1845 = vmatmul.mubr.f32.gmra.mrb[0].mxu0 %v861
        %v1846 = vpop.f32.mrb[0].mxu0
        %v1847 = vadd.f32 %v1622, %v1846
        %v1848 = vpop.f32.mrb[0].mxu0
        %1849 = vmatprep.mubr.f32.mxu0 %v698
        %1850 = vmatmul.mubr.f32.gmra.mrb[0].mxu0 %v862
        %v1851 = vpop.f32.mrb[0].mxu0
        %v1852 = vadd.f32 %v1627, %v1851
        %v1853 = vpop.f32.mrb[0].mxu0
        %1854 = vmatprep.mubr.f32.mxu0 %v699
        %1855 = vmatmul.mubr.f32.gmra.mrb[0].mxu0 %v863
        %v1856 = vpop.f32.mrb[0].mxu0
        %v1857 = vadd.f32 %v1632, %v1856
        %v1858 = vpop.f32.mrb[0].mxu0
        %1859 = vmatprep.mubr.f32.mxu0 %v700
        %1860 = vmatmul.mubr.f32.gmra.mrb[0].mxu0 %v864
        %v1861 = vpop.f32.mrb[0].mxu0
        %v1862 = vadd.f32 %v1637, %v1861
        %v1863 = vpop.f32.mrb[0].mxu0
        %1864 = vmatprep.mubr.f32.mxu0 %v701
        %1865 = vmatmul.mubr.f32.gmra.mrb[0].mxu0 %v865
        %v1866 = vpop.f32.mrb[0].mxu0
        %v1867 = vadd.f32 %v1642, %v1866
        %v1868 = vpop.f32.mrb[0].mxu0
        %1869 = vmatprep.mubr.f32.mxu0 %v702
        %1870 = vmatmul.mubr.f32.gmra.mrb[0].mxu0 %v866
        %v1871 = vpop.f32.mrb[0].mxu0
        %v1872 = vadd.f32 %v1647, %v1871
        %v1873 = vpop.f32.mrb[0].mxu0
        %1874 = vmatprep.mubr.f32.mxu0 %v703
        %1875 = vmatmul.mubr.f32.gmra.mrb[0].mxu0 %v867
        %v1876 = vpop.f32.mrb[0].mxu0
        %v1877 = vadd.f32 %v1652, %v1876
        %v1878 = vpop.f32.mrb[0].mxu0
        %1879 = vmatprep.mubr.f32.mxu0 %v704
        %1880 = vmatmul.mubr.f32.gmra.mrb[0].mxu0 %v868
        %v1881 = vpop.f32.mrb[0].mxu0
        %v1882 = vadd.f32 %v1657, %v1881
        %v1883 = vpop.f32.mrb[0].mxu0
        %1884 = vmatprep.mubr.f32.mxu0 %v705
        %1885 = vmatmul.mubr.f32.gmra.mrb[0].mxu0 %v869
        %v1886 = vpop.f32.mrb[0].mxu0
        %v1887 = vadd.f32 %v1662, %v1886
        %v1888 = vpop.f32.mrb[0].mxu0
        %1889 = vmatprep.mubr.f32.mxu0 %v706
        %1890 = vmatmul.mubr.f32.gmra.mrb[0].mxu0 %v870
        %v1891 = vpop.f32.mrb[0].mxu0
        %v1892 = vadd.f32 %v1667, %v1891
        %v1893 = vpop.f32.mrb[0].mxu0
        %1894 = vmatprep.mubr.f32.mxu0 %v707
        %1895 = vmatmul.mubr.f32.gmra.mrb[0].mxu0 %v871
        %v1896 = vpop.f32.mrb[0].mxu0
        %v1897 = vadd.f32 %v1672, %v1896
        %v1898 = vpop.f32.mrb[0].mxu0
        %1899 = vmatprep.mubr.f32.mxu0 %v708
        %1900 = vmatmul.mubr.f32.gmra.mrb[0].mxu0 %v872
        %v1901 = vpop.f32.mrb[0].mxu0
        %v1902 = vadd.f32 %v1677, %v1901
        %v1903 = vpop.f32.mrb[0].mxu0
        %1904 = vmatprep.mubr.f32.mxu0 %v709
        %1905 = vmatmul.mubr.f32.gmra.mrb[0].mxu0 %v873
        %v1906 = vpop.f32.mrb[0].mxu0
        %v1907 = vadd.f32 %v1682, %v1906
        %v1908 = vpop.f32.mrb[0].mxu0
        %1909 = vmatprep.mubr.f32.mxu0 %v710
        %1910 = vmatmul.mubr.f32.gmra.mrb[0].mxu0 %v874
        %v1911 = vpop.f32.mrb[0].mxu0
        %v1912 = vadd.f32 %v1687, %v1911
        %v1913 = vpop.f32.mrb[0].mxu0
        %1914 = vmatprep.mubr.f32.mxu0 %v711
        %1915 = vmatmul.mubr.f32.gmra.mrb[0].mxu0 %v875
        %v1916 = vpop.f32.mrb[0].mxu0
        %v1917 = vadd.f32 %v1692, %v1916
        %v1918 = vpop.f32.mrb[0].mxu0
        %1919 = vmatprep.mubr.f32.mxu0 %v712
        %1920 = vmatmul.mubr.f32.gmra.mrb[0].mxu0 %v876
        %v1921 = vpop.f32.mrb[0].mxu0
        %v1922 = vadd.f32 %v1697, %v1921
        %v1923 = vpop.f32.mrb[0].mxu0
        %1924 = vmatprep.mubr.f32.mxu0 %v713
        %1925 = vmatmul.mubr.f32.gmra.mrb[0].mxu0 %v877
        %v1926 = vpop.f32.mrb[0].mxu0
        %v1927 = vadd.f32 %v1702, %v1926
        %v1928 = vpop.f32.mrb[0].mxu0
        %1929 = vmatprep.mubr.f32.mxu0 %v714
        %1930 = vmatmul.mubr.f32.gmra.mrb[0].mxu0 %v878
        %v1931 = vpop.f32.mrb[0].mxu0
        %v1932 = vadd.f32 %v1707, %v1931
        %v1933 = vpop.f32.mrb[0].mxu0
        %1934 = vmatprep.mubr.f32.mxu0 %v715
        %1935 = vmatmul.mubr.f32.gmra.mrb[0].mxu0 %v879
        %v1936 = vpop.f32.mrb[0].mxu0
        %v1937 = vadd.f32 %v1712, %v1936
        %v1938 = vpop.f32.mrb[0].mxu0
        %1939 = vmatprep.mubr.f32.mxu0 %v716
        %1940 = vmatmul.mubr.f32.gmra.mrb[0].mxu0 %v880
        %v1941 = vpop.f32.mrb[0].mxu0
        %v1942 = vadd.f32 %v1717, %v1941
        %v1943 = vpop.f32.mrb[0].mxu0
        %1944 = vmatprep.mubr.f32.mxu0 %v815
        %1945 = vmatmul.mubr.f32.gmra.mrb[0].mxu0 %v881
        %v1946 = vpop.f32.mrb[0].mxu0
        %v1947 = vadd.f32 %v1722, %v1946
        %v1948 = vpop.f32.mrb[0].mxu0
        %1949 = vmatprep.mubr.f32.mxu0 %v816
        %1950 = vmatmul.mubr.f32.gmra.mrb[0].mxu0 %v882
        %v1951 = vpop.f32.mrb[0].mxu0
        %v1952 = vadd.f32 %v1727, %v1951
        %v1953 = vpop.f32.mrb[0].mxu0
        %1954 = vmatprep.mubr.f32.mxu0 %v885
        %1955 = vmatmul.mubr.f32.gmra.mrb[0].mxu0 %v883
        %v1956 = vpop.f32.mrb[0].mxu0
        %v1957 = vadd.f32 %v1732, %v1956
        %v1958 = vpop.f32.mrb[0].mxu0
        %1959 = vmatprep.mubr.f32.mxu0 %v886
        %1960 = vmatmul.mubr.f32.gmra.mrb[0].mxu0 %v884
        %v1961 = vpop.f32.mrb[0].mxu0
        %v1962 = vadd.f32 %v1737, %v1961
        %v1963 = vpop.f32.mrb[0].mxu0
        %1964 = vdwg.mxu0
        %1965 = vmatprep.subr.mxu0 0.0
        %1966 = vmatpush1.msra.mxu0 %v1049
        %1967 = vmatprep.subr.mxu0 0.0
        %1968 = vmatpush1.msra.mxu0 %v1050
        %1969 = vmatprep.subr.mxu0 0.0
        %1970 = vmatpush1.msra.mxu0 %v1051
        %1971 = vmatprep.subr.mxu0 0.0
        %1972 = vmatpush1.msra.mxu0 %v1052
        %1973 = vmatprep.subr.mxu0 0.0
        %1974 = vmatpush1.msra.mxu0 %v1053
        %1975 = vmatprep.subr.mxu0 0.0
        %1976 = vmatpush1.msra.mxu0 %v1054
        %1977 = vmatprep.subr.mxu0 0.0
        %1978 = vmatpush1.msra.mxu0 %v1055
        %1979 = vmatprep.subr.mxu0 0.0
        %1980 = vmatpush1.msra.mxu0 %v1056
        %1981 = vmatprep.subr.mxu0 0.0
        %1982 = vmatpush1.msra.mxu0 %v1057
        %1983 = vmatprep.subr.mxu0 0.0
        %1984 = vmatpush1.msra.mxu0 %v1058
        %1985 = vmatprep.subr.mxu0 0.0
        %1986 = vmatpush1.msra.mxu0 %v1059
        %1987 = vmatprep.subr.mxu0 0.0
        %1988 = vmatpush1.msra.mxu0 %v1060
        %1989 = vmatprep.subr.mxu0 0.0
        %1990 = vmatpush1.msra.mxu0 %v1061
        %1991 = vmatprep.subr.mxu0 0.0
        %1992 = vmatpush1.msra.mxu0 %v1062
        %1993 = vmatprep.subr.mxu0 0.0
        %1994 = vmatpush1.msra.mxu0 %v1063
        %1995 = vmatprep.subr.mxu0 0.0
        %1996 = vmatpush1.msra.mxu0 %v1064
        %1997 = vmatprep.subr.mxu0 0.0
        %1998 = vmatpush1.msra.mxu0 0.0
        %1999 = vmatprep.subr.mxu0 0.0
        %2000 = vmatpush1.msra.mxu0 0.0
        %2001 = vmatprep.subr.mxu0 0.0
        %2002 = vmatpush1.msra.mxu0 0.0
        %2003 = vmatprep.subr.mxu0 0.0
        %2004 = vmatpush1.msra.mxu0 0.0
        %2005 = vmatprep.subr.mxu0 0.0
        %2006 = vmatpush1.msra.mxu0 0.0
        %2007 = vmatprep.subr.mxu0 0.0
        %2008 = vmatpush1.msra.mxu0 0.0
        %2009 = vmatprep.subr.mxu0 0.0
        %2010 = vmatpush1.msra.mxu0 0.0
        %2011 = vmatprep.subr.mxu0 0.0
        %2012 = vmatpush1.msra.mxu0 0.0
        %2013 = vmatprep.subr.mxu0 0.0
        %2014 = vmatpush1.msra.mxu0 0.0
        %2015 = vmatprep.subr.mxu0 0.0
        %2016 = vmatpush1.msra.mxu0 0.0
        %2017 = vmatprep.subr.mxu0 0.0
        %2018 = vmatpush1.msra.mxu0 0.0
        %2019 = vmatprep.subr.mxu0 0.0
        %2020 = vmatpush1.msra.mxu0 0.0
        %2021 = vmatprep.subr.mxu0 0.0
        %2022 = vmatpush1.msra.mxu0 0.0
        %2023 = vmatprep.subr.mxu0 0.0
        %2024 = vmatpush1.msra.mxu0 0.0
        %2025 = vmatprep.subr.mxu0 0.0
        %2026 = vmatpush1.msra.mxu0 0.0
        %2027 = vmatprep.subr.mxu0 0.0
        %2028 = vmatpush1.msra.mxu0 0.0
        %2029 = vmatprep.mubr.f32.mxu0 0.0
        %2030 = vmatmul.mubr.f32.gmra.mrb[0].mxu0 %v889
        %v2031 = vpop.f32.mrb[0].mxu0
        %v2032 = vadd.f32 %v1807, %v2031
        %v2033 = vpop.f32.mrb[0].mxu0
        %2034 = vmatprep.mubr.f32.mxu0 0.0
        %2035 = vmatmul.mubr.f32.gmra.mrb[0].mxu0 %v890
        %v2036 = vpop.f32.mrb[0].mxu0
        %v2037 = vadd.f32 %v1812, %v2036
        %v2038 = vpop.f32.mrb[0].mxu0
        %2039 = vmatprep.mubr.f32.mxu0 0.0
        %2040 = vmatmul.mubr.f32.gmra.mrb[0].mxu0 %v891
        %v2041 = vpop.f32.mrb[0].mxu0
        %v2042 = vadd.f32 %v1817, %v2041
        %v2043 = vpop.f32.mrb[0].mxu0
        %2044 = vmatprep.mubr.f32.mxu0 0.0
        %2045 = vmatmul.mubr.f32.gmra.mrb[0].mxu0 %v892
        %v2046 = vpop.f32.mrb[0].mxu0
        %v2047 = vadd.f32 %v1822, %v2046
        %v2048 = vpop.f32.mrb[0].mxu0
        %2049 = vmatprep.mubr.f32.mxu0 0.0
        %2050 = vmatmul.mubr.f32.gmra.mrb[0].mxu0 %v893
        %v2051 = vpop.f32.mrb[0].mxu0
        %v2052 = vadd.f32 %v1827, %v2051
        %v2053 = vpop.f32.mrb[0].mxu0
        %2054 = vmatprep.mubr.f32.mxu0 0.0
        %2055 = vmatmul.mubr.f32.gmra.mrb[0].mxu0 %v894
        %v2056 = vpop.f32.mrb[0].mxu0
        %v2057 = vadd.f32 %v1832, %v2056
        %v2058 = vpop.f32.mrb[0].mxu0
        %2059 = vmatprep.mubr.f32.mxu0 0.0
        %2060 = vmatmul.mubr.f32.gmra.mrb[0].mxu0 %v895
        %v2061 = vpop.f32.mrb[0].mxu0
        %v2062 = vadd.f32 %v1837, %v2061
        %v2063 = vpop.f32.mrb[0].mxu0
        %2064 = vmatprep.mubr.f32.mxu0 0.0
        %2065 = vmatmul.mubr.f32.gmra.mrb[0].mxu0 %v896
        %v2066 = vpop.f32.mrb[0].mxu0
        %v2067 = vadd.f32 %v1842, %v2066
        %v2068 = vpop.f32.mrb[0].mxu0
        %2069 = vmatprep.mubr.f32.mxu0 0.0
        %2070 = vmatmul.mubr.f32.gmra.mrb[0].mxu0 %v897
        %v2071 = vpop.f32.mrb[0].mxu0
        %v2072 = vadd.f32 %v1847, %v2071
        %v2073 = vpop.f32.mrb[0].mxu0
        %2074 = vmatprep.mubr.f32.mxu0 0.0
        %2075 = vmatmul.mubr.f32.gmra.mrb[0].mxu0 %v898
        %v2076 = vpop.f32.mrb[0].mxu0
        %v2077 = vadd.f32 %v1852, %v2076
        %v2078 = vpop.f32.mrb[0].mxu0
        %2079 = vmatprep.mubr.f32.mxu0 0.0
        %2080 = vmatmul.mubr.f32.gmra.mrb[0].mxu0 %v899
        %v2081 = vpop.f32.mrb[0].mxu0
        %v2082 = vadd.f32 %v1857, %v2081
        %v2083 = vpop.f32.mrb[0].mxu0
        %2084 = vmatprep.mubr.f32.mxu0 0.0
        %2085 = vmatmul.mubr.f32.gmra.mrb[0].mxu0 %v900
        %v2086 = vpop.f32.mrb[0].mxu0
        %v2087 = vadd.f32 %v1862, %v2086
        %v2088 = vpop.f32.mrb[0].mxu0
        %2089 = vmatprep.mubr.f32.mxu0 0.0
        %2090 = vmatmul.mubr.f32.gmra.mrb[0].mxu0 %v901
        %v2091 = vpop.f32.mrb[0].mxu0
        %v2092 = vadd.f32 %v1867, %v2091
        %v2093 = vpop.f32.mrb[0].mxu0
        %2094 = vmatprep.mubr.f32.mxu0 0.0
        %2095 = vmatmul.mubr.f32.gmra.mrb[0].mxu0 %v902
        %v2096 = vpop.f32.mrb[0].mxu0
        %v2097 = vadd.f32 %v1872, %v2096
        %v2098 = vpop.f32.mrb[0].mxu0
        %2099 = vmatprep.mubr.f32.mxu0 0.0
        %2100 = vmatmul.mubr.f32.gmra.mrb[0].mxu0 %v903
        %v2101 = vpop.f32.mrb[0].mxu0
        %v2102 = vadd.f32 %v1877, %v2101
        %v2103 = vpop.f32.mrb[0].mxu0
        %2104 = vmatprep.mubr.f32.mxu0 0.0
        %2105 = vmatmul.mubr.f32.gmra.mrb[0].mxu0 %v904
        %v2106 = vpop.f32.mrb[0].mxu0
        %v2107 = vadd.f32 %v1882, %v2106
        %v2108 = vpop.f32.mrb[0].mxu0
        %2109 = vmatprep.mubr.f32.mxu0 0.0
        %2110 = vmatmul.mubr.f32.gmra.mrb[0].mxu0 %v905
        %v2111 = vpop.f32.mrb[0].mxu0
        %v2112 = vadd.f32 %v1887, %v2111
        %v2113 = vpop.f32.mrb[0].mxu0
        %2114 = vmatprep.mubr.f32.mxu0 0.0
        %2115 = vmatmul.mubr.f32.gmra.mrb[0].mxu0 %v906
        %v2116 = vpop.f32.mrb[0].mxu0
        %v2117 = vadd.f32 %v1892, %v2116
        %v2118 = vpop.f32.mrb[0].mxu0
        %2119 = vmatprep.mubr.f32.mxu0 0.0
        %2120 = vmatmul.mubr.f32.gmra.mrb[0].mxu0 %v907
        %v2121 = vpop.f32.mrb[0].mxu0
        %v2122 = vadd.f32 %v1897, %v2121
        %v2123 = vpop.f32.mrb[0].mxu0
        %2124 = vmatprep.mubr.f32.mxu0 0.0
        %2125 = vmatmul.mubr.f32.gmra.mrb[0].mxu0 %v908
        %v2126 = vpop.f32.mrb[0].mxu0
        %v2127 = vadd.f32 %v1902, %v2126
        %v2128 = vpop.f32.mrb[0].mxu0
        %2129 = vmatprep.mubr.f32.mxu0 0.0
        %2130 = vmatmul.mubr.f32.gmra.mrb[0].mxu0 %v909
        %v2131 = vpop.f32.mrb[0].mxu0
        %v2132 = vadd.f32 %v1907, %v2131
        %v2133 = vpop.f32.mrb[0].mxu0
        %2134 = vmatprep.mubr.f32.mxu0 0.0
        %2135 = vmatmul.mubr.f32.gmra.mrb[0].mxu0 %v910
        %v2136 = vpop.f32.mrb[0].mxu0
        %v2137 = vadd.f32 %v1912, %v2136
        %v2138 = vpop.f32.mrb[0].mxu0
        %2139 = vmatprep.mubr.f32.mxu0 0.0
        %2140 = vmatmul.mubr.f32.gmra.mrb[0].mxu0 %v911
        %v2141 = vpop.f32.mrb[0].mxu0
        %v2142 = vadd.f32 %v1917, %v2141
        %v2143 = vpop.f32.mrb[0].mxu0
        %2144 = vmatprep.mubr.f32.mxu0 0.0
        %2145 = vmatmul.mubr.f32.gmra.mrb[0].mxu0 %v912
        %v2146 = vpop.f32.mrb[0].mxu0
        %v2147 = vadd.f32 %v1922, %v2146
        %v2148 = vpop.f32.mrb[0].mxu0
        %2149 = vmatprep.mubr.f32.mxu0 0.0
        %2150 = vmatmul.mubr.f32.gmra.mrb[0].mxu0 %v913
        %v2151 = vpop.f32.mrb[0].mxu0
        %v2152 = vadd.f32 %v1927, %v2151
        %v2153 = vpop.f32.mrb[0].mxu0
        %2154 = vmatprep.mubr.f32.mxu0 0.0
        %2155 = vmatmul.mubr.f32.gmra.mrb[0].mxu0 %v914
        %v2156 = vpop.f32.mrb[0].mxu0
        %v2157 = vadd.f32 %v1932, %v2156
        %v2158 = vpop.f32.mrb[0].mxu0
        %2159 = vmatprep.mubr.f32.mxu0 0.0
        %2160 = vmatmul.mubr.f32.gmra.mrb[0].mxu0 %v915
        %v2161 = vpop.f32.mrb[0].mxu0
        %v2162 = vadd.f32 %v1937, %v2161
        %v2163 = vpop.f32.mrb[0].mxu0
        %2164 = vmatprep.mubr.f32.mxu0 0.0
        %2165 = vmatmul.mubr.f32.gmra.mrb[0].mxu0 %v916
        %v2166 = vpop.f32.mrb[0].mxu0
        %v2167 = vadd.f32 %v1942, %v2166
        %v2168 = vpop.f32.mrb[0].mxu0
        %2169 = vmatprep.mubr.f32.mxu0 0.0
        %2170 = vmatmul.mubr.f32.gmra.mrb[0].mxu0 %v917
        %v2171 = vpop.f32.mrb[0].mxu0
        %v2172 = vadd.f32 %v1947, %v2171
        %v2173 = vpop.f32.mrb[0].mxu0
        %2174 = vmatprep.mubr.f32.mxu0 0.0
        %2175 = vmatmul.mubr.f32.gmra.mrb[0].mxu0 %v918
        %v2176 = vpop.f32.mrb[0].mxu0
        %v2177 = vadd.f32 %v1952, %v2176
        %v2178 = vpop.f32.mrb[0].mxu0
        %2179 = vmatprep.mubr.f32.mxu0 0.0
        %2180 = vmatmul.mubr.f32.gmra.mrb[0].mxu0 %v919
        %v2181 = vpop.f32.mrb[0].mxu0
        %v2182 = vadd.f32 %v1957, %v2181
        %v2183 = vpop.f32.mrb[0].mxu0
        %2184 = vmatprep.mubr.f32.mxu0 0.0
        %2185 = vmatmul.mubr.f32.gmra.mrb[0].mxu0 %v920
        %v2186 = vpop.f32.mrb[0].mxu0
        %v2187 = vadd.f32 %v1962, %v2186
        %v2188 = vpop.f32.mrb[0].mxu0
        %2189 = vdwg.mxu0
        %2190 = vst [vmem:[%s369] sm:$0xff] %v2032
        %2191 = vst [vmem:[%s369 + $0x8] sm:$0xff] %v2037
        %2192 = vst [vmem:[%s369 + $0x10] sm:$0xff] %v2042
        %2193 = vst [vmem:[%s369 + $0x18] sm:$0xff] %v2047
        %2194 = vst [vmem:[%s369 + $0x20] sm:$0xff] %v2052
        %2195 = vst [vmem:[%s369 + $0x28] sm:$0xff] %v2057
        %2196 = vst [vmem:[%s369 + $0x30] sm:$0xff] %v2062
        %2197 = vst [vmem:[%s369 + $0x38] sm:$0xff] %v2067
        %2198 = vst [vmem:[%s369 + $0x40] sm:$0xff] %v2072
        %2199 = vst [vmem:[%s369 + $0x48] sm:$0xff] %v2077
        %2200 = vst [vmem:[%s369 + $0x50] sm:$0xff] %v2082
        %2201 = vst [vmem:[%s369 + $0x58] sm:$0xff] %v2087
        %2202 = vst [vmem:[%s369 + $0x60] sm:$0xff] %v2092
        %2203 = vst [vmem:[%s369 + $0x68] sm:$0xff] %v2097
        %2204 = vst [vmem:[%s369 + $0x70] sm:$0xff] %v2102
        %2205 = vst [vmem:[%s369 + $0x78] sm:$0xff] %v2107
        %2206 = vst [vmem:[%s369 + $0x80] sm:$0xff] %v2112
        %2207 = vst [vmem:[%s369 + $0x88] sm:$0xff] %v2117
        %2208 = vst [vmem:[%s369 + $0x90] sm:$0xff] %v2122
        %2209 = vst [vmem:[%s369 + $0x98] sm:$0xff] %v2127
        %2210 = vst [vmem:[%s369 + $0xa0] sm:$0xff] %v2132
        %2211 = vst [vmem:[%s369 + $0xa8] sm:$0xff] %v2137
        %2212 = vst [vmem:[%s369 + $0xb0] sm:$0xff] %v2142
        %2213 = vst [vmem:[%s369 + $0xb8] sm:$0xff] %v2147
        %2214 = vst [vmem:[%s369 + $0xc0] sm:$0xff] %v2152
        %2215 = vst [vmem:[%s369 + $0xc8] sm:$0xff] %v2157
        %2216 = vst [vmem:[%s369 + $0xd0] sm:$0xff] %v2162
        %2217 = vst [vmem:[%s369 + $0xd8] sm:$0xff] %v2167
        %2218 = vst [vmem:[%s369 + $0xe0] sm:$0xff] %v2172
        %2219 = vst [vmem:[%s369 + $0xe8] sm:$0xff] %v2177
        %2220 = vst [vmem:[%s369 + $0xf0] sm:$0xff] %v2182
        %2221 = vst [vmem:[%s369 + $0xf8] sm:$0xff] %v2187
        %v2222 = vadd.f32 %v2032, %v2037
        %v2223 = vadd.f32 %v2222, %v2042
        %v2224 = vadd.f32 %v2223, %v2047
        %v2225 = vadd.f32 %v2224, %v2052
        %v2226 = vadd.f32 %v2225, %v2057
        %v2227 = vadd.f32 %v2226, %v2062
        %v2228 = vadd.f32 %v2227, %v2067
        %v2229 = vadd.f32 %v2228, %v2072
        %v2230 = vadd.f32 %v2229, %v2077
        %v2231 = vadd.f32 %v2230, %v2082
        %v2232 = vadd.f32 %v2231, %v2087
        %v2233 = vadd.f32 %v2232, %v2092
        %v2234 = vadd.f32 %v2233, %v2097
        %v2235 = vadd.f32 %v2234, %v2102
        %v2236 = vadd.f32 %v2235, %v2107
        %v2237 = vadd.f32 %v2236, %v2112
        %v2238 = vadd.f32 %v2237, %v2117
        %v2239 = vadd.f32 %v2238, %v2122
        %v2240 = vadd.f32 %v2239, %v2127
        %v2241 = vadd.f32 %v2240, %v2132
        %v2242 = vadd.f32 %v2241, %v2137
        %v2243 = vadd.f32 %v2242, %v2142
        %v2244 = vadd.f32 %v2243, %v2147
        %v2245 = vadd.f32 %v2244, %v2152
        %v2246 = vadd.f32 %v2245, %v2157
        %v2247 = vadd.f32 %v2246, %v2162
        %v2248 = vadd.f32 %v2247, %v2167
        %v2249 = vadd.f32 %v2248, %v2172
        %v2250 = vadd.f32 %v2249, %v2177
        %v2251 = vadd.f32 %v2250, %v2182
        %v2252 = vadd.f32 %v2251, %v2187
        %v2253 = vrot.slane %v2252, 4
        %v2254 = vadd.f32 %v2252, %v2253
        %v2255 = vrot.slane %v2254, 2
        %v2256 = vadd.f32 %v2254, %v2255
        %v2257 = vrot.slane %v2256, 1
        %v2258 = vadd.f32 %v2256, %v2257
        %v2259 = vmul.f32 %v2032, %v2032
        %v2260 = vmul.f32 %v2037, %v2037
        %v2261 = vmul.f32 %v2042, %v2042
        %v2262 = vmul.f32 %v2047, %v2047
        %v2263 = vmul.f32 %v2052, %v2052
        %v2264 = vmul.f32 %v2057, %v2057
        %v2265 = vmul.f32 %v2062, %v2062
        %v2266 = vmul.f32 %v2067, %v2067
        %v2267 = vmul.f32 %v2072, %v2072
        %v2268 = vmul.f32 %v2077, %v2077
        %v2269 = vmul.f32 %v2082, %v2082
        %v2270 = vmul.f32 %v2087, %v2087
        %v2271 = vmul.f32 %v2092, %v2092
        %v2272 = vmul.f32 %v2097, %v2097
        %v2273 = vmul.f32 %v2102, %v2102
        %v2274 = vmul.f32 %v2107, %v2107
        %v2275 = vmul.f32 %v2112, %v2112
        %v2276 = vmul.f32 %v2117, %v2117
        %v2277 = vmul.f32 %v2122, %v2122
        %v2278 = vmul.f32 %v2127, %v2127
        %v2279 = vmul.f32 %v2132, %v2132
        %v2280 = vmul.f32 %v2137, %v2137
        %v2281 = vmul.f32 %v2142, %v2142
        %v2282 = vmul.f32 %v2147, %v2147
        %v2283 = vmul.f32 %v2152, %v2152
        %v2284 = vmul.f32 %v2157, %v2157
        %v2285 = vmul.f32 %v2162, %v2162
        %v2286 = vmul.f32 %v2167, %v2167
        %v2287 = vmul.f32 %v2172, %v2172
        %v2288 = vmul.f32 %v2177, %v2177
        %v2289 = vmul.f32 %v2182, %v2182
        %v2290 = vmul.f32 %v2187, %v2187
        %v2291 = vadd.f32 %v2259, %v2260
        %v2292 = vadd.f32 %v2291, %v2261
        %v2293 = vadd.f32 %v2292, %v2262
        %v2294 = vadd.f32 %v2293, %v2263
        %v2295 = vadd.f32 %v2294, %v2264
        %v2296 = vadd.f32 %v2295, %v2265
        %v2297 = vadd.f32 %v2296, %v2266
        %v2298 = vadd.f32 %v2297, %v2267
        %v2299 = vadd.f32 %v2298, %v2268
        %v2300 = vadd.f32 %v2299, %v2269
        %v2301 = vadd.f32 %v2300, %v2270
        %v2302 = vadd.f32 %v2301, %v2271
        %v2303 = vadd.f32 %v2302, %v2272
        %v2304 = vadd.f32 %v2303, %v2273
        %v2305 = vadd.f32 %v2304, %v2274
        %v2306 = vadd.f32 %v2305, %v2275
        %v2307 = vadd.f32 %v2306, %v2276
        %v2308 = vadd.f32 %v2307, %v2277
        %v2309 = vadd.f32 %v2308, %v2278
        %v2310 = vadd.f32 %v2309, %v2279
        %v2311 = vadd.f32 %v2310, %v2280
        %v2312 = vadd.f32 %v2311, %v2281
        %v2313 = vadd.f32 %v2312, %v2282
        %v2314 = vadd.f32 %v2313, %v2283
        %v2315 = vadd.f32 %v2314, %v2284
        %v2316 = vadd.f32 %v2315, %v2285
        %v2317 = vadd.f32 %v2316, %v2286
        %v2318 = vadd.f32 %v2317, %v2287
        %v2319 = vadd.f32 %v2318, %v2288
        %v2320 = vadd.f32 %v2319, %v2289
        %v2321 = vadd.f32 %v2320, %v2290
        %v2322 = vrot.slane %v2321, 4
        %v2323 = vadd.f32 %v2321, %v2322
        %v2324 = vrot.slane %v2323, 2
        %v2325 = vadd.f32 %v2323, %v2324
        %v2326 = vrot.slane %v2325, 1
        %v2327 = vadd.f32 %v2325, %v2326
        %vm2328 = vcmask 1040384
        %v2329 = vsel %vm2328, %v2258, %v2327
        %2330 = vst [vmem:[%s376] sm:$0x3] %v2329
        %s2331 = sand.u32 %s170, 1
        %s2332 = scalar_lea.sflag [#allocation5], %s2331
        %s2333 = sand.u32 %s170, 1
        %s2334 = smul.addr %s2333, 256
        %s2335 = scalar_lea.vmem [#allocation14], %s2334
        %s2336 = sand.u32 %s196, 1
        %s2337 = scalar_lea.sflag [#allocation16], %s2336
        %s2338 = sand.u32 %s196, 1
        %s2339 = smul.addr %s2338, 2
        %s2340 = scalar_lea.vmem [#allocation15], %s2339
        // Predicated region
        $region69: #{bottleneck_forward.5} parent=43 // pred_check
          %p2341 = pneg %p180
        $region70: #{bottleneck_forward.5} parent=43 // pred_check_branch
          %2343 = sbr.rel (%p2341) target = $region72
        $region71: #{bottleneck_forward.5} parent=43 // pred_region
          %s2345 = ssub.s32 4096, 4096
          %2346 = vsyncadd %s2332, %s2345
          %s2347 = smul.addr %s31, 32
          %s2348 = smul.addr %s2347, 128
          %s2349 = scalar_lea.hbm %s6, %s2348
          %s2350 = sshll.u32 %s2335, 4
          %s2351 = int_to_ptr.vmem [resolvable:$true] %s2350
          %2356 = dma.vmem_to_hbm [thread:$0]  %s2351, 4096, %s2349, %s2332, 128, 128, 8
        $region72: #{bottleneck_forward.5} parent=43 // pred_fallthru
          _
        // Predicated region
        $region73: #{bottleneck_forward.5} parent=43 // pred_check
          %p2357 = pneg %p206
        $region74: #{bottleneck_forward.5} parent=43 // pred_check_branch
          %2359 = sbr.rel (%p2357) target = $region76
        $region75: #{bottleneck_forward.5} parent=43 // pred_region
          %s2361 = ssub.s32 32, 32
          %2362 = vsyncadd %s2337, %s2361
          %s2363 = smul.addr %s31, 32
          %s2364 = scalar_lea.hbm %s7, %s2363
          %s2366 = sshll.u32 %s2340, 4
          %s2367 = int_to_ptr.vmem [resolvable:$true] %s2366
          %2369 = dma.vmem_to_hbm [thread:$0]  %s2367, 32, %s2364, %s2337
        $region76: #{bottleneck_forward.5} parent=43 // pred_fallthru
          _
      $region44: #{bottleneck_forward.5} parent=5 // pred_fallthru
        _
      %p2370 = scmp.le.s32.totalorder 2, %s26
      // Predicated region
      $region77: #{bottleneck_forward.5} parent=5 // pred_check
        %p2371 = pneg %p2370
      $region78: #{bottleneck_forward.5} parent=5 // pred_check_branch
        %2373 = sbr.rel (%p2371) target = $region80
      $region79: #{bottleneck_forward.5} parent=5 // pred_region
        %s2374 = ssub.s32 %s26, 2
        // Predicated region
        $region81: #{bottleneck_forward.5} parent=79 // pred_check
          %p2375 = pneg %p186
        $region82: #{bottleneck_forward.5} parent=79 // pred_check_branch
          %2377 = sbr.rel (%p2375) target = $region84
        $region83: #{bottleneck_forward.5} parent=79 // pred_region
          %s2378 = sand.u32 %s171, 1
          %s2379 = scalar_lea.sflag [#allocation5], %s2378
          %s2380 = sand.u32 %s171, 1
          %s2381 = smul.addr %s2380, 256
          %s2382 = scalar_lea.vmem [#allocation14], %s2381
          %2383 = dma.done %s2379, 4096
        $region84: #{bottleneck_forward.5} parent=79 // pred_fallthru
          _
        // Predicated region
        $region85: #{bottleneck_forward.5} parent=79 // pred_check
          %p2384 = pneg %p212
        $region86: #{bottleneck_forward.5} parent=79 // pred_check_branch
          %2386 = sbr.rel (%p2384) target = $region88
        $region87: #{bottleneck_forward.5} parent=79 // pred_region
          %s2387 = sand.u32 %s197, 1
          %s2388 = scalar_lea.sflag [#allocation16], %s2387
          %s2389 = sand.u32 %s197, 1
          %s2390 = smul.addr %s2389, 2
          %s2391 = scalar_lea.vmem [#allocation15], %s2390
          %2392 = dma.done %s2388, 32
        $region88: #{bottleneck_forward.5} parent=79 // pred_fallthru
          _
      $region80: #{bottleneck_forward.5} parent=5 // pred_fallthru
        _
    $region6: #{bottleneck_forward.5} parent=1 // loop_footer
      %s30 = sadd.s32 1, %s26
    $region7: #{bottleneck_forward.5} parent=1 // loop_footer_branch
      %25 = sbr.rel target = $region3
    $region8: #{bottleneck_forward.5} parent=1 // loop_exit
      _
    %2393 = vsyncpa [#allocation4], 1
    %s2394 = scalar_lea.sflag [#allocation4], 1
    %2395 = vsyncpa %s2394, 1
    %2396 = vsyncpa [#allocation7], 1
    %2397 = vsyncpa [#allocation10], 1
    %2398 = vsyncpa [#allocation13], 1
    %2399 = vsyncpa [#allocation5], 1
    %s2400 = scalar_lea.sflag [#allocation5], 1
    %2401 = vsyncpa %s2400, 1
    %2402 = vsyncpa [#allocation16], 1
    %s2403 = scalar_lea.sflag [#allocation16], 1
    %2404 = vsyncpa %s2403, 1

</llo_original>
